<compile_context>
chip_gen: v6e
topology: v6e:2x2x1
jax: 0.10.0
libtpu: 0.0.40
codegen_flags: <defaults>
</compile_context>

<pallas_src>
import math

import numpy as np
import jax
import jax.numpy as jnp
from jax.experimental import pallas as pl
from jax.experimental.pallas import tpu as pltpu

# ----------------------------- configuration --------------------------------------
B         = 2
SEQ_LEN   = 16
DEC_IN    = 4                       # n_vars == c_out
C_OUT     = 4
PRED_LEN  = 8                       # out_len
D_MODEL   = 32
D_LAYERS  = 2
PATCH_LEN = 4
STRIDE    = 2
PATCH_NUM = (SEQ_LEN - PATCH_LEN) // STRIDE + 1 + 1     # +1 from 'end' padding -> 8
HEAD_NF   = D_MODEL * PATCH_NUM
HALF      = D_MODEL // 2            # ratio_gin = ratio_gout = 0.5 channel split
CG2       = HALF // 2               # hidden width of the spectral transform
N_LAYERS  = 2 * D_LAYERS            # two FFC_BN_ACT_1d layers per BasicBlock_1d
L_PN      = PATCH_NUM
F_RFFT    = L_PN // 2 + 1
F_VALID   = SEQ_LEN // 2 - 1        # FourierLayer keeps rfft bins 1..T/2-1 (7)
TOP_K     = 3
DECOMP_KS = (4, 8, 12)
REVIN_EPS = 1e-5

N_SAMP    = B * DEC_IN              # samples folded onto lanes
NL        = L_PN * N_SAMP           # FFC lane width (col = p * N_SAMP + n)


def _dot(a, b):
    return jnp.dot(a, b, preferred_element_type=jnp.float32)


# =========================== the fused Pallas kernel ===============================
def _micn_kernel(x_ref, rv_ref, mt_ref, lw_ref, lb_ref, sdft_ref, ecs_ref, pb_ref,
                 w16_ref, w8_ref, dftk_ref, idftk_ref, hwt_ref, bias_ref, o_ref):
    # ---- RevIN 'norm' (subtract-last, biased std, affine) -------------------------
    x = x_ref[...]                                    # (T, N)  time-major
    aw = rv_ref[0:1, :]                               # (1, N)
    ab = rv_ref[1:2, :]
    last = x[SEQ_LEN - 1:SEQ_LEN, :]
    mean = jnp.mean(x, axis=0, keepdims=True)
    var = jnp.mean((x - mean) ** 2, axis=0, keepdims=True)
    std = jnp.sqrt(var + REVIN_EPS)
    xn = (x - last) / std * aw + ab

    # ---- series_decomp_multi trend + regression(seq_len -> out_len, w = 1/out_len)
    logits = [xn * lw_ref[j] + lb_ref[j] for j in range(3)]
    mx = jnp.maximum(jnp.maximum(logits[0], logits[1]), logits[2])
    exps = [jnp.exp(l - mx) for l in logits]
    den = exps[0] + exps[1] + exps[2]
    num = (_dot(mt_ref[0], xn) * exps[0]
           + _dot(mt_ref[1], xn) * exps[1]
           + _dot(mt_ref[2], xn) * exps[2])
    trend = num / den
    trsum = jnp.sum(trend, axis=0, keepdims=True) * (1.0 / PRED_LEN)   # (1, N)

    # ---- FourierLayer seasonality: rfft (matmul) + top-3 per channel + reconstruct
    re = _dot(sdft_ref[0], xn)                        # (F_VALID, N)
    im = _dot(sdft_ref[1], xn)
    a2 = re * re + im * im
    fidx = jax.lax.broadcasted_iota(jnp.int32, (F_VALID, N_SAMP), 0)
    mask = jnp.zeros((F_VALID, N_SAMP), jnp.float32)
    work = a2
    for _ in range(TOP_K):                            # 3 max + first-occurrence passes
        m = jnp.max(work, axis=0, keepdims=True)
        cand = jnp.where(work >= m, fidx, F_VALID)
        sel = jnp.min(cand, axis=0, keepdims=True)
        pick = fidx == sel
        mask = jnp.where(pick, 1.0, mask)
        work = jnp.where(pick, -1.0, work)
    mre = re * mask
    mim = im * mask

    # ---- patching + W_P + W_pos, reconstructed straight into the FFC lane layout --
    # ub[p*D_MODEL+m, n] = sum_j W_P[j,m] * seas_pad[n, p*STRIDE+j]   (W_P folded in)
    ub = _dot(ecs_ref[0], mre) + _dot(ecs_ref[1], mim)                # (L*D_MODEL, N)
    u = jnp.concatenate([ub[pp * D_MODEL:(pp + 1) * D_MODEL, :] for pp in range(L_PN)],
                        axis=1) + pb_ref[...]                          # (D_MODEL, NL)
    xl = u[:HALF, :]                                                   # (16, 64)
    xg = u[HALF:, :]

    dkc = dftk_ref[0]                                 # (NL, F_RFFT*N)
    dks = dftk_ref[1]
    ikc = idftk_ref[0]                                # (F_RFFT*N, NL)
    iks = idftk_ref[1]

    def shift_prev(v):   # value at position p-1 within each sample, zero at p == 0
        z = jnp.zeros((v.shape[0], N_SAMP), jnp.float32)
        return jnp.concatenate([z, v[:, :NL - N_SAMP]], axis=1)

    def shift_next(v):   # value at position p+1 within each sample, zero at p == L-1
        z = jnp.zeros((v.shape[0], N_SAMP), jnp.float32)
        return jnp.concatenate([v[:, N_SAMP:], z], axis=1)

    # ---- FFC residual stack : D_LAYERS BasicBlock_1d, each = 2 x FFC_BN_ACT_1d ----
    for blk in range(D_LAYERS):
        id_l, id_g = xl, xg
        for j in range(2):                            # conv1 (ReLU) then conv2 (id)
            li = 2 * blk + j
            w16 = w16_ref[li]                         # (16, 154)
            w8 = w8_ref[li]                           # (8, 51)
            wl = w16[:, 0:6 * HALF]                   # stacked [l2l_k | g2l_k] taps
            wl2g = w16[:, 6 * HALF:9 * HALF]          # stacked l2g taps
            stw2 = w16[:, 9 * HALF:9 * HALF + CG2]
            bl = w16[:, 9 * HALF + CG2:9 * HALF + CG2 + 1]
            bg = w16[:, 9 * HALF + CG2 + 1:9 * HALF + CG2 + 2]
            stw1 = w8[:, 0:2 * CG2]
            wtop = w8[:, 2 * CG2:4 * CG2]
            wbot = w8[:, 4 * CG2:6 * CG2]
            stb1 = w8[:, 6 * CG2:6 * CG2 + 1]
            btop = w8[:, 6 * CG2 + 1:6 * CG2 + 2]
            bbot = w8[:, 6 * CG2 + 2:6 * CG2 + 3]

            # kernel-3 zero-padded Conv1d: stacked taps -> one matmul per branch
            xl3 = jnp.concatenate([shift_prev(xl), xl, shift_next(xl)], axis=0)  # (48, 64)
            xg3 = jnp.concatenate([shift_prev(xg), xg, shift_next(xg)], axis=0)  # (48, 64)
            xall = jnp.concatenate([xl3, xg3], axis=0)                           # (96, 64)
            out_l = _dot(wl, xall) + bl                                          # (16, 64)
            acc_g = _dot(wl2g, xl3)                                              # (16, 64)

            # SpectralTransform_1d on the global branch (per-sample ortho rfft/irfft
            # expressed as block-diagonal matmuls on the (p*N+n) lane layout)
            s = jnp.maximum(_dot(stw1, xg) + stb1, 0.0)                          # (8, 64)
            fre = _dot(s, dkc)                                                   # (8, 40)
            fim = _dot(s, dks)
            fi = jnp.concatenate([fre, fim], axis=0)                             # (16, 40)
            fre2 = jnp.maximum(_dot(wtop, fi) + btop, 0.0)
            fim2 = jnp.maximum(_dot(wbot, fi) + bbot, 0.0)
            fu = _dot(fre2, ikc) + _dot(fim2, iks)                               # (8, 64)
            g2g = _dot(stw2, s + fu)                                             # (16, 64)
            out_g = acc_g + g2g + bg

            if j == 0:
                out_l = jnp.maximum(out_l, 0.0)
                out_g = jnp.maximum(out_g, 0.0)
            xl, xg = out_l, out_g
        xl = jnp.maximum(xl + id_l, 0.0)              # residual + ReLU
        xg = jnp.maximum(xg + id_g, 0.0)

    out_all = jnp.concatenate([xl, xg], axis=0)       # (D_MODEL, NL)

    # ---- Flatten_Head: one (PRED, L*D_MODEL) @ (L*D_MODEL, N) matmul ---------------
    outstack = jnp.concatenate(
        [out_all[:, pp * N_SAMP:(pp + 1) * N_SAMP] for pp in range(L_PN)], axis=0)  # (256, N)
    zht = _dot(hwt_ref[...], outstack) + bias_ref[...]      # (PRED_LEN, N), bias = head_b+reg_b

    # ---- + trend, RevIN 'denorm' ---------------------------------------------------
    z = zht + trsum
    z = (z - ab) / (aw + REVIN_EPS * REVIN_EPS)
    z = z * std + last
    o_ref[...] = z                                     # (PRED_LEN, N)


def _full(shape):
    nd = len(shape)
    return pl.BlockSpec(shape, lambda i, _nd=nd: (0,) * _nd)


def micn_pallas(x_td, p):
    smem = pl.BlockSpec(memory_space=pltpu.MemorySpace.SMEM)
    return pl.pallas_call(
        _micn_kernel,
        grid=(1,),
        in_specs=[
            _full(x_td.shape),
            _full(p['rv'].shape),
            _full(p['decomp_mt'].shape),
            smem, smem,
            _full(p['sdft'].shape),
            _full(p['ecs'].shape),
            _full(p['pb'].shape),
            _full(p['w16'].shape),
            _full(p['w8'].shape),
            _full(p['dftk'].shape),
            _full(p['idftk'].shape),
            _full(p['hwt'].shape),
            _full(p['bias_col'].shape),
        ],
        out_specs=_full((PRED_LEN, N_SAMP)),
        out_shape=jax.ShapeDtypeStruct((PRED_LEN, N_SAMP), jnp.float32),
        compiler_params=pltpu.CompilerParams(dimension_semantics=("arbitrary",)),
    )(x_td, p['rv'], p['decomp_mt'], p['dec_w'], p['dec_b'], p['sdft'], p['ecs'],
      p['pb'], p['w16'], p['w8'], p['dftk'], p['idftk'], p['hwt'], p['bias_col'])


def micn_forward(params, x, x_mark_enc=None, x_dec=None, x_mark_dec=None):
    bn, t, d = x.shape
    # lane-major (time, batch*channel) layout for the kernel; tiny XLA reshapes only.
    x_td = jnp.transpose(x, (1, 0, 2)).reshape(t, bn * d)
    z = micn_pallas(x_td, params)                              # (PRED_LEN, B*D)
    return jnp.transpose(z.reshape(PRED_LEN, bn, d), (1, 0, 2))


# =========================== parameter construction ================================
def _uniform(key, shape, lo, hi):
    return jax.random.uniform(key, shape, jnp.float32, lo, hi)


def _bn_fold(key, c):
    k1, k2, k3, k4 = jax.random.split(key, 4)
    gamma = _uniform(k1, (c,), 0.8, 1.2)
    beta = _uniform(k2, (c,), -0.1, 0.1)
    rmean = _uniform(k3, (c,), -0.1, 0.1)
    rvar = _uniform(k4, (c,), 0.8, 1.2)
    scale = gamma / jnp.sqrt(rvar + 1e-5)
    shift = beta - rmean * scale
    return scale, shift


def make_params(key):
    keys = list(jax.random.split(key, 32))
    ki = iter(range(32))
    nk = lambda: keys[next(ki)]
    p = {}

    # RevIN affine (PyTorch defaults), tiled over the batch onto lanes
    revin_w = jnp.ones((DEC_IN,), jnp.float32)
    revin_b = jnp.zeros((DEC_IN,), jnp.float32)
    p['rv'] = jnp.stack([jnp.tile(revin_w, B), jnp.tile(revin_b, B)], axis=0)   # (2, N)

    # series_decomp_multi: Linear(1, 3) softmax weighting + moving-average matrices
    p['dec_w'] = _uniform(nk(), (3,), -1.0, 1.0)
    p['dec_b'] = _uniform(nk(), (3,), -1.0, 1.0)
    mts = []
    for kk in DECOMP_KS:
        front = kk - 1 - (kk - 1) // 2
        m = np.zeros((SEQ_LEN, SEQ_LEN), np.float32)
        for t_out in range(SEQ_LEN):
            for w in range(kk):
                src = min(max(t_out + w - front, 0), SEQ_LEN - 1)
                m[t_out, src] += 1.0 / kk
        mts.append(m)
    p['decomp_mt'] = jnp.asarray(np.stack(mts), jnp.float32)                    # (3, T, T)

    # regression: weight fixed to 1/out_len (handled as a time reduction in-kernel)
    bnd = 1.0 / math.sqrt(SEQ_LEN)
    reg_b = _uniform(nk(), (PRED_LEN,), -bnd, bnd)

    # W_P : Linear(patch_len, d_model), W_pos : positional_encoding('zeros')
    bnd = 1.0 / math.sqrt(PATCH_LEN)
    wp = _uniform(nk(), (PATCH_LEN, D_MODEL), -bnd, bnd)
    wp_b = _uniform(nk(), (D_MODEL,), -bnd, bnd)
    w_pos = _uniform(nk(), (PATCH_NUM, D_MODEL), -0.02, 0.02)

    # Flatten_Head linear : Linear(head_nf, pred_len)
    bnd = 1.0 / math.sqrt(HEAD_NF)
    head_w = _uniform(nk(), (HEAD_NF, PRED_LEN), -bnd, bnd)     # rows = m*L_PN + p
    head_b = _uniform(nk(), (PRED_LEN,), -bnd, bnd)
    hw3 = head_w.reshape(D_MODEL, L_PN, PRED_LEN)
    p['hwt'] = jnp.transpose(hw3, (2, 1, 0)).reshape(PRED_LEN, L_PN * D_MODEL)  # (8, 256)
    p['bias_col'] = (head_b + reg_b).reshape(PRED_LEN, 1)

    # FourierLayer: unnormalized rfft rows for bins 1..T/2-1
    tt = np.arange(SEQ_LEN)
    ffv = np.arange(1, F_VALID + 1)
    ang = 2.0 * np.pi * np.outer(ffv, tt) / SEQ_LEN
    p['sdft'] = jnp.asarray(np.stack([np.cos(ang), -np.sin(ang)]), jnp.float32)  # (2, 7, T)

    # seasonality reconstruction straight into patch layout, with W_P folded in
    tau = np.minimum(STRIDE * np.arange(L_PN)[:, None] + np.arange(PATCH_LEN)[None, :],
                     SEQ_LEN - 1)                                # replication pad at the end
    angp = 2.0 * np.pi * tau[:, :, None] * ffv[None, None, :] / SEQ_LEN
    cosm = (2.0 / SEQ_LEN) * np.cos(angp)                        # (L_PN, PATCH_LEN, F_VALID)
    sinm = -(2.0 / SEQ_LEN) * np.sin(angp)
    wp_np = np.asarray(wp)
    ec = np.einsum('jm,pjf->pmf', wp_np, cosm).reshape(L_PN * D_MODEL, F_VALID)
    es = np.einsum('jm,pjf->pmf', wp_np, sinm).reshape(L_PN * D_MODEL, F_VALID)
    p['ecs'] = jnp.asarray(np.stack([ec, es]), jnp.float32)      # (2, L*D_MODEL, F_VALID)
    pb = np.asarray(wp_b)[:, None, None] + np.asarray(w_pos).T[:, :, None]
    p['pb'] = jnp.asarray(np.broadcast_to(pb, (D_MODEL, L_PN, N_SAMP))
                          .reshape(D_MODEL, NL), jnp.float32)    # (D_MODEL, NL)

    # FFC stack parameters (BatchNorms folded to eval-mode scale/shift), packed
    w16_rows, w8_rows = [], []
    for _ in range(N_LAYERS):
        ks = jax.random.split(nk(), 10)
        b3 = 1.0 / math.sqrt(HALF * 3)
        w_l2l = _uniform(ks[0], (HALF, HALF, 3), -b3, b3)
        w_g2l = _uniform(ks[1], (HALF, HALF, 3), -b3, b3)
        w_l2g = _uniform(ks[2], (HALF, HALF, 3), -b3, b3)
        b1 = 1.0 / math.sqrt(HALF)
        w_st1 = _uniform(ks[3], (CG2, HALF), -b1, b1)
        w_fu = _uniform(ks[4], (HALF, HALF), -b1, b1)
        b2 = 1.0 / math.sqrt(CG2)
        w_st2 = _uniform(ks[5], (HALF, CG2), -b2, b2)
        s_st1, sh_st1 = _bn_fold(ks[6], CG2)
        s_fu, sh_fu = _bn_fold(ks[7], HALF)
        s_l, sh_l = _bn_fold(ks[8], HALF)
        s_g, sh_g = _bn_fold(ks[9], HALF)
        l2l = w_l2l * s_l[:, None, None]
        g2l = w_g2l * s_l[:, None, None]
        l2g = w_l2g * s_g[:, None, None]
        wl_stk = jnp.concatenate([l2l[:, :, 0], l2l[:, :, 1], l2l[:, :, 2],
                                  g2l[:, :, 0], g2l[:, :, 1], g2l[:, :, 2]], axis=1)
        wl2g_stk = jnp.concatenate([l2g[:, :, 0], l2g[:, :, 1], l2g[:, :, 2]], axis=1)
        stw2 = w_st2 * s_g[:, None]
        w16_rows.append(jnp.concatenate(
            [wl_stk, wl2g_stk, stw2, sh_l[:, None], sh_g[:, None]], axis=1))     # (16, 154)
        stw1 = w_st1 * s_st1[:, None]
        w_fu_s = w_fu * s_fu[:, None]
        w8_rows.append(jnp.concatenate(
            [stw1, w_fu_s[:CG2, :], w_fu_s[CG2:, :],
             sh_st1[:, None], sh_fu[:CG2, None], sh_fu[CG2:, None]], axis=1))    # (8, 51)
    p['w16'] = jnp.stack(w16_rows)
    p['w8'] = jnp.stack(w8_rows)

    # ortho rFFT / irFFT matrices (length = patch_num), kron-expanded to the
    # (p*N + n) lane layout so the spectral transform is a block-diagonal matmul
    tt2 = np.arange(L_PN)
    ff2 = np.arange(F_RFFT)
    ang2 = 2.0 * np.pi * np.outer(tt2, ff2) / L_PN
    dft_cos = np.cos(ang2) / np.sqrt(L_PN)
    dft_sin = -np.sin(ang2) / np.sqrt(L_PN)
    cf = np.where((ff2 == 0) | (ff2 == L_PN // 2), 1.0, 2.0)
    idft_cos = (cf[:, None] * np.cos(ang2.T)) / np.sqrt(L_PN)
    idft_sin = (-cf[:, None] * np.sin(ang2.T)) / np.sqrt(L_PN)
    eye_n = np.eye(N_SAMP, dtype=np.float64)
    p['dftk'] = jnp.asarray(np.stack([np.kron(dft_cos, eye_n),
                                      np.kron(dft_sin, eye_n)]), jnp.float32)    # (2, NL, 40)
    p['idftk'] = jnp.asarray(np.stack([np.kron(idft_cos, eye_n),
                                       np.kron(idft_sin, eye_n)]), jnp.float32)  # (2, 40, NL)
    return p


# =========================== main ===================================================
if __name__ == "__main__":
    root = jax.random.PRNGKey(0)
    pkey, xkey = jax.random.split(root)
    params = make_params(pkey)
    k1, k2, k3, k4 = jax.random.split(xkey, 4)
    x = jax.random.normal(k1, (B, SEQ_LEN, DEC_IN), jnp.float32)
    x_mark_enc = jax.random.normal(k2, (B, SEQ_LEN, 4), jnp.float32)    # unused
    x_dec = jax.random.normal(k3, (B, PRED_LEN, DEC_IN), jnp.float32)   # unused
    x_mark_dec = jax.random.normal(k4, (B, PRED_LEN, 4), jnp.float32)   # unused

    fwd = jax.jit(micn_forward)
    out = fwd(params, x, x_mark_enc, x_dec, x_mark_dec)
    out = jax.block_until_ready(out)
    assert out.shape == (B, PRED_LEN, C_OUT), out.shape
    assert bool(jnp.all(jnp.isfinite(out)))
    print("KERNEL_OK")
</pallas_src>

<mosaic_0001>
module attributes {stable_mosaic.version = 11 : i64} {
  func.func @_micn_kernel(%arg0: i32, %arg1: memref<16x8xf32, #tpu.memory_space<vmem>>, %arg2: memref<2x8xf32, #tpu.memory_space<vmem>>, %arg3: memref<3x16x16xf32, #tpu.memory_space<vmem>>, %arg4: memref<3xf32, #tpu.memory_space<smem>>, %arg5: memref<3xf32, #tpu.memory_space<smem>>, %arg6: memref<2x7x16xf32, #tpu.memory_space<vmem>>, %arg7: memref<2x256x7xf32, #tpu.memory_space<vmem>>, %arg8: memref<32x64xf32, #tpu.memory_space<vmem>>, %arg9: memref<4x16x154xf32, #tpu.memory_space<vmem>>, %arg10: memref<4x8x51xf32, #tpu.memory_space<vmem>>, %arg11: memref<2x64x40xf32, #tpu.memory_space<vmem>>, %arg12: memref<2x40x64xf32, #tpu.memory_space<vmem>>, %arg13: memref<8x256xf32, #tpu.memory_space<vmem>>, %arg14: memref<8x1xf32, #tpu.memory_space<vmem>>, %arg15: memref<8x8xf32, #tpu.memory_space<vmem>>) attributes {dimension_semantics = [#tpu.dimension_semantics<arbitrary>], iteration_bounds = array<i64: 1>, scalar_prefetch = 0 : i64, scratch_operands = 0 : i64, tpu.core_type = #tpu.core_type<tc>, window_params = [{pipeline_mode = #tpu.pipeline_mode<synchronous>, transform_indices = @transform_0, window_bounds = array<i64: 16, 8>}, {pipeline_mode = #tpu.pipeline_mode<synchronous>, transform_indices = @transform_1, window_bounds = array<i64: 2, 8>}, {pipeline_mode = #tpu.pipeline_mode<synchronous>, transform_indices = @transform_2, window_bounds = array<i64: 3, 16, 16>}, {transform_indices = @transform_3, window_bounds = array<i64: 3>}, {transform_indices = @transform_4, window_bounds = array<i64: 3>}, {pipeline_mode = #tpu.pipeline_mode<synchronous>, transform_indices = @transform_5, window_bounds = array<i64: 2, 7, 16>}, {pipeline_mode = #tpu.pipeline_mode<synchronous>, transform_indices = @transform_6, window_bounds = array<i64: 2, 256, 7>}, {pipeline_mode = #tpu.pipeline_mode<synchronous>, transform_indices = @transform_7, window_bounds = array<i64: 32, 64>}, {pipeline_mode = #tpu.pipeline_mode<synchronous>, transform_indices = @transform_8, window_bounds = array<i64: 4, 16, 154>}, {pipeline_mode = #tpu.pipeline_mode<synchronous>, transform_indices = @transform_9, window_bounds = array<i64: 4, 8, 51>}, {pipeline_mode = #tpu.pipeline_mode<synchronous>, transform_indices = @transform_10, window_bounds = array<i64: 2, 64, 40>}, {pipeline_mode = #tpu.pipeline_mode<synchronous>, transform_indices = @transform_11, window_bounds = array<i64: 2, 40, 64>}, {pipeline_mode = #tpu.pipeline_mode<synchronous>, transform_indices = @transform_12, window_bounds = array<i64: 8, 256>}, {pipeline_mode = #tpu.pipeline_mode<synchronous>, transform_indices = @transform_13, window_bounds = array<i64: 8, 1>}, {pipeline_mode = #tpu.pipeline_mode<synchronous>, transform_indices = @transform_14, window_bounds = array<i64: 8, 8>}]} {
    %c0 = arith.constant 0 : index
    %c0_0 = arith.constant 0 : index
    %0 = vector.load %arg1[%c0, %c0_0] : memref<16x8xf32, #tpu.memory_space<vmem>>, vector<16x8xf32>
    %c0_1 = arith.constant 0 : index
    %c0_2 = arith.constant 0 : index
    %1 = vector.load %arg2[%c0_1, %c0_2] : memref<2x8xf32, #tpu.memory_space<vmem>>, vector<1x8xf32>
    %c1 = arith.constant 1 : index
    %c0_3 = arith.constant 0 : index
    %2 = vector.load %arg2[%c1, %c0_3] : memref<2x8xf32, #tpu.memory_space<vmem>>, vector<1x8xf32>
    %3 = vector.extract_strided_slice %0 {offsets = [15, 0], sizes = [1, 8], strides = [1, 1]} : vector<16x8xf32> to vector<1x8xf32>
    %cst = arith.constant dense<0.000000e+00> : vector<8xf32>
    %4 = vector.multi_reduction <add>, %0, %cst [0] : vector<16x8xf32> to vector<8xf32>
    %5 = vector.shape_cast %4 : vector<8xf32> to vector<1x8xf32>
    %cst_4 = arith.constant 1.600000e+01 : f32
    %6 = vector.broadcast %cst_4 : f32 to vector<1x8xf32>
    %7 = arith.divf %5, %6 : vector<1x8xf32>
    %8 = vector.broadcast %7 : vector<1x8xf32> to vector<16x8xf32>
    %9 = arith.subf %0, %8 : vector<16x8xf32>
    %10 = arith.mulf %9, %9 : vector<16x8xf32>
    %cst_5 = arith.constant dense<0.000000e+00> : vector<8xf32>
    %11 = vector.multi_reduction <add>, %10, %cst_5 [0] : vector<16x8xf32> to vector<8xf32>
    %12 = vector.shape_cast %11 : vector<8xf32> to vector<1x8xf32>
    %cst_6 = arith.constant 1.600000e+01 : f32
    %13 = vector.broadcast %cst_6 : f32 to vector<1x8xf32>
    %14 = arith.divf %12, %13 : vector<1x8xf32>
    %cst_7 = arith.constant 9.99999974E-6 : f32
    %15 = vector.broadcast %cst_7 : f32 to vector<1x8xf32>
    %16 = arith.addf %14, %15 : vector<1x8xf32>
    %17 = math.sqrt %16 : vector<1x8xf32>
    %18 = vector.broadcast %3 : vector<1x8xf32> to vector<16x8xf32>
    %19 = arith.subf %0, %18 : vector<16x8xf32>
    %20 = vector.broadcast %17 : vector<1x8xf32> to vector<16x8xf32>
    %21 = arith.divf %19, %20 : vector<16x8xf32>
    %22 = vector.broadcast %1 : vector<1x8xf32> to vector<16x8xf32>
    %23 = arith.mulf %21, %22 : vector<16x8xf32>
    %24 = vector.broadcast %2 : vector<1x8xf32> to vector<16x8xf32>
    %25 = arith.addf %23, %24 : vector<16x8xf32>
    %c0_8 = arith.constant 0 : index
    %26 = memref.load %arg4[%c0_8] : memref<3xf32, #tpu.memory_space<smem>>
    %27 = vector.broadcast %26 : f32 to vector<16x8xf32>
    %28 = arith.mulf %25, %27 : vector<16x8xf32>
    %c0_9 = arith.constant 0 : index
    %29 = memref.load %arg5[%c0_9] : memref<3xf32, #tpu.memory_space<smem>>
    %30 = vector.broadcast %29 : f32 to vector<16x8xf32>
    %31 = arith.addf %28, %30 : vector<16x8xf32>
    %c1_10 = arith.constant 1 : index
    %32 = memref.load %arg4[%c1_10] : memref<3xf32, #tpu.memory_space<smem>>
    %33 = vector.broadcast %32 : f32 to vector<16x8xf32>
    %34 = arith.mulf %25, %33 : vector<16x8xf32>
    %c1_11 = arith.constant 1 : index
    %35 = memref.load %arg5[%c1_11] : memref<3xf32, #tpu.memory_space<smem>>
    %36 = vector.broadcast %35 : f32 to vector<16x8xf32>
    %37 = arith.addf %34, %36 : vector<16x8xf32>
    %c2 = arith.constant 2 : index
    %38 = memref.load %arg4[%c2] : memref<3xf32, #tpu.memory_space<smem>>
    %39 = vector.broadcast %38 : f32 to vector<16x8xf32>
    %40 = arith.mulf %25, %39 : vector<16x8xf32>
    %c2_12 = arith.constant 2 : index
    %41 = memref.load %arg5[%c2_12] : memref<3xf32, #tpu.memory_space<smem>>
    %42 = vector.broadcast %41 : f32 to vector<16x8xf32>
    %43 = arith.addf %40, %42 : vector<16x8xf32>
    %44 = arith.maximumf %31, %37 : vector<16x8xf32>
    %45 = arith.maximumf %44, %43 : vector<16x8xf32>
    %46 = arith.subf %31, %45 : vector<16x8xf32>
    %47 = math.exp %46 : vector<16x8xf32>
    %48 = arith.subf %37, %45 : vector<16x8xf32>
    %49 = math.exp %48 : vector<16x8xf32>
    %50 = arith.subf %43, %45 : vector<16x8xf32>
    %51 = math.exp %50 : vector<16x8xf32>
    %52 = arith.addf %47, %49 : vector<16x8xf32>
    %53 = arith.addf %52, %51 : vector<16x8xf32>
    %c0_13 = arith.constant 0 : index
    %c0_14 = arith.constant 0 : index
    %c0_15 = arith.constant 0 : index
    %54 = vector.load %arg3[%c0_13, %c0_14, %c0_15] : memref<3x16x16xf32, #tpu.memory_space<vmem>>, vector<1x16x16xf32>
    %55 = vector.shape_cast %54 : vector<1x16x16xf32> to vector<16x16xf32>
    %cst_16 = arith.constant dense<0.000000e+00> : vector<16x8xf32>
    %56 = tpu.matmul %55, %25, %cst_16 {dimension_numbers = #tpu.dot_dimension_numbers<[1], [0], [0], [1], [0, 0, 1, 1], [], []>} : vector<16x16xf32>, vector<16x8xf32>, vector<16x8xf32> -> vector<16x8xf32>
    %57 = arith.mulf %56, %47 : vector<16x8xf32>
    %c1_17 = arith.constant 1 : index
    %c0_18 = arith.constant 0 : index
    %c0_19 = arith.constant 0 : index
    %58 = vector.load %arg3[%c1_17, %c0_18, %c0_19] : memref<3x16x16xf32, #tpu.memory_space<vmem>>, vector<1x16x16xf32>
    %59 = vector.shape_cast %58 : vector<1x16x16xf32> to vector<16x16xf32>
    %cst_20 = arith.constant dense<0.000000e+00> : vector<16x8xf32>
    %60 = tpu.matmul %59, %25, %cst_20 {dimension_numbers = #tpu.dot_dimension_numbers<[1], [0], [0], [1], [0, 0, 1, 1], [], []>} : vector<16x16xf32>, vector<16x8xf32>, vector<16x8xf32> -> vector<16x8xf32>
    %61 = arith.mulf %60, %49 : vector<16x8xf32>
    %62 = arith.addf %57, %61 : vector<16x8xf32>
    %c2_21 = arith.constant 2 : index
    %c0_22 = arith.constant 0 : index
    %c0_23 = arith.constant 0 : index
    %63 = vector.load %arg3[%c2_21, %c0_22, %c0_23] : memref<3x16x16xf32, #tpu.memory_space<vmem>>, vector<1x16x16xf32>
    %64 = vector.shape_cast %63 : vector<1x16x16xf32> to vector<16x16xf32>
    %cst_24 = arith.constant dense<0.000000e+00> : vector<16x8xf32>
    %65 = tpu.matmul %64, %25, %cst_24 {dimension_numbers = #tpu.dot_dimension_numbers<[1], [0], [0], [1], [0, 0, 1, 1], [], []>} : vector<16x16xf32>, vector<16x8xf32>, vector<16x8xf32> -> vector<16x8xf32>
    %66 = arith.mulf %65, %51 : vector<16x8xf32>
    %67 = arith.addf %62, %66 : vector<16x8xf32>
    %68 = arith.divf %67, %53 : vector<16x8xf32>
    %cst_25 = arith.constant dense<0.000000e+00> : vector<8xf32>
    %69 = vector.multi_reduction <add>, %68, %cst_25 [0] : vector<16x8xf32> to vector<8xf32>
    %70 = vector.shape_cast %69 : vector<8xf32> to vector<1x8xf32>
    %cst_26 = arith.constant 1.250000e-01 : f32
    %71 = vector.broadcast %cst_26 : f32 to vector<1x8xf32>
    %72 = arith.mulf %70, %71 : vector<1x8xf32>
    %c0_27 = arith.constant 0 : index
    %c0_28 = arith.constant 0 : index
    %c0_29 = arith.constant 0 : index
    %73 = vector.load %arg6[%c0_27, %c0_28, %c0_29] : memref<2x7x16xf32, #tpu.memory_space<vmem>>, vector<1x7x16xf32>
    %74 = vector.shape_cast %73 : vector<1x7x16xf32> to vector<7x16xf32>
    %cst_30 = arith.constant dense<0.000000e+00> : vector<7x8xf32>
    %75 = tpu.matmul %74, %25, %cst_30 {dimension_numbers = #tpu.dot_dimension_numbers<[1], [0], [0], [1], [0, 0, 1, 1], [], []>} : vector<7x16xf32>, vector<16x8xf32>, vector<7x8xf32> -> vector<7x8xf32>
    %c1_31 = arith.constant 1 : index
    %c0_32 = arith.constant 0 : index
    %c0_33 = arith.constant 0 : index
    %76 = vector.load %arg6[%c1_31, %c0_32, %c0_33] : memref<2x7x16xf32, #tpu.memory_space<vmem>>, vector<1x7x16xf32>
    %77 = vector.shape_cast %76 : vector<1x7x16xf32> to vector<7x16xf32>
    %cst_34 = arith.constant dense<0.000000e+00> : vector<7x8xf32>
    %78 = tpu.matmul %77, %25, %cst_34 {dimension_numbers = #tpu.dot_dimension_numbers<[1], [0], [0], [1], [0, 0, 1, 1], [], []>} : vector<7x16xf32>, vector<16x8xf32>, vector<7x8xf32> -> vector<7x8xf32>
    %79 = arith.mulf %75, %75 : vector<7x8xf32>
    %80 = arith.mulf %78, %78 : vector<7x8xf32>
    %81 = arith.addf %79, %80 : vector<7x8xf32>
    %82 = tpu.iota {dimensions = array<i32: 0>} : vector<7x8xi32>
    %cst_35 = arith.constant 0.000000e+00 : f32
    %83 = vector.broadcast %cst_35 : f32 to vector<7x8xf32>
    %cst_36 = arith.constant dense<0xFF800000> : vector<8xf32>
    %84 = vector.multi_reduction <maximumf>, %81, %cst_36 [0] : vector<7x8xf32> to vector<8xf32>
    %85 = vector.shape_cast %84 : vector<8xf32> to vector<1x8xf32>
    %86 = vector.broadcast %85 : vector<1x8xf32> to vector<7x8xf32>
    %87 = arith.cmpf oge, %81, %86 : vector<7x8xf32>
    %c7_i32 = arith.constant 7 : i32
    %88 = vector.broadcast %c7_i32 : i32 to vector<7x8xi32>
    %89 = arith.select %87, %82, %88 : vector<7x8xi1>, vector<7x8xi32>
    %cst_37 = arith.constant dense<2147483647> : vector<8xi32>
    %90 = vector.multi_reduction <minsi>, %89, %cst_37 [0] : vector<7x8xi32> to vector<8xi32>
    %91 = vector.shape_cast %90 : vector<8xi32> to vector<1x8xi32>
    %92 = vector.broadcast %91 : vector<1x8xi32> to vector<7x8xi32>
    %93 = arith.cmpi eq, %82, %92 : vector<7x8xi32>
    %cst_38 = arith.constant 1.000000e+00 : f32
    %94 = vector.broadcast %cst_38 : f32 to vector<7x8xf32>
    %95 = arith.select %93, %94, %83 : vector<7x8xi1>, vector<7x8xf32>
    %cst_39 = arith.constant -1.000000e+00 : f32
    %96 = vector.broadcast %cst_39 : f32 to vector<7x8xf32>
    %97 = arith.select %93, %96, %81 : vector<7x8xi1>, vector<7x8xf32>
    %cst_40 = arith.constant dense<0xFF800000> : vector<8xf32>
    %98 = vector.multi_reduction <maximumf>, %97, %cst_40 [0] : vector<7x8xf32> to vector<8xf32>
    %99 = vector.shape_cast %98 : vector<8xf32> to vector<1x8xf32>
    %100 = vector.broadcast %99 : vector<1x8xf32> to vector<7x8xf32>
    %101 = arith.cmpf oge, %97, %100 : vector<7x8xf32>
    %c7_i32_41 = arith.constant 7 : i32
    %102 = vector.broadcast %c7_i32_41 : i32 to vector<7x8xi32>
    %103 = arith.select %101, %82, %102 : vector<7x8xi1>, vector<7x8xi32>
    %cst_42 = arith.constant dense<2147483647> : vector<8xi32>
    %104 = vector.multi_reduction <minsi>, %103, %cst_42 [0] : vector<7x8xi32> to vector<8xi32>
    %105 = vector.shape_cast %104 : vector<8xi32> to vector<1x8xi32>
    %106 = vector.broadcast %105 : vector<1x8xi32> to vector<7x8xi32>
    %107 = arith.cmpi eq, %82, %106 : vector<7x8xi32>
    %cst_43 = arith.constant 1.000000e+00 : f32
    %108 = vector.broadcast %cst_43 : f32 to vector<7x8xf32>
    %109 = arith.select %107, %108, %95 : vector<7x8xi1>, vector<7x8xf32>
    %cst_44 = arith.constant -1.000000e+00 : f32
    %110 = vector.broadcast %cst_44 : f32 to vector<7x8xf32>
    %111 = arith.select %107, %110, %97 : vector<7x8xi1>, vector<7x8xf32>
    %cst_45 = arith.constant dense<0xFF800000> : vector<8xf32>
    %112 = vector.multi_reduction <maximumf>, %111, %cst_45 [0] : vector<7x8xf32> to vector<8xf32>
    %113 = vector.shape_cast %112 : vector<8xf32> to vector<1x8xf32>
    %114 = vector.broadcast %113 : vector<1x8xf32> to vector<7x8xf32>
    %115 = arith.cmpf oge, %111, %114 : vector<7x8xf32>
    %c7_i32_46 = arith.constant 7 : i32
    %116 = vector.broadcast %c7_i32_46 : i32 to vector<7x8xi32>
    %117 = arith.select %115, %82, %116 : vector<7x8xi1>, vector<7x8xi32>
    %cst_47 = arith.constant dense<2147483647> : vector<8xi32>
    %118 = vector.multi_reduction <minsi>, %117, %cst_47 [0] : vector<7x8xi32> to vector<8xi32>
    %119 = vector.shape_cast %118 : vector<8xi32> to vector<1x8xi32>
    %120 = vector.broadcast %119 : vector<1x8xi32> to vector<7x8xi32>
    %121 = arith.cmpi eq, %82, %120 : vector<7x8xi32>
    %cst_48 = arith.constant 1.000000e+00 : f32
    %122 = vector.broadcast %cst_48 : f32 to vector<7x8xf32>
    %123 = arith.select %121, %122, %109 : vector<7x8xi1>, vector<7x8xf32>
    %124 = arith.mulf %75, %123 : vector<7x8xf32>
    %125 = arith.mulf %78, %123 : vector<7x8xf32>
    %c0_49 = arith.constant 0 : index
    %c0_50 = arith.constant 0 : index
    %c0_51 = arith.constant 0 : index
    %126 = vector.load %arg7[%c0_49, %c0_50, %c0_51] : memref<2x256x7xf32, #tpu.memory_space<vmem>>, vector<1x256x7xf32>
    %127 = vector.shape_cast %126 : vector<1x256x7xf32> to vector<256x7xf32>
    %cst_52 = arith.constant dense<0.000000e+00> : vector<256x8xf32>
    %128 = tpu.matmul %127, %124, %cst_52 {dimension_numbers = #tpu.dot_dimension_numbers<[1], [0], [0], [1], [0, 0, 1, 1], [], []>} : vector<256x7xf32>, vector<7x8xf32>, vector<256x8xf32> -> vector<256x8xf32>
    %c1_53 = arith.constant 1 : index
    %c0_54 = arith.constant 0 : index
    %c0_55 = arith.constant 0 : index
    %129 = vector.load %arg7[%c1_53, %c0_54, %c0_55] : memref<2x256x7xf32, #tpu.memory_space<vmem>>, vector<1x256x7xf32>
    %130 = vector.shape_cast %129 : vector<1x256x7xf32> to vector<256x7xf32>
    %cst_56 = arith.constant dense<0.000000e+00> : vector<256x8xf32>
    %131 = tpu.matmul %130, %125, %cst_56 {dimension_numbers = #tpu.dot_dimension_numbers<[1], [0], [0], [1], [0, 0, 1, 1], [], []>} : vector<256x7xf32>, vector<7x8xf32>, vector<256x8xf32> -> vector<256x8xf32>
    %132 = arith.addf %128, %131 : vector<256x8xf32>
    %133 = vector.extract_strided_slice %132 {offsets = [0, 0], sizes = [32, 8], strides = [1, 1]} : vector<256x8xf32> to vector<32x8xf32>
    %134 = vector.extract_strided_slice %132 {offsets = [32, 0], sizes = [32, 8], strides = [1, 1]} : vector<256x8xf32> to vector<32x8xf32>
    %135 = vector.extract_strided_slice %132 {offsets = [64, 0], sizes = [32, 8], strides = [1, 1]} : vector<256x8xf32> to vector<32x8xf32>
    %136 = vector.extract_strided_slice %132 {offsets = [96, 0], sizes = [32, 8], strides = [1, 1]} : vector<256x8xf32> to vector<32x8xf32>
    %137 = vector.extract_strided_slice %132 {offsets = [128, 0], sizes = [32, 8], strides = [1, 1]} : vector<256x8xf32> to vector<32x8xf32>
    %138 = vector.extract_strided_slice %132 {offsets = [160, 0], sizes = [32, 8], strides = [1, 1]} : vector<256x8xf32> to vector<32x8xf32>
    %139 = vector.extract_strided_slice %132 {offsets = [192, 0], sizes = [32, 8], strides = [1, 1]} : vector<256x8xf32> to vector<32x8xf32>
    %140 = vector.extract_strided_slice %132 {offsets = [224, 0], sizes = [32, 8], strides = [1, 1]} : vector<256x8xf32> to vector<32x8xf32>
    %141 = tpu.concatenate %133, %134, %135, %136, %137, %138, %139, %140 in 1 : vector<32x8xf32>, vector<32x8xf32>, vector<32x8xf32>, vector<32x8xf32>, vector<32x8xf32>, vector<32x8xf32>, vector<32x8xf32>, vector<32x8xf32> -> vector<32x64xf32>
    %c0_57 = arith.constant 0 : index
    %c0_58 = arith.constant 0 : index
    %142 = vector.load %arg8[%c0_57, %c0_58] : memref<32x64xf32, #tpu.memory_space<vmem>>, vector<32x64xf32>
    %143 = arith.addf %141, %142 : vector<32x64xf32>
    %144 = vector.extract_strided_slice %143 {offsets = [0, 0], sizes = [16, 64], strides = [1, 1]} : vector<32x64xf32> to vector<16x64xf32>
    %145 = vector.extract_strided_slice %143 {offsets = [16, 0], sizes = [16, 64], strides = [1, 1]} : vector<32x64xf32> to vector<16x64xf32>
    %c0_59 = arith.constant 0 : index
    %c0_60 = arith.constant 0 : index
    %c0_61 = arith.constant 0 : index
    %146 = vector.load %arg11[%c0_59, %c0_60, %c0_61] : memref<2x64x40xf32, #tpu.memory_space<vmem>>, vector<1x64x40xf32>
    %147 = vector.shape_cast %146 : vector<1x64x40xf32> to vector<64x40xf32>
    %c1_62 = arith.constant 1 : index
    %c0_63 = arith.constant 0 : index
    %c0_64 = arith.constant 0 : index
    %148 = vector.load %arg11[%c1_62, %c0_63, %c0_64] : memref<2x64x40xf32, #tpu.memory_space<vmem>>, vector<1x64x40xf32>
    %149 = vector.shape_cast %148 : vector<1x64x40xf32> to vector<64x40xf32>
    %c0_65 = arith.constant 0 : index
    %c0_66 = arith.constant 0 : index
    %c0_67 = arith.constant 0 : index
    %150 = vector.load %arg12[%c0_65, %c0_66, %c0_67] : memref<2x40x64xf32, #tpu.memory_space<vmem>>, vector<1x40x64xf32>
    %151 = vector.shape_cast %150 : vector<1x40x64xf32> to vector<40x64xf32>
    %c1_68 = arith.constant 1 : index
    %c0_69 = arith.constant 0 : index
    %c0_70 = arith.constant 0 : index
    %152 = vector.load %arg12[%c1_68, %c0_69, %c0_70] : memref<2x40x64xf32, #tpu.memory_space<vmem>>, vector<1x40x64xf32>
    %153 = vector.shape_cast %152 : vector<1x40x64xf32> to vector<40x64xf32>
    %c0_71 = arith.constant 0 : index
    %c0_72 = arith.constant 0 : index
    %c0_73 = arith.constant 0 : index
    %154 = vector.load %arg9[%c0_71, %c0_72, %c0_73] : memref<4x16x154xf32, #tpu.memory_space<vmem>>, vector<1x16x154xf32>
    %155 = vector.shape_cast %154 : vector<1x16x154xf32> to vector<16x154xf32>
    %c0_74 = arith.constant 0 : index
    %c0_75 = arith.constant 0 : index
    %c0_76 = arith.constant 0 : index
    %156 = vector.load %arg10[%c0_74, %c0_75, %c0_76] : memref<4x8x51xf32, #tpu.memory_space<vmem>>, vector<1x8x51xf32>
    %157 = vector.shape_cast %156 : vector<1x8x51xf32> to vector<8x51xf32>
    %158 = vector.extract_strided_slice %155 {offsets = [0, 0], sizes = [16, 96], strides = [1, 1]} : vector<16x154xf32> to vector<16x96xf32>
    %159 = vector.extract_strided_slice %155 {offsets = [0, 96], sizes = [16, 48], strides = [1, 1]} : vector<16x154xf32> to vector<16x48xf32>
    %160 = vector.extract_strided_slice %155 {offsets = [0, 144], sizes = [16, 8], strides = [1, 1]} : vector<16x154xf32> to vector<16x8xf32>
    %161 = vector.extract_strided_slice %155 {offsets = [0, 152], sizes = [16, 1], strides = [1, 1]} : vector<16x154xf32> to vector<16x1xf32>
    %162 = vector.extract_strided_slice %155 {offsets = [0, 153], sizes = [16, 1], strides = [1, 1]} : vector<16x154xf32> to vector<16x1xf32>
    %163 = vector.extract_strided_slice %157 {offsets = [0, 0], sizes = [8, 16], strides = [1, 1]} : vector<8x51xf32> to vector<8x16xf32>
    %164 = vector.extract_strided_slice %157 {offsets = [0, 16], sizes = [8, 16], strides = [1, 1]} : vector<8x51xf32> to vector<8x16xf32>
    %165 = vector.extract_strided_slice %157 {offsets = [0, 32], sizes = [8, 16], strides = [1, 1]} : vector<8x51xf32> to vector<8x16xf32>
    %166 = vector.extract_strided_slice %157 {offsets = [0, 48], sizes = [8, 1], strides = [1, 1]} : vector<8x51xf32> to vector<8x1xf32>
    %167 = vector.extract_strided_slice %157 {offsets = [0, 49], sizes = [8, 1], strides = [1, 1]} : vector<8x51xf32> to vector<8x1xf32>
    %168 = vector.extract_strided_slice %157 {offsets = [0, 50], sizes = [8, 1], strides = [1, 1]} : vector<8x51xf32> to vector<8x1xf32>
    %cst_77 = arith.constant 0.000000e+00 : f32
    %169 = vector.broadcast %cst_77 : f32 to vector<16x8xf32>
    %170 = vector.extract_strided_slice %144 {offsets = [0, 0], sizes = [16, 56], strides = [1, 1]} : vector<16x64xf32> to vector<16x56xf32>
    %171 = tpu.concatenate %169, %170 in 1 : vector<16x8xf32>, vector<16x56xf32> -> vector<16x64xf32>
    %cst_78 = arith.constant 0.000000e+00 : f32
    %172 = vector.broadcast %cst_78 : f32 to vector<16x8xf32>
    %173 = vector.extract_strided_slice %144 {offsets = [0, 8], sizes = [16, 56], strides = [1, 1]} : vector<16x64xf32> to vector<16x56xf32>
    %174 = tpu.concatenate %173, %172 in 1 : vector<16x56xf32>, vector<16x8xf32> -> vector<16x64xf32>
    %175 = tpu.concatenate %171, %144, %174 in 0 : vector<16x64xf32>, vector<16x64xf32>, vector<16x64xf32> -> vector<48x64xf32>
    %cst_79 = arith.constant 0.000000e+00 : f32
    %176 = vector.broadcast %cst_79 : f32 to vector<16x8xf32>
    %177 = vector.extract_strided_slice %145 {offsets = [0, 0], sizes = [16, 56], strides = [1, 1]} : vector<16x64xf32> to vector<16x56xf32>
    %178 = tpu.concatenate %176, %177 in 1 : vector<16x8xf32>, vector<16x56xf32> -> vector<16x64xf32>
    %cst_80 = arith.constant 0.000000e+00 : f32
    %179 = vector.broadcast %cst_80 : f32 to vector<16x8xf32>
    %180 = vector.extract_strided_slice %145 {offsets = [0, 8], sizes = [16, 56], strides = [1, 1]} : vector<16x64xf32> to vector<16x56xf32>
    %181 = tpu.concatenate %180, %179 in 1 : vector<16x56xf32>, vector<16x8xf32> -> vector<16x64xf32>
    %182 = tpu.concatenate %178, %145, %181 in 0 : vector<16x64xf32>, vector<16x64xf32>, vector<16x64xf32> -> vector<48x64xf32>
    %183 = tpu.concatenate %175, %182 in 0 : vector<48x64xf32>, vector<48x64xf32> -> vector<96x64xf32>
    %cst_81 = arith.constant dense<0.000000e+00> : vector<16x64xf32>
    %184 = tpu.matmul %158, %183, %cst_81 {dimension_numbers = #tpu.dot_dimension_numbers<[1], [0], [0], [1], [0, 0, 1, 1], [], []>} : vector<16x96xf32>, vector<96x64xf32>, vector<16x64xf32> -> vector<16x64xf32>
    %185 = vector.broadcast %161 : vector<16x1xf32> to vector<16x64xf32>
    %186 = arith.addf %184, %185 : vector<16x64xf32>
    %cst_82 = arith.constant dense<0.000000e+00> : vector<16x64xf32>
    %187 = tpu.matmul %159, %175, %cst_82 {dimension_numbers = #tpu.dot_dimension_numbers<[1], [0], [0], [1], [0, 0, 1, 1], [], []>} : vector<16x48xf32>, vector<48x64xf32>, vector<16x64xf32> -> vector<16x64xf32>
    %cst_83 = arith.constant dense<0.000000e+00> : vector<8x64xf32>
    %188 = tpu.matmul %163, %145, %cst_83 {dimension_numbers = #tpu.dot_dimension_numbers<[1], [0], [0], [1], [0, 0, 1, 1], [], []>} : vector<8x16xf32>, vector<16x64xf32>, vector<8x64xf32> -> vector<8x64xf32>
    %189 = vector.broadcast %166 : vector<8x1xf32> to vector<8x64xf32>
    %190 = arith.addf %188, %189 : vector<8x64xf32>
    %cst_84 = arith.constant 0.000000e+00 : f32
    %191 = vector.broadcast %cst_84 : f32 to vector<8x64xf32>
    %192 = arith.maximumf %190, %191 : vector<8x64xf32>
    %cst_85 = arith.constant dense<0.000000e+00> : vector<8x40xf32>
    %193 = tpu.matmul %192, %147, %cst_85 {dimension_numbers = #tpu.dot_dimension_numbers<[1], [0], [0], [1], [0, 0, 1, 1], [], []>} : vector<8x64xf32>, vector<64x40xf32>, vector<8x40xf32> -> vector<8x40xf32>
    %cst_86 = arith.constant dense<0.000000e+00> : vector<8x40xf32>
    %194 = tpu.matmul %192, %149, %cst_86 {dimension_numbers = #tpu.dot_dimension_numbers<[1], [0], [0], [1], [0, 0, 1, 1], [], []>} : vector<8x64xf32>, vector<64x40xf32>, vector<8x40xf32> -> vector<8x40xf32>
    %195 = tpu.concatenate %193, %194 in 0 : vector<8x40xf32>, vector<8x40xf32> -> vector<16x40xf32>
    %cst_87 = arith.constant dense<0.000000e+00> : vector<8x40xf32>
    %196 = tpu.matmul %164, %195, %cst_87 {dimension_numbers = #tpu.dot_dimension_numbers<[1], [0], [0], [1], [0, 0, 1, 1], [], []>} : vector<8x16xf32>, vector<16x40xf32>, vector<8x40xf32> -> vector<8x40xf32>
    %197 = vector.broadcast %167 : vector<8x1xf32> to vector<8x40xf32>
    %198 = arith.addf %196, %197 : vector<8x40xf32>
    %cst_88 = arith.constant 0.000000e+00 : f32
    %199 = vector.broadcast %cst_88 : f32 to vector<8x40xf32>
    %200 = arith.maximumf %198, %199 : vector<8x40xf32>
    %cst_89 = arith.constant dense<0.000000e+00> : vector<8x40xf32>
    %201 = tpu.matmul %165, %195, %cst_89 {dimension_numbers = #tpu.dot_dimension_numbers<[1], [0], [0], [1], [0, 0, 1, 1], [], []>} : vector<8x16xf32>, vector<16x40xf32>, vector<8x40xf32> -> vector<8x40xf32>
    %202 = vector.broadcast %168 : vector<8x1xf32> to vector<8x40xf32>
    %203 = arith.addf %201, %202 : vector<8x40xf32>
    %cst_90 = arith.constant 0.000000e+00 : f32
    %204 = vector.broadcast %cst_90 : f32 to vector<8x40xf32>
    %205 = arith.maximumf %203, %204 : vector<8x40xf32>
    %cst_91 = arith.constant dense<0.000000e+00> : vector<8x64xf32>
    %206 = tpu.matmul %200, %151, %cst_91 {dimension_numbers = #tpu.dot_dimension_numbers<[1], [0], [0], [1], [0, 0, 1, 1], [], []>} : vector<8x40xf32>, vector<40x64xf32>, vector<8x64xf32> -> vector<8x64xf32>
    %cst_92 = arith.constant dense<0.000000e+00> : vector<8x64xf32>
    %207 = tpu.matmul %205, %153, %cst_92 {dimension_numbers = #tpu.dot_dimension_numbers<[1], [0], [0], [1], [0, 0, 1, 1], [], []>} : vector<8x40xf32>, vector<40x64xf32>, vector<8x64xf32> -> vector<8x64xf32>
    %208 = arith.addf %206, %207 : vector<8x64xf32>
    %209 = arith.addf %192, %208 : vector<8x64xf32>
    %cst_93 = arith.constant dense<0.000000e+00> : vector<16x64xf32>
    %210 = tpu.matmul %160, %209, %cst_93 {dimension_numbers = #tpu.dot_dimension_numbers<[1], [0], [0], [1], [0, 0, 1, 1], [], []>} : vector<16x8xf32>, vector<8x64xf32>, vector<16x64xf32> -> vector<16x64xf32>
    %211 = arith.addf %187, %210 : vector<16x64xf32>
    %212 = vector.broadcast %162 : vector<16x1xf32> to vector<16x64xf32>
    %213 = arith.addf %211, %212 : vector<16x64xf32>
    %cst_94 = arith.constant 0.000000e+00 : f32
    %214 = vector.broadcast %cst_94 : f32 to vector<16x64xf32>
    %215 = arith.maximumf %186, %214 : vector<16x64xf32>
    %cst_95 = arith.constant 0.000000e+00 : f32
    %216 = vector.broadcast %cst_95 : f32 to vector<16x64xf32>
    %217 = arith.maximumf %213, %216 : vector<16x64xf32>
    %c1_96 = arith.constant 1 : index
    %c0_97 = arith.constant 0 : index
    %c0_98 = arith.constant 0 : index
    %218 = vector.load %arg9[%c1_96, %c0_97, %c0_98] : memref<4x16x154xf32, #tpu.memory_space<vmem>>, vector<1x16x154xf32>
    %219 = vector.shape_cast %218 : vector<1x16x154xf32> to vector<16x154xf32>
    %c1_99 = arith.constant 1 : index
    %c0_100 = arith.constant 0 : index
    %c0_101 = arith.constant 0 : index
    %220 = vector.load %arg10[%c1_99, %c0_100, %c0_101] : memref<4x8x51xf32, #tpu.memory_space<vmem>>, vector<1x8x51xf32>
    %221 = vector.shape_cast %220 : vector<1x8x51xf32> to vector<8x51xf32>
    %222 = vector.extract_strided_slice %219 {offsets = [0, 0], sizes = [16, 96], strides = [1, 1]} : vector<16x154xf32> to vector<16x96xf32>
    %223 = vector.extract_strided_slice %219 {offsets = [0, 96], sizes = [16, 48], strides = [1, 1]} : vector<16x154xf32> to vector<16x48xf32>
    %224 = vector.extract_strided_slice %219 {offsets = [0, 144], sizes = [16, 8], strides = [1, 1]} : vector<16x154xf32> to vector<16x8xf32>
    %225 = vector.extract_strided_slice %219 {offsets = [0, 152], sizes = [16, 1], strides = [1, 1]} : vector<16x154xf32> to vector<16x1xf32>
    %226 = vector.extract_strided_slice %219 {offsets = [0, 153], sizes = [16, 1], strides = [1, 1]} : vector<16x154xf32> to vector<16x1xf32>
    %227 = vector.extract_strided_slice %221 {offsets = [0, 0], sizes = [8, 16], strides = [1, 1]} : vector<8x51xf32> to vector<8x16xf32>
    %228 = vector.extract_strided_slice %221 {offsets = [0, 16], sizes = [8, 16], strides = [1, 1]} : vector<8x51xf32> to vector<8x16xf32>
    %229 = vector.extract_strided_slice %221 {offsets = [0, 32], sizes = [8, 16], strides = [1, 1]} : vector<8x51xf32> to vector<8x16xf32>
    %230 = vector.extract_strided_slice %221 {offsets = [0, 48], sizes = [8, 1], strides = [1, 1]} : vector<8x51xf32> to vector<8x1xf32>
    %231 = vector.extract_strided_slice %221 {offsets = [0, 49], sizes = [8, 1], strides = [1, 1]} : vector<8x51xf32> to vector<8x1xf32>
    %232 = vector.extract_strided_slice %221 {offsets = [0, 50], sizes = [8, 1], strides = [1, 1]} : vector<8x51xf32> to vector<8x1xf32>
    %cst_102 = arith.constant 0.000000e+00 : f32
    %233 = vector.broadcast %cst_102 : f32 to vector<16x8xf32>
    %234 = vector.extract_strided_slice %215 {offsets = [0, 0], sizes = [16, 56], strides = [1, 1]} : vector<16x64xf32> to vector<16x56xf32>
    %235 = tpu.concatenate %233, %234 in 1 : vector<16x8xf32>, vector<16x56xf32> -> vector<16x64xf32>
    %cst_103 = arith.constant 0.000000e+00 : f32
    %236 = vector.broadcast %cst_103 : f32 to vector<16x8xf32>
    %237 = vector.extract_strided_slice %215 {offsets = [0, 8], sizes = [16, 56], strides = [1, 1]} : vector<16x64xf32> to vector<16x56xf32>
    %238 = tpu.concatenate %237, %236 in 1 : vector<16x56xf32>, vector<16x8xf32> -> vector<16x64xf32>
    %239 = tpu.concatenate %235, %215, %238 in 0 : vector<16x64xf32>, vector<16x64xf32>, vector<16x64xf32> -> vector<48x64xf32>
    %cst_104 = arith.constant 0.000000e+00 : f32
    %240 = vector.broadcast %cst_104 : f32 to vector<16x8xf32>
    %241 = vector.extract_strided_slice %217 {offsets = [0, 0], sizes = [16, 56], strides = [1, 1]} : vector<16x64xf32> to vector<16x56xf32>
    %242 = tpu.concatenate %240, %241 in 1 : vector<16x8xf32>, vector<16x56xf32> -> vector<16x64xf32>
    %cst_105 = arith.constant 0.000000e+00 : f32
    %243 = vector.broadcast %cst_105 : f32 to vector<16x8xf32>
    %244 = vector.extract_strided_slice %217 {offsets = [0, 8], sizes = [16, 56], strides = [1, 1]} : vector<16x64xf32> to vector<16x56xf32>
    %245 = tpu.concatenate %244, %243 in 1 : vector<16x56xf32>, vector<16x8xf32> -> vector<16x64xf32>
    %246 = tpu.concatenate %242, %217, %245 in 0 : vector<16x64xf32>, vector<16x64xf32>, vector<16x64xf32> -> vector<48x64xf32>
    %247 = tpu.concatenate %239, %246 in 0 : vector<48x64xf32>, vector<48x64xf32> -> vector<96x64xf32>
    %cst_106 = arith.constant dense<0.000000e+00> : vector<16x64xf32>
    %248 = tpu.matmul %222, %247, %cst_106 {dimension_numbers = #tpu.dot_dimension_numbers<[1], [0], [0], [1], [0, 0, 1, 1], [], []>} : vector<16x96xf32>, vector<96x64xf32>, vector<16x64xf32> -> vector<16x64xf32>
    %249 = vector.broadcast %225 : vector<16x1xf32> to vector<16x64xf32>
    %250 = arith.addf %248, %249 : vector<16x64xf32>
    %cst_107 = arith.constant dense<0.000000e+00> : vector<16x64xf32>
    %251 = tpu.matmul %223, %239, %cst_107 {dimension_numbers = #tpu.dot_dimension_numbers<[1], [0], [0], [1], [0, 0, 1, 1], [], []>} : vector<16x48xf32>, vector<48x64xf32>, vector<16x64xf32> -> vector<16x64xf32>
    %cst_108 = arith.constant dense<0.000000e+00> : vector<8x64xf32>
    %252 = tpu.matmul %227, %217, %cst_108 {dimension_numbers = #tpu.dot_dimension_numbers<[1], [0], [0], [1], [0, 0, 1, 1], [], []>} : vector<8x16xf32>, vector<16x64xf32>, vector<8x64xf32> -> vector<8x64xf32>
    %253 = vector.broadcast %230 : vector<8x1xf32> to vector<8x64xf32>
    %254 = arith.addf %252, %253 : vector<8x64xf32>
    %cst_109 = arith.constant 0.000000e+00 : f32
    %255 = vector.broadcast %cst_109 : f32 to vector<8x64xf32>
    %256 = arith.maximumf %254, %255 : vector<8x64xf32>
    %cst_110 = arith.constant dense<0.000000e+00> : vector<8x40xf32>
    %257 = tpu.matmul %256, %147, %cst_110 {dimension_numbers = #tpu.dot_dimension_numbers<[1], [0], [0], [1], [0, 0, 1, 1], [], []>} : vector<8x64xf32>, vector<64x40xf32>, vector<8x40xf32> -> vector<8x40xf32>
    %cst_111 = arith.constant dense<0.000000e+00> : vector<8x40xf32>
    %258 = tpu.matmul %256, %149, %cst_111 {dimension_numbers = #tpu.dot_dimension_numbers<[1], [0], [0], [1], [0, 0, 1, 1], [], []>} : vector<8x64xf32>, vector<64x40xf32>, vector<8x40xf32> -> vector<8x40xf32>
    %259 = tpu.concatenate %257, %258 in 0 : vector<8x40xf32>, vector<8x40xf32> -> vector<16x40xf32>
    %cst_112 = arith.constant dense<0.000000e+00> : vector<8x40xf32>
    %260 = tpu.matmul %228, %259, %cst_112 {dimension_numbers = #tpu.dot_dimension_numbers<[1], [0], [0], [1], [0, 0, 1, 1], [], []>} : vector<8x16xf32>, vector<16x40xf32>, vector<8x40xf32> -> vector<8x40xf32>
    %261 = vector.broadcast %231 : vector<8x1xf32> to vector<8x40xf32>
    %262 = arith.addf %260, %261 : vector<8x40xf32>
    %cst_113 = arith.constant 0.000000e+00 : f32
    %263 = vector.broadcast %cst_113 : f32 to vector<8x40xf32>
    %264 = arith.maximumf %262, %263 : vector<8x40xf32>
    %cst_114 = arith.constant dense<0.000000e+00> : vector<8x40xf32>
    %265 = tpu.matmul %229, %259, %cst_114 {dimension_numbers = #tpu.dot_dimension_numbers<[1], [0], [0], [1], [0, 0, 1, 1], [], []>} : vector<8x16xf32>, vector<16x40xf32>, vector<8x40xf32> -> vector<8x40xf32>
    %266 = vector.broadcast %232 : vector<8x1xf32> to vector<8x40xf32>
    %267 = arith.addf %265, %266 : vector<8x40xf32>
    %cst_115 = arith.constant 0.000000e+00 : f32
    %268 = vector.broadcast %cst_115 : f32 to vector<8x40xf32>
    %269 = arith.maximumf %267, %268 : vector<8x40xf32>
    %cst_116 = arith.constant dense<0.000000e+00> : vector<8x64xf32>
    %270 = tpu.matmul %264, %151, %cst_116 {dimension_numbers = #tpu.dot_dimension_numbers<[1], [0], [0], [1], [0, 0, 1, 1], [], []>} : vector<8x40xf32>, vector<40x64xf32>, vector<8x64xf32> -> vector<8x64xf32>
    %cst_117 = arith.constant dense<0.000000e+00> : vector<8x64xf32>
    %271 = tpu.matmul %269, %153, %cst_117 {dimension_numbers = #tpu.dot_dimension_numbers<[1], [0], [0], [1], [0, 0, 1, 1], [], []>} : vector<8x40xf32>, vector<40x64xf32>, vector<8x64xf32> -> vector<8x64xf32>
    %272 = arith.addf %270, %271 : vector<8x64xf32>
    %273 = arith.addf %256, %272 : vector<8x64xf32>
    %cst_118 = arith.constant dense<0.000000e+00> : vector<16x64xf32>
    %274 = tpu.matmul %224, %273, %cst_118 {dimension_numbers = #tpu.dot_dimension_numbers<[1], [0], [0], [1], [0, 0, 1, 1], [], []>} : vector<16x8xf32>, vector<8x64xf32>, vector<16x64xf32> -> vector<16x64xf32>
    %275 = arith.addf %251, %274 : vector<16x64xf32>
    %276 = vector.broadcast %226 : vector<16x1xf32> to vector<16x64xf32>
    %277 = arith.addf %275, %276 : vector<16x64xf32>
    %278 = arith.addf %250, %144 : vector<16x64xf32>
    %cst_119 = arith.constant 0.000000e+00 : f32
    %279 = vector.broadcast %cst_119 : f32 to vector<16x64xf32>
    %280 = arith.maximumf %278, %279 : vector<16x64xf32>
    %281 = arith.addf %277, %145 : vector<16x64xf32>
    %cst_120 = arith.constant 0.000000e+00 : f32
    %282 = vector.broadcast %cst_120 : f32 to vector<16x64xf32>
    %283 = arith.maximumf %281, %282 : vector<16x64xf32>
    %c2_121 = arith.constant 2 : index
    %c0_122 = arith.constant 0 : index
    %c0_123 = arith.constant 0 : index
    %284 = vector.load %arg9[%c2_121, %c0_122, %c0_123] : memref<4x16x154xf32, #tpu.memory_space<vmem>>, vector<1x16x154xf32>
    %285 = vector.shape_cast %284 : vector<1x16x154xf32> to vector<16x154xf32>
    %c2_124 = arith.constant 2 : index
    %c0_125 = arith.constant 0 : index
    %c0_126 = arith.constant 0 : index
    %286 = vector.load %arg10[%c2_124, %c0_125, %c0_126] : memref<4x8x51xf32, #tpu.memory_space<vmem>>, vector<1x8x51xf32>
    %287 = vector.shape_cast %286 : vector<1x8x51xf32> to vector<8x51xf32>
    %288 = vector.extract_strided_slice %285 {offsets = [0, 0], sizes = [16, 96], strides = [1, 1]} : vector<16x154xf32> to vector<16x96xf32>
    %289 = vector.extract_strided_slice %285 {offsets = [0, 96], sizes = [16, 48], strides = [1, 1]} : vector<16x154xf32> to vector<16x48xf32>
    %290 = vector.extract_strided_slice %285 {offsets = [0, 144], sizes = [16, 8], strides = [1, 1]} : vector<16x154xf32> to vector<16x8xf32>
    %291 = vector.extract_strided_slice %285 {offsets = [0, 152], sizes = [16, 1], strides = [1, 1]} : vector<16x154xf32> to vector<16x1xf32>
    %292 = vector.extract_strided_slice %285 {offsets = [0, 153], sizes = [16, 1], strides = [1, 1]} : vector<16x154xf32> to vector<16x1xf32>
    %293 = vector.extract_strided_slice %287 {offsets = [0, 0], sizes = [8, 16], strides = [1, 1]} : vector<8x51xf32> to vector<8x16xf32>
    %294 = vector.extract_strided_slice %287 {offsets = [0, 16], sizes = [8, 16], strides = [1, 1]} : vector<8x51xf32> to vector<8x16xf32>
    %295 = vector.extract_strided_slice %287 {offsets = [0, 32], sizes = [8, 16], strides = [1, 1]} : vector<8x51xf32> to vector<8x16xf32>
    %296 = vector.extract_strided_slice %287 {offsets = [0, 48], sizes = [8, 1], strides = [1, 1]} : vector<8x51xf32> to vector<8x1xf32>
    %297 = vector.extract_strided_slice %287 {offsets = [0, 49], sizes = [8, 1], strides = [1, 1]} : vector<8x51xf32> to vector<8x1xf32>
    %298 = vector.extract_strided_slice %287 {offsets = [0, 50], sizes = [8, 1], strides = [1, 1]} : vector<8x51xf32> to vector<8x1xf32>
    %cst_127 = arith.constant 0.000000e+00 : f32
    %299 = vector.broadcast %cst_127 : f32 to vector<16x8xf32>
    %300 = vector.extract_strided_slice %280 {offsets = [0, 0], sizes = [16, 56], strides = [1, 1]} : vector<16x64xf32> to vector<16x56xf32>
    %301 = tpu.concatenate %299, %300 in 1 : vector<16x8xf32>, vector<16x56xf32> -> vector<16x64xf32>
    %cst_128 = arith.constant 0.000000e+00 : f32
    %302 = vector.broadcast %cst_128 : f32 to vector<16x8xf32>
    %303 = vector.extract_strided_slice %280 {offsets = [0, 8], sizes = [16, 56], strides = [1, 1]} : vector<16x64xf32> to vector<16x56xf32>
    %304 = tpu.concatenate %303, %302 in 1 : vector<16x56xf32>, vector<16x8xf32> -> vector<16x64xf32>
    %305 = tpu.concatenate %301, %280, %304 in 0 : vector<16x64xf32>, vector<16x64xf32>, vector<16x64xf32> -> vector<48x64xf32>
    %cst_129 = arith.constant 0.000000e+00 : f32
    %306 = vector.broadcast %cst_129 : f32 to vector<16x8xf32>
    %307 = vector.extract_strided_slice %283 {offsets = [0, 0], sizes = [16, 56], strides = [1, 1]} : vector<16x64xf32> to vector<16x56xf32>
    %308 = tpu.concatenate %306, %307 in 1 : vector<16x8xf32>, vector<16x56xf32> -> vector<16x64xf32>
    %cst_130 = arith.constant 0.000000e+00 : f32
    %309 = vector.broadcast %cst_130 : f32 to vector<16x8xf32>
    %310 = vector.extract_strided_slice %283 {offsets = [0, 8], sizes = [16, 56], strides = [1, 1]} : vector<16x64xf32> to vector<16x56xf32>
    %311 = tpu.concatenate %310, %309 in 1 : vector<16x56xf32>, vector<16x8xf32> -> vector<16x64xf32>
    %312 = tpu.concatenate %308, %283, %311 in 0 : vector<16x64xf32>, vector<16x64xf32>, vector<16x64xf32> -> vector<48x64xf32>
    %313 = tpu.concatenate %305, %312 in 0 : vector<48x64xf32>, vector<48x64xf32> -> vector<96x64xf32>
    %cst_131 = arith.constant dense<0.000000e+00> : vector<16x64xf32>
    %314 = tpu.matmul %288, %313, %cst_131 {dimension_numbers = #tpu.dot_dimension_numbers<[1], [0], [0], [1], [0, 0, 1, 1], [], []>} : vector<16x96xf32>, vector<96x64xf32>, vector<16x64xf32> -> vector<16x64xf32>
    %315 = vector.broadcast %291 : vector<16x1xf32> to vector<16x64xf32>
    %316 = arith.addf %314, %315 : vector<16x64xf32>
    %cst_132 = arith.constant dense<0.000000e+00> : vector<16x64xf32>
    %317 = tpu.matmul %289, %305, %cst_132 {dimension_numbers = #tpu.dot_dimension_numbers<[1], [0], [0], [1], [0, 0, 1, 1], [], []>} : vector<16x48xf32>, vector<48x64xf32>, vector<16x64xf32> -> vector<16x64xf32>
    %cst_133 = arith.constant dense<0.000000e+00> : vector<8x64xf32>
    %318 = tpu.matmul %293, %283, %cst_133 {dimension_numbers = #tpu.dot_dimension_numbers<[1], [0], [0], [1], [0, 0, 1, 1], [], []>} : vector<8x16xf32>, vector<16x64xf32>, vector<8x64xf32> -> vector<8x64xf32>
    %319 = vector.broadcast %296 : vector<8x1xf32> to vector<8x64xf32>
    %320 = arith.addf %318, %319 : vector<8x64xf32>
    %cst_134 = arith.constant 0.000000e+00 : f32
    %321 = vector.broadcast %cst_134 : f32 to vector<8x64xf32>
    %322 = arith.maximumf %320, %321 : vector<8x64xf32>
    %cst_135 = arith.constant dense<0.000000e+00> : vector<8x40xf32>
    %323 = tpu.matmul %322, %147, %cst_135 {dimension_numbers = #tpu.dot_dimension_numbers<[1], [0], [0], [1], [0, 0, 1, 1], [], []>} : vector<8x64xf32>, vector<64x40xf32>, vector<8x40xf32> -> vector<8x40xf32>
    %cst_136 = arith.constant dense<0.000000e+00> : vector<8x40xf32>
    %324 = tpu.matmul %322, %149, %cst_136 {dimension_numbers = #tpu.dot_dimension_numbers<[1], [0], [0], [1], [0, 0, 1, 1], [], []>} : vector<8x64xf32>, vector<64x40xf32>, vector<8x40xf32> -> vector<8x40xf32>
    %325 = tpu.concatenate %323, %324 in 0 : vector<8x40xf32>, vector<8x40xf32> -> vector<16x40xf32>
    %cst_137 = arith.constant dense<0.000000e+00> : vector<8x40xf32>
    %326 = tpu.matmul %294, %325, %cst_137 {dimension_numbers = #tpu.dot_dimension_numbers<[1], [0], [0], [1], [0, 0, 1, 1], [], []>} : vector<8x16xf32>, vector<16x40xf32>, vector<8x40xf32> -> vector<8x40xf32>
    %327 = vector.broadcast %297 : vector<8x1xf32> to vector<8x40xf32>
    %328 = arith.addf %326, %327 : vector<8x40xf32>
    %cst_138 = arith.constant 0.000000e+00 : f32
    %329 = vector.broadcast %cst_138 : f32 to vector<8x40xf32>
    %330 = arith.maximumf %328, %329 : vector<8x40xf32>
    %cst_139 = arith.constant dense<0.000000e+00> : vector<8x40xf32>
    %331 = tpu.matmul %295, %325, %cst_139 {dimension_numbers = #tpu.dot_dimension_numbers<[1], [0], [0], [1], [0, 0, 1, 1], [], []>} : vector<8x16xf32>, vector<16x40xf32>, vector<8x40xf32> -> vector<8x40xf32>
    %332 = vector.broadcast %298 : vector<8x1xf32> to vector<8x40xf32>
    %333 = arith.addf %331, %332 : vector<8x40xf32>
    %cst_140 = arith.constant 0.000000e+00 : f32
    %334 = vector.broadcast %cst_140 : f32 to vector<8x40xf32>
    %335 = arith.maximumf %333, %334 : vector<8x40xf32>
    %cst_141 = arith.constant dense<0.000000e+00> : vector<8x64xf32>
    %336 = tpu.matmul %330, %151, %cst_141 {dimension_numbers = #tpu.dot_dimension_numbers<[1], [0], [0], [1], [0, 0, 1, 1], [], []>} : vector<8x40xf32>, vector<40x64xf32>, vector<8x64xf32> -> vector<8x64xf32>
    %cst_142 = arith.constant dense<0.000000e+00> : vector<8x64xf32>
    %337 = tpu.matmul %335, %153, %cst_142 {dimension_numbers = #tpu.dot_dimension_numbers<[1], [0], [0], [1], [0, 0, 1, 1], [], []>} : vector<8x40xf32>, vector<40x64xf32>, vector<8x64xf32> -> vector<8x64xf32>
    %338 = arith.addf %336, %337 : vector<8x64xf32>
    %339 = arith.addf %322, %338 : vector<8x64xf32>
    %cst_143 = arith.constant dense<0.000000e+00> : vector<16x64xf32>
    %340 = tpu.matmul %290, %339, %cst_143 {dimension_numbers = #tpu.dot_dimension_numbers<[1], [0], [0], [1], [0, 0, 1, 1], [], []>} : vector<16x8xf32>, vector<8x64xf32>, vector<16x64xf32> -> vector<16x64xf32>
    %341 = arith.addf %317, %340 : vector<16x64xf32>
    %342 = vector.broadcast %292 : vector<16x1xf32> to vector<16x64xf32>
    %343 = arith.addf %341, %342 : vector<16x64xf32>
    %cst_144 = arith.constant 0.000000e+00 : f32
    %344 = vector.broadcast %cst_144 : f32 to vector<16x64xf32>
    %345 = arith.maximumf %316, %344 : vector<16x64xf32>
    %cst_145 = arith.constant 0.000000e+00 : f32
    %346 = vector.broadcast %cst_145 : f32 to vector<16x64xf32>
    %347 = arith.maximumf %343, %346 : vector<16x64xf32>
    %c3 = arith.constant 3 : index
    %c0_146 = arith.constant 0 : index
    %c0_147 = arith.constant 0 : index
    %348 = vector.load %arg9[%c3, %c0_146, %c0_147] : memref<4x16x154xf32, #tpu.memory_space<vmem>>, vector<1x16x154xf32>
    %349 = vector.shape_cast %348 : vector<1x16x154xf32> to vector<16x154xf32>
    %c3_148 = arith.constant 3 : index
    %c0_149 = arith.constant 0 : index
    %c0_150 = arith.constant 0 : index
    %350 = vector.load %arg10[%c3_148, %c0_149, %c0_150] : memref<4x8x51xf32, #tpu.memory_space<vmem>>, vector<1x8x51xf32>
    %351 = vector.shape_cast %350 : vector<1x8x51xf32> to vector<8x51xf32>
    %352 = vector.extract_strided_slice %349 {offsets = [0, 0], sizes = [16, 96], strides = [1, 1]} : vector<16x154xf32> to vector<16x96xf32>
    %353 = vector.extract_strided_slice %349 {offsets = [0, 96], sizes = [16, 48], strides = [1, 1]} : vector<16x154xf32> to vector<16x48xf32>
    %354 = vector.extract_strided_slice %349 {offsets = [0, 144], sizes = [16, 8], strides = [1, 1]} : vector<16x154xf32> to vector<16x8xf32>
    %355 = vector.extract_strided_slice %349 {offsets = [0, 152], sizes = [16, 1], strides = [1, 1]} : vector<16x154xf32> to vector<16x1xf32>
    %356 = vector.extract_strided_slice %349 {offsets = [0, 153], sizes = [16, 1], strides = [1, 1]} : vector<16x154xf32> to vector<16x1xf32>
    %357 = vector.extract_strided_slice %351 {offsets = [0, 0], sizes = [8, 16], strides = [1, 1]} : vector<8x51xf32> to vector<8x16xf32>
    %358 = vector.extract_strided_slice %351 {offsets = [0, 16], sizes = [8, 16], strides = [1, 1]} : vector<8x51xf32> to vector<8x16xf32>
    %359 = vector.extract_strided_slice %351 {offsets = [0, 32], sizes = [8, 16], strides = [1, 1]} : vector<8x51xf32> to vector<8x16xf32>
    %360 = vector.extract_strided_slice %351 {offsets = [0, 48], sizes = [8, 1], strides = [1, 1]} : vector<8x51xf32> to vector<8x1xf32>
    %361 = vector.extract_strided_slice %351 {offsets = [0, 49], sizes = [8, 1], strides = [1, 1]} : vector<8x51xf32> to vector<8x1xf32>
    %362 = vector.extract_strided_slice %351 {offsets = [0, 50], sizes = [8, 1], strides = [1, 1]} : vector<8x51xf32> to vector<8x1xf32>
    %cst_151 = arith.constant 0.000000e+00 : f32
    %363 = vector.broadcast %cst_151 : f32 to vector<16x8xf32>
    %364 = vector.extract_strided_slice %345 {offsets = [0, 0], sizes = [16, 56], strides = [1, 1]} : vector<16x64xf32> to vector<16x56xf32>
    %365 = tpu.concatenate %363, %364 in 1 : vector<16x8xf32>, vector<16x56xf32> -> vector<16x64xf32>
    %cst_152 = arith.constant 0.000000e+00 : f32
    %366 = vector.broadcast %cst_152 : f32 to vector<16x8xf32>
    %367 = vector.extract_strided_slice %345 {offsets = [0, 8], sizes = [16, 56], strides = [1, 1]} : vector<16x64xf32> to vector<16x56xf32>
    %368 = tpu.concatenate %367, %366 in 1 : vector<16x56xf32>, vector<16x8xf32> -> vector<16x64xf32>
    %369 = tpu.concatenate %365, %345, %368 in 0 : vector<16x64xf32>, vector<16x64xf32>, vector<16x64xf32> -> vector<48x64xf32>
    %cst_153 = arith.constant 0.000000e+00 : f32
    %370 = vector.broadcast %cst_153 : f32 to vector<16x8xf32>
    %371 = vector.extract_strided_slice %347 {offsets = [0, 0], sizes = [16, 56], strides = [1, 1]} : vector<16x64xf32> to vector<16x56xf32>
    %372 = tpu.concatenate %370, %371 in 1 : vector<16x8xf32>, vector<16x56xf32> -> vector<16x64xf32>
    %cst_154 = arith.constant 0.000000e+00 : f32
    %373 = vector.broadcast %cst_154 : f32 to vector<16x8xf32>
    %374 = vector.extract_strided_slice %347 {offsets = [0, 8], sizes = [16, 56], strides = [1, 1]} : vector<16x64xf32> to vector<16x56xf32>
    %375 = tpu.concatenate %374, %373 in 1 : vector<16x56xf32>, vector<16x8xf32> -> vector<16x64xf32>
    %376 = tpu.concatenate %372, %347, %375 in 0 : vector<16x64xf32>, vector<16x64xf32>, vector<16x64xf32> -> vector<48x64xf32>
    %377 = tpu.concatenate %369, %376 in 0 : vector<48x64xf32>, vector<48x64xf32> -> vector<96x64xf32>
    %cst_155 = arith.constant dense<0.000000e+00> : vector<16x64xf32>
    %378 = tpu.matmul %352, %377, %cst_155 {dimension_numbers = #tpu.dot_dimension_numbers<[1], [0], [0], [1], [0, 0, 1, 1], [], []>} : vector<16x96xf32>, vector<96x64xf32>, vector<16x64xf32> -> vector<16x64xf32>
    %379 = vector.broadcast %355 : vector<16x1xf32> to vector<16x64xf32>
    %380 = arith.addf %378, %379 : vector<16x64xf32>
    %cst_156 = arith.constant dense<0.000000e+00> : vector<16x64xf32>
    %381 = tpu.matmul %353, %369, %cst_156 {dimension_numbers = #tpu.dot_dimension_numbers<[1], [0], [0], [1], [0, 0, 1, 1], [], []>} : vector<16x48xf32>, vector<48x64xf32>, vector<16x64xf32> -> vector<16x64xf32>
    %cst_157 = arith.constant dense<0.000000e+00> : vector<8x64xf32>
    %382 = tpu.matmul %357, %347, %cst_157 {dimension_numbers = #tpu.dot_dimension_numbers<[1], [0], [0], [1], [0, 0, 1, 1], [], []>} : vector<8x16xf32>, vector<16x64xf32>, vector<8x64xf32> -> vector<8x64xf32>
    %383 = vector.broadcast %360 : vector<8x1xf32> to vector<8x64xf32>
    %384 = arith.addf %382, %383 : vector<8x64xf32>
    %cst_158 = arith.constant 0.000000e+00 : f32
    %385 = vector.broadcast %cst_158 : f32 to vector<8x64xf32>
    %386 = arith.maximumf %384, %385 : vector<8x64xf32>
    %cst_159 = arith.constant dense<0.000000e+00> : vector<8x40xf32>
    %387 = tpu.matmul %386, %147, %cst_159 {dimension_numbers = #tpu.dot_dimension_numbers<[1], [0], [0], [1], [0, 0, 1, 1], [], []>} : vector<8x64xf32>, vector<64x40xf32>, vector<8x40xf32> -> vector<8x40xf32>
    %cst_160 = arith.constant dense<0.000000e+00> : vector<8x40xf32>
    %388 = tpu.matmul %386, %149, %cst_160 {dimension_numbers = #tpu.dot_dimension_numbers<[1], [0], [0], [1], [0, 0, 1, 1], [], []>} : vector<8x64xf32>, vector<64x40xf32>, vector<8x40xf32> -> vector<8x40xf32>
    %389 = tpu.concatenate %387, %388 in 0 : vector<8x40xf32>, vector<8x40xf32> -> vector<16x40xf32>
    %cst_161 = arith.constant dense<0.000000e+00> : vector<8x40xf32>
    %390 = tpu.matmul %358, %389, %cst_161 {dimension_numbers = #tpu.dot_dimension_numbers<[1], [0], [0], [1], [0, 0, 1, 1], [], []>} : vector<8x16xf32>, vector<16x40xf32>, vector<8x40xf32> -> vector<8x40xf32>
    %391 = vector.broadcast %361 : vector<8x1xf32> to vector<8x40xf32>
    %392 = arith.addf %390, %391 : vector<8x40xf32>
    %cst_162 = arith.constant 0.000000e+00 : f32
    %393 = vector.broadcast %cst_162 : f32 to vector<8x40xf32>
    %394 = arith.maximumf %392, %393 : vector<8x40xf32>
    %cst_163 = arith.constant dense<0.000000e+00> : vector<8x40xf32>
    %395 = tpu.matmul %359, %389, %cst_163 {dimension_numbers = #tpu.dot_dimension_numbers<[1], [0], [0], [1], [0, 0, 1, 1], [], []>} : vector<8x16xf32>, vector<16x40xf32>, vector<8x40xf32> -> vector<8x40xf32>
    %396 = vector.broadcast %362 : vector<8x1xf32> to vector<8x40xf32>
    %397 = arith.addf %395, %396 : vector<8x40xf32>
    %cst_164 = arith.constant 0.000000e+00 : f32
    %398 = vector.broadcast %cst_164 : f32 to vector<8x40xf32>
    %399 = arith.maximumf %397, %398 : vector<8x40xf32>
    %cst_165 = arith.constant dense<0.000000e+00> : vector<8x64xf32>
    %400 = tpu.matmul %394, %151, %cst_165 {dimension_numbers = #tpu.dot_dimension_numbers<[1], [0], [0], [1], [0, 0, 1, 1], [], []>} : vector<8x40xf32>, vector<40x64xf32>, vector<8x64xf32> -> vector<8x64xf32>
    %cst_166 = arith.constant dense<0.000000e+00> : vector<8x64xf32>
    %401 = tpu.matmul %399, %153, %cst_166 {dimension_numbers = #tpu.dot_dimension_numbers<[1], [0], [0], [1], [0, 0, 1, 1], [], []>} : vector<8x40xf32>, vector<40x64xf32>, vector<8x64xf32> -> vector<8x64xf32>
    %402 = arith.addf %400, %401 : vector<8x64xf32>
    %403 = arith.addf %386, %402 : vector<8x64xf32>
    %cst_167 = arith.constant dense<0.000000e+00> : vector<16x64xf32>
    %404 = tpu.matmul %354, %403, %cst_167 {dimension_numbers = #tpu.dot_dimension_numbers<[1], [0], [0], [1], [0, 0, 1, 1], [], []>} : vector<16x8xf32>, vector<8x64xf32>, vector<16x64xf32> -> vector<16x64xf32>
    %405 = arith.addf %381, %404 : vector<16x64xf32>
    %406 = vector.broadcast %356 : vector<16x1xf32> to vector<16x64xf32>
    %407 = arith.addf %405, %406 : vector<16x64xf32>
    %408 = arith.addf %380, %280 : vector<16x64xf32>
    %cst_168 = arith.constant 0.000000e+00 : f32
    %409 = vector.broadcast %cst_168 : f32 to vector<16x64xf32>
    %410 = arith.maximumf %408, %409 : vector<16x64xf32>
    %411 = arith.addf %407, %283 : vector<16x64xf32>
    %cst_169 = arith.constant 0.000000e+00 : f32
    %412 = vector.broadcast %cst_169 : f32 to vector<16x64xf32>
    %413 = arith.maximumf %411, %412 : vector<16x64xf32>
    %414 = tpu.concatenate %410, %413 in 0 : vector<16x64xf32>, vector<16x64xf32> -> vector<32x64xf32>
    %415 = vector.extract_strided_slice %414 {offsets = [0, 0], sizes = [32, 8], strides = [1, 1]} : vector<32x64xf32> to vector<32x8xf32>
    %416 = vector.extract_strided_slice %414 {offsets = [0, 8], sizes = [32, 8], strides = [1, 1]} : vector<32x64xf32> to vector<32x8xf32>
    %417 = vector.extract_strided_slice %414 {offsets = [0, 16], sizes = [32, 8], strides = [1, 1]} : vector<32x64xf32> to vector<32x8xf32>
    %418 = vector.extract_strided_slice %414 {offsets = [0, 24], sizes = [32, 8], strides = [1, 1]} : vector<32x64xf32> to vector<32x8xf32>
    %419 = vector.extract_strided_slice %414 {offsets = [0, 32], sizes = [32, 8], strides = [1, 1]} : vector<32x64xf32> to vector<32x8xf32>
    %420 = vector.extract_strided_slice %414 {offsets = [0, 40], sizes = [32, 8], strides = [1, 1]} : vector<32x64xf32> to vector<32x8xf32>
    %421 = vector.extract_strided_slice %414 {offsets = [0, 48], sizes = [32, 8], strides = [1, 1]} : vector<32x64xf32> to vector<32x8xf32>
    %422 = vector.extract_strided_slice %414 {offsets = [0, 56], sizes = [32, 8], strides = [1, 1]} : vector<32x64xf32> to vector<32x8xf32>
    %423 = tpu.concatenate %415, %416, %417, %418, %419, %420, %421, %422 in 0 : vector<32x8xf32>, vector<32x8xf32>, vector<32x8xf32>, vector<32x8xf32>, vector<32x8xf32>, vector<32x8xf32>, vector<32x8xf32>, vector<32x8xf32> -> vector<256x8xf32>
    %c0_170 = arith.constant 0 : index
    %c0_171 = arith.constant 0 : index
    %424 = vector.load %arg13[%c0_170, %c0_171] : memref<8x256xf32, #tpu.memory_space<vmem>>, vector<8x256xf32>
    %cst_172 = arith.constant dense<0.000000e+00> : vector<8x8xf32>
    %425 = tpu.matmul %424, %423, %cst_172 {dimension_numbers = #tpu.dot_dimension_numbers<[1], [0], [0], [1], [0, 0, 1, 1], [], []>} : vector<8x256xf32>, vector<256x8xf32>, vector<8x8xf32> -> vector<8x8xf32>
    %c0_173 = arith.constant 0 : index
    %c0_174 = arith.constant 0 : index
    %426 = vector.load %arg14[%c0_173, %c0_174] : memref<8x1xf32, #tpu.memory_space<vmem>>, vector<8x1xf32>
    %427 = vector.broadcast %426 : vector<8x1xf32> to vector<8x8xf32>
    %428 = arith.addf %425, %427 : vector<8x8xf32>
    %429 = vector.broadcast %72 : vector<1x8xf32> to vector<8x8xf32>
    %430 = arith.addf %428, %429 : vector<8x8xf32>
    %431 = vector.broadcast %2 : vector<1x8xf32> to vector<8x8xf32>
    %432 = arith.subf %430, %431 : vector<8x8xf32>
    %cst_175 = arith.constant 1.000000e-10 : f32
    %433 = vector.broadcast %cst_175 : f32 to vector<1x8xf32>
    %434 = arith.addf %1, %433 : vector<1x8xf32>
    %435 = vector.broadcast %434 : vector<1x8xf32> to vector<8x8xf32>
    %436 = arith.divf %432, %435 : vector<8x8xf32>
    %437 = vector.broadcast %17 : vector<1x8xf32> to vector<8x8xf32>
    %438 = arith.mulf %436, %437 : vector<8x8xf32>
    %439 = vector.broadcast %3 : vector<1x8xf32> to vector<8x8xf32>
    %440 = arith.addf %438, %439 : vector<8x8xf32>
    %c0_176 = arith.constant 0 : index
    %c0_177 = arith.constant 0 : index
    %441 = vector.load %arg15[%c0_176, %c0_177] : memref<8x8xf32, #tpu.memory_space<vmem>>, vector<8x8xf32>
    tpu.vector_store %arg15[%c0_176, %c0_177], %440 {strides = array<i32>} : memref<8x8xf32, #tpu.memory_space<vmem>>, vector<8x8xf32>,
    return
  }
  func.func @transform_0(%arg0: i32) -> (i32, i32) {
    %c0_i32 = arith.constant 0 : i32
    %c0_i32_0 = arith.constant 0 : i32
    %c0_i32_1 = arith.constant 0 : i32
    return %c0_i32, %c0_i32_0 : i32, i32
  }
  func.func @transform_1(%arg0: i32) -> (i32, i32) {
    %c0_i32 = arith.constant 0 : i32
    %c0_i32_0 = arith.constant 0 : i32
    %c0_i32_1 = arith.constant 0 : i32
    return %c0_i32, %c0_i32_0 : i32, i32
  }
  func.func @transform_2(%arg0: i32) -> (i32, i32, i32) {
    %c0_i32 = arith.constant 0 : i32
    %c0_i32_0 = arith.constant 0 : i32
    %c0_i32_1 = arith.constant 0 : i32
    %c0_i32_2 = arith.constant 0 : i32
    return %c0_i32, %c0_i32_0, %c0_i32_1 : i32, i32, i32
  }
  func.func @transform_3(%arg0: i32) -> i32 {
    %c0_i32 = arith.constant 0 : i32
    %c0_i32_0 = arith.constant 0 : i32
    return %c0_i32 : i32
  }
  func.func @transform_4(%arg0: i32) -> i32 {
    %c0_i32 = arith.constant 0 : i32
    %c0_i32_0 = arith.constant 0 : i32
    return %c0_i32 : i32
  }
  func.func @transform_5(%arg0: i32) -> (i32, i32, i32) {
    %c0_i32 = arith.constant 0 : i32
    %c0_i32_0 = arith.constant 0 : i32
    %c0_i32_1 = arith.constant 0 : i32
    %c0_i32_2 = arith.constant 0 : i32
    return %c0_i32, %c0_i32_0, %c0_i32_1 : i32, i32, i32
  }
  func.func @transform_6(%arg0: i32) -> (i32, i32, i32) {
    %c0_i32 = arith.constant 0 : i32
    %c0_i32_0 = arith.constant 0 : i32
    %c0_i32_1 = arith.constant 0 : i32
    %c0_i32_2 = arith.constant 0 : i32
    return %c0_i32, %c0_i32_0, %c0_i32_1 : i32, i32, i32
  }
  func.func @transform_7(%arg0: i32) -> (i32, i32) {
    %c0_i32 = arith.constant 0 : i32
    %c0_i32_0 = arith.constant 0 : i32
    %c0_i32_1 = arith.constant 0 : i32
    return %c0_i32, %c0_i32_0 : i32, i32
  }
  func.func @transform_8(%arg0: i32) -> (i32, i32, i32) {
    %c0_i32 = arith.constant 0 : i32
    %c0_i32_0 = arith.constant 0 : i32
    %c0_i32_1 = arith.constant 0 : i32
    %c0_i32_2 = arith.constant 0 : i32
    return %c0_i32, %c0_i32_0, %c0_i32_1 : i32, i32, i32
  }
  func.func @transform_9(%arg0: i32) -> (i32, i32, i32) {
    %c0_i32 = arith.constant 0 : i32
    %c0_i32_0 = arith.constant 0 : i32
    %c0_i32_1 = arith.constant 0 : i32
    %c0_i32_2 = arith.constant 0 : i32
    return %c0_i32, %c0_i32_0, %c0_i32_1 : i32, i32, i32
  }
  func.func @transform_10(%arg0: i32) -> (i32, i32, i32) {
    %c0_i32 = arith.constant 0 : i32
    %c0_i32_0 = arith.constant 0 : i32
    %c0_i32_1 = arith.constant 0 : i32
    %c0_i32_2 = arith.constant 0 : i32
    return %c0_i32, %c0_i32_0, %c0_i32_1 : i32, i32, i32
  }
  func.func @transform_11(%arg0: i32) -> (i32, i32, i32) {
    %c0_i32 = arith.constant 0 : i32
    %c0_i32_0 = arith.constant 0 : i32
    %c0_i32_1 = arith.constant 0 : i32
    %c0_i32_2 = arith.constant 0 : i32
    return %c0_i32, %c0_i32_0, %c0_i32_1 : i32, i32, i32
  }
  func.func @transform_12(%arg0: i32) -> (i32, i32) {
    %c0_i32 = arith.constant 0 : i32
    %c0_i32_0 = arith.constant 0 : i32
    %c0_i32_1 = arith.constant 0 : i32
    return %c0_i32, %c0_i32_0 : i32, i32
  }
  func.func @transform_13(%arg0: i32) -> (i32, i32) {
    %c0_i32 = arith.constant 0 : i32
    %c0_i32_0 = arith.constant 0 : i32
    %c0_i32_1 = arith.constant 0 : i32
    return %c0_i32, %c0_i32_0 : i32, i32
  }
  func.func @transform_14(%arg0: i32) -> (i32, i32) {
    %c0_i32 = arith.constant 0 : i32
    %c0_i32_0 = arith.constant 0 : i32
    %c0_i32_1 = arith.constant 0 : i32
    return %c0_i32, %c0_i32_0 : i32, i32
  }
}

</mosaic_0001>

<llo_original>
// kernel: micn_forward.1
$region0: #{micn_forward.1}
  #allocation0 [shape = 'u32[]', space=smem, size = 0x4, offset = 0x4, fixed_abs, tag = 'smem constant byte address 0x4 - core index']
  #allocation1 [shape = 'u32[144,128]{1,0:T(1,128)}', space=vmem, size = 0x12000, scoped, tag = 'internal scratch']
  %s0 = inlined_call_operand.vmem [shape: f32[16,8], index: 0, kind: input, shape index: {}]
  %s1 = inlined_call_operand.vmem [shape: f32[2,8], index: 1, kind: input, shape index: {}]
  %s2 = inlined_call_operand.vmem [shape: f32[3,16,16], index: 2, kind: input, shape index: {}]
  %s3 = inlined_call_operand.vmem [shape: f32[3], index: 3, kind: input, shape index: {}]
  %s4 = inlined_call_operand.vmem [shape: f32[3], index: 4, kind: input, shape index: {}]
  %s5 = inlined_call_operand.vmem [shape: f32[2,7,16], index: 5, kind: input, shape index: {}]
  %s6 = inlined_call_operand.vmem [shape: f32[2,256,7], index: 6, kind: input, shape index: {}]
  %s7 = inlined_call_operand.vmem [shape: f32[32,64], index: 7, kind: input, shape index: {}]
  %s8 = inlined_call_operand.vmem [shape: f32[4,16,154], index: 8, kind: input, shape index: {}]
  %s9 = inlined_call_operand.vmem [shape: f32[4,8,51], index: 9, kind: input, shape index: {}]
  %s10 = inlined_call_operand.vmem [shape: f32[2,64,40], index: 10, kind: input, shape index: {}]
  %s11 = inlined_call_operand.vmem [shape: f32[2,40,64], index: 11, kind: input, shape index: {}]
  %s12 = inlined_call_operand.vmem [shape: f32[8,256], index: 12, kind: input, shape index: {}]
  %s13 = inlined_call_operand.vmem [shape: f32[8,1], index: 13, kind: input, shape index: {}]
  %s14 = inlined_call_operand.vmem [shape: f32[8,8], index: 14, kind: output, shape index: {}]
  %s15 = sld [smem:[#allocation0]]
  $region74: #{micn_forward.1} parent=0
    _
  %s17 = ssub.s32 1, %s15
  %s18 = scalar_select 0, %s17, %s15
  $region1: #{micn_forward.1} parent=0
    #allocation2 [shape = 'u8[512]{0}', space=smem, size = 0x200, scoped, tag = 'input window, operand 3, single buffered']
    #allocation3 [shape = 's32[1]{0}', space=sflag, size = 0x4, scoped, tag = 'scoped memory for micn_forward.1']
    #allocation4 [shape = 'u8[512]{0}', space=smem, size = 0x200, scoped, tag = 'input window, operand 4, single buffered']
    #allocation5 [shape = 's32[1]{0}', space=sflag, size = 0x4, scoped, tag = 'scoped memory for micn_forward.1']
    %19 = vsyncpa [#allocation3], 0
    %20 = vsyncpa [#allocation5], 0
    // Predicated region
    $region2: #{micn_forward.1} parent=1 // pred_check
      _
    $region3: #{micn_forward.1} parent=1 // pred_check_branch
      %22 = sbr.rel (0) target = $region5
    $region4: #{micn_forward.1} parent=1 // pred_region
      _
    $region5: #{micn_forward.1} parent=1 // pred_fallthru
      _
    // Predicated region
    $region6: #{micn_forward.1} parent=1 // pred_check
      _
    $region7: #{micn_forward.1} parent=1 // pred_check_branch
      %24 = sbr.rel (0) target = $region9
    $region8: #{micn_forward.1} parent=1 // pred_region
      _
    $region9: #{micn_forward.1} parent=1 // pred_fallthru
      _
    // Predicated region
    $region10: #{micn_forward.1} parent=1 // pred_check
      _
    $region11: #{micn_forward.1} parent=1 // pred_check_branch
      %26 = sbr.rel (0) target = $region13
    $region12: #{micn_forward.1} parent=1 // pred_region
      _
    $region13: #{micn_forward.1} parent=1 // pred_fallthru
      _
    // Predicated region
    $region14: #{micn_forward.1} parent=1 // pred_check
      _
    $region15: #{micn_forward.1} parent=1 // pred_check_branch
      %28 = sbr.rel (0) target = $region17
    $region16: #{micn_forward.1} parent=1 // pred_region
      %s30 = ssub.s32 16, 16
      %31 = vsyncadd [#allocation3], %s30
      %s33 = sshll.u32 %s3, 4
      %s34 = int_to_ptr.vmem [resolvable:$true] %s33
      %36 = dma.vmem_to_smem %s34, 16, [#allocation2], [#allocation3]
    $region17: #{micn_forward.1} parent=1 // pred_fallthru
      _
    // Predicated region
    $region18: #{micn_forward.1} parent=1 // pred_check
      _
    $region19: #{micn_forward.1} parent=1 // pred_check_branch
      %38 = sbr.rel (0) target = $region21
    $region20: #{micn_forward.1} parent=1 // pred_region
      %s40 = ssub.s32 16, 16
      %41 = vsyncadd [#allocation5], %s40
      %s43 = sshll.u32 %s4, 4
      %s44 = int_to_ptr.vmem [resolvable:$true] %s43
      %46 = dma.vmem_to_smem %s44, 16, [#allocation4], [#allocation5]
    $region21: #{micn_forward.1} parent=1 // pred_fallthru
      _
    // Predicated region
    $region22: #{micn_forward.1} parent=1 // pred_check
      _
    $region23: #{micn_forward.1} parent=1 // pred_check_branch
      %48 = sbr.rel (0) target = $region25
    $region24: #{micn_forward.1} parent=1 // pred_region
      _
    $region25: #{micn_forward.1} parent=1 // pred_fallthru
      _
    // Predicated region
    $region26: #{micn_forward.1} parent=1 // pred_check
      _
    $region27: #{micn_forward.1} parent=1 // pred_check_branch
      %50 = sbr.rel (0) target = $region29
    $region28: #{micn_forward.1} parent=1 // pred_region
      _
    $region29: #{micn_forward.1} parent=1 // pred_fallthru
      _
    // Predicated region
    $region30: #{micn_forward.1} parent=1 // pred_check
      _
    $region31: #{micn_forward.1} parent=1 // pred_check_branch
      %52 = sbr.rel (0) target = $region33
    $region32: #{micn_forward.1} parent=1 // pred_region
      _
    $region33: #{micn_forward.1} parent=1 // pred_fallthru
      _
    // Predicated region
    $region34: #{micn_forward.1} parent=1 // pred_check
      _
    $region35: #{micn_forward.1} parent=1 // pred_check_branch
      %54 = sbr.rel (0) target = $region37
    $region36: #{micn_forward.1} parent=1 // pred_region
      _
    $region37: #{micn_forward.1} parent=1 // pred_fallthru
      _
    // Predicated region
    $region38: #{micn_forward.1} parent=1 // pred_check
      _
    $region39: #{micn_forward.1} parent=1 // pred_check_branch
      %56 = sbr.rel (0) target = $region41
    $region40: #{micn_forward.1} parent=1 // pred_region
      _
    $region41: #{micn_forward.1} parent=1 // pred_fallthru
      _
    // Predicated region
    $region42: #{micn_forward.1} parent=1 // pred_check
      _
    $region43: #{micn_forward.1} parent=1 // pred_check_branch
      %58 = sbr.rel (0) target = $region45
    $region44: #{micn_forward.1} parent=1 // pred_region
      _
    $region45: #{micn_forward.1} parent=1 // pred_fallthru
      _
    // Predicated region
    $region46: #{micn_forward.1} parent=1 // pred_check
      _
    $region47: #{micn_forward.1} parent=1 // pred_check_branch
      %60 = sbr.rel (0) target = $region49
    $region48: #{micn_forward.1} parent=1 // pred_region
      _
    $region49: #{micn_forward.1} parent=1 // pred_fallthru
      _
    // Predicated region
    $region50: #{micn_forward.1} parent=1 // pred_check
      _
    $region51: #{micn_forward.1} parent=1 // pred_check_branch
      %62 = sbr.rel (0) target = $region53
    $region52: #{micn_forward.1} parent=1 // pred_region
      _
    $region53: #{micn_forward.1} parent=1 // pred_fallthru
      _
    // Predicated region
    $region54: #{micn_forward.1} parent=1 // pred_check
      _
    $region55: #{micn_forward.1} parent=1 // pred_check_branch
      %64 = sbr.rel (0) target = $region57
    $region56: #{micn_forward.1} parent=1 // pred_region
      _
    $region57: #{micn_forward.1} parent=1 // pred_fallthru
      _
    // Predicated region
    $region58: #{micn_forward.1} parent=1 // pred_check
      _
    $region59: #{micn_forward.1} parent=1 // pred_check_branch
      %66 = sbr.rel (0) target = $region61
    $region60: #{micn_forward.1} parent=1 // pred_region
      %67 = dma.done [#allocation3], 16
    $region61: #{micn_forward.1} parent=1 // pred_fallthru
      _
    // Predicated region
    $region62: #{micn_forward.1} parent=1 // pred_check
      _
    $region63: #{micn_forward.1} parent=1 // pred_check_branch
      %69 = sbr.rel (0) target = $region65
    $region64: #{micn_forward.1} parent=1 // pred_region
      %70 = dma.done [#allocation5], 16
    $region65: #{micn_forward.1} parent=1 // pred_fallthru
      _
    %71 = sfence
    %v72 = vld [vmem:[%s0] sm:$0xff]
    %v73 = vld [vmem:[%s0 + $0x8] sm:$0xff]
    %v74 = vld [vmem:[%s1] sm:$0x1]
    %v75 = vld [vmem:[%s1 + $0x1] sm:$0x1]
    %vm76 = vcmask 64512
    %v77 = vsel %vm76, %v72, 0.0
    %v78 = vsel %vm76, %v73, 0.0
    %v79 = vadd.f32 %v77, %v78
    %v80 = vrot.slane %v79, 4
    %v81 = vadd.f32 %v79, %v80
    %v82 = vrot.slane %v81, 2
    %v83 = vadd.f32 %v81, %v82
    %v84 = vrot.slane %v83, 1
    %v85 = vadd.f32 %v83, %v84
    %v86 = vrcp.pop 16.0
    %v87 = vmul.f32 %v85, %v86
    %v88 = vsub.f32 %v72, %v87
    %v89 = vsub.f32 %v73, %v87
    %v90 = vmul.f32 %v88, %v88
    %v91 = vmul.f32 %v89, %v89
    %v92 = vsel %vm76, %v90, 0.0
    %v93 = vsel %vm76, %v91, 0.0
    %v94 = vadd.f32 %v92, %v93
    %v95 = vrot.slane %v94, 4
    %v96 = vadd.f32 %v94, %v95
    %v97 = vrot.slane %v96, 2
    %v98 = vadd.f32 %v96, %v97
    %v99 = vrot.slane %v98, 1
    %v100 = vadd.f32 %v98, %v99
    %v101 = vmul.f32 %v100, %v86
    %v102 = vadd.f32 %v101, 1e-05
    %v103 = vrsqrt.pop %v102
    %v104 = vmul.f32 %v102, %v103
    %vm105 = vcmp.eq.f32.partialorder %v102, inf
    %v106 = vsel %vm105, %v102, %v104
    %vm107 = vcmp.eq.f32.partialorder %v102, 0.0
    %v108 = vand.u32 %v102, 2147483648
    %v109 = vsel %vm107, %v108, %v106
    %v110 = vlaneseq
    %v111 = vshrl.u32 %v110, 7
    %v112 = vsub.s32 7, %v111
    %v113 = vrot.slane %v73, %v112
    %v114 = vsub.f32 %v72, %v113
    %v115 = vsub.f32 %v73, %v113
    %v116 = vrcp.pop %v109
    %v117 = vmul.f32 %v114, %v116
    %v118 = vmul.f32 %v115, %v116
    %v119 = vlaneseq
    %v120 = vshrl.u32 %v119, 7
    %v121 = vsub.s32 0, %v120
    %v122 = vrot.slane %v74, %v121
    %v123 = vmul.f32 %v117, %v122
    %v124 = vmul.f32 %v118, %v122
    %v125 = vlaneseq
    %v126 = vshrl.u32 %v125, 7
    %v127 = vsub.s32 0, %v126
    %v128 = vrot.slane %v75, %v127
    %v129 = vadd.f32 %v123, %v128
    %v130 = vadd.f32 %v124, %v128
    %s131 = sld [smem:[#allocation2]]
    %v132 = vstv %s131
    %v133 = vmul.f32 %v129, %v132
    %v134 = vmul.f32 %v130, %v132
    %s135 = sld [smem:[#allocation4]]
    %v136 = vstv %s135
    %v137 = vadd.f32 %v133, %v136
    %v138 = vadd.f32 %v134, %v136
    %s139 = sld [smem:[#allocation2 + $0x1]]
    %v140 = vstv %s139
    %v141 = vmul.f32 %v129, %v140
    %v142 = vmul.f32 %v130, %v140
    %s143 = sld [smem:[#allocation4 + $0x1]]
    %v144 = vstv %s143
    %v145 = vadd.f32 %v141, %v144
    %v146 = vadd.f32 %v142, %v144
    %s147 = sld [smem:[#allocation2 + $0x2]]
    %v148 = vstv %s147
    %v149 = vmul.f32 %v129, %v148
    %v150 = vmul.f32 %v130, %v148
    %s151 = sld [smem:[#allocation4 + $0x2]]
    %v152 = vstv %s151
    %v153 = vadd.f32 %v149, %v152
    %v154 = vadd.f32 %v150, %v152
    %v155 = vmax.f32 %v137, %v145
    %v156 = vmax.f32 %v138, %v146
    %v157 = vmax.f32 %v155, %v153
    %v158 = vmax.f32 %v156, %v154
    %v159 = vsub.f32 %v137, %v157
    %v160 = vsub.f32 %v138, %v158
    %v161 = vmul.f32 %v159, 1.442695
    %v162 = vpow.pop %v161
    %v163 = vmul.f32 %v160, 1.442695
    %v164 = vpow.pop %v163
    %v165 = vsub.f32 %v145, %v157
    %v166 = vsub.f32 %v146, %v158
    %v167 = vmul.f32 %v165, 1.442695
    %v168 = vpow.pop %v167
    %v169 = vmul.f32 %v166, 1.442695
    %v170 = vpow.pop %v169
    %v171 = vsub.f32 %v153, %v157
    %v172 = vsub.f32 %v154, %v158
    %v173 = vmul.f32 %v171, 1.442695
    %v174 = vpow.pop %v173
    %v175 = vmul.f32 %v172, 1.442695
    %v176 = vpow.pop %v175
    %v177 = vadd.f32 %v162, %v168
    %v178 = vadd.f32 %v164, %v170
    %v179 = vadd.f32 %v177, %v174
    %v180 = vadd.f32 %v178, %v176
    %v181 = vld [vmem:[%s2] sm:$0xff]
    %v182 = vld [vmem:[%s2 + $0x8] sm:$0xff]
    %vm183 = vcmask 130048
    %v185 = vsel %vm183, %v181, 0
    %v188 = vsel %vm183, %v182, 0
    %190 = vmatprep.subr.mxu0 0.0
    %191 = vmatpush1.msra.mxu0 0.0
    %192 = vmatprep.subr.mxu0 0.0
    %193 = vmatpush1.msra.mxu0 0.0
    %194 = vmatprep.subr.mxu0 0.0
    %195 = vmatpush1.msra.mxu0 0.0
    %196 = vmatprep.subr.mxu0 0.0
    %197 = vmatpush1.msra.mxu0 0.0
    %198 = vmatprep.subr.mxu0 0.0
    %199 = vmatpush1.msra.mxu0 0.0
    %200 = vmatprep.subr.mxu0 0.0
    %201 = vmatpush1.msra.mxu0 0.0
    %202 = vmatprep.subr.mxu0 0.0
    %203 = vmatpush1.msra.mxu0 0.0
    %204 = vmatprep.subr.mxu0 0.0
    %205 = vmatpush1.msra.mxu0 0.0
    %206 = vmatprep.subr.mxu0 0.0
    %207 = vmatpush1.msra.mxu0 0.0
    %208 = vmatprep.subr.mxu0 0.0
    %209 = vmatpush1.msra.mxu0 0.0
    %210 = vmatprep.subr.mxu0 0.0
    %211 = vmatpush1.msra.mxu0 0.0
    %212 = vmatprep.subr.mxu0 0.0
    %213 = vmatpush1.msra.mxu0 0.0
    %214 = vmatprep.subr.mxu0 0.0
    %215 = vmatpush1.msra.mxu0 0.0
    %216 = vmatprep.subr.mxu0 0.0
    %217 = vmatpush1.msra.mxu0 0.0
    %218 = vmatprep.subr.mxu0 0.0
    %219 = vmatpush1.msra.mxu0 %v130
    %220 = vmatprep.subr.mxu0 0.0
    %221 = vmatpush1.msra.mxu0 %v129
    %222 = vmatprep.subr.mxu0 0.0
    %223 = vmatpush2.msra.mxu0 0.0
    %224 = vmatprep.subr.mxu0 0.0
    %225 = vmatpush2.msra.mxu0 0.0
    %226 = vmatprep.subr.mxu0 0.0
    %227 = vmatpush2.msra.mxu0 0.0
    %228 = vmatprep.subr.mxu0 0.0
    %229 = vmatpush2.msra.mxu0 0.0
    %230 = vmatprep.subr.mxu0 0.0
    %231 = vmatpush2.msra.mxu0 0.0
    %232 = vmatprep.subr.mxu0 0.0
    %233 = vmatpush2.msra.mxu0 0.0
    %234 = vmatprep.subr.mxu0 0.0
    %235 = vmatpush2.msra.mxu0 0.0
    %236 = vmatprep.subr.mxu0 0.0
    %237 = vmatpush2.msra.mxu0 0.0
    %238 = vmatprep.subr.mxu0 0.0
    %239 = vmatpush2.msra.mxu0 0.0
    %240 = vmatprep.subr.mxu0 0.0
    %241 = vmatpush2.msra.mxu0 0.0
    %242 = vmatprep.subr.mxu0 0.0
    %243 = vmatpush2.msra.mxu0 0.0
    %244 = vmatprep.subr.mxu0 0.0
    %245 = vmatpush2.msra.mxu0 0.0
    %246 = vmatprep.subr.mxu0 0.0
    %247 = vmatpush2.msra.mxu0 0.0
    %248 = vmatprep.subr.mxu0 0.0
    %249 = vmatpush2.msra.mxu0 0.0
    %250 = vmatprep.subr.mxu0 0.0
    %251 = vmatpush2.msra.mxu0 0.0
    %252 = vmatprep.subr.mxu0 0.0
    %253 = vmatpush2.msra.mxu0 0.0
    %254 = vmatprep.mubr.f32.mxu0 0.0
    %255 = vmatmul.mubr.f32.gmra.mxu0 %v185
    %v256 = vpop.f32.mrf.mxu0
    %v257 = vadd.f32 0.0, %v256
    %v258 = vpop.f32.mrf.mxu0
    %259 = vmatprep.mubr.f32.mxu0 0.0
    %260 = vmatmul.mubr.f32.gmra.mxu0 %v188
    %v261 = vpop.f32.mrf.mxu0
    %v262 = vadd.f32 0.0, %v261
    %v263 = vpop.f32.mrf.mxu0
    %264 = vdwg.mxu0
    %v265 = vmul.f32 %v257, %v162
    %v266 = vmul.f32 %v262, %v164
    %s267 = scalar_lea.vmem %s2, 16
    %v268 = vld [vmem:[%s267] sm:$0xff]
    %v269 = vld [vmem:[%s267 + $0x8] sm:$0xff]
    %v271 = vsel %vm183, %v268, 0
    %v274 = vsel %vm183, %v269, 0
    %276 = vmatprep.subr.mxu0 0.0
    %277 = vmatpush1.msra.mxu0 0.0
    %278 = vmatprep.subr.mxu0 0.0
    %279 = vmatpush1.msra.mxu0 0.0
    %280 = vmatprep.subr.mxu0 0.0
    %281 = vmatpush1.msra.mxu0 0.0
    %282 = vmatprep.subr.mxu0 0.0
    %283 = vmatpush1.msra.mxu0 0.0
    %284 = vmatprep.subr.mxu0 0.0
    %285 = vmatpush1.msra.mxu0 0.0
    %286 = vmatprep.subr.mxu0 0.0
    %287 = vmatpush1.msra.mxu0 0.0
    %288 = vmatprep.subr.mxu0 0.0
    %289 = vmatpush1.msra.mxu0 0.0
    %290 = vmatprep.subr.mxu0 0.0
    %291 = vmatpush1.msra.mxu0 0.0
    %292 = vmatprep.subr.mxu0 0.0
    %293 = vmatpush1.msra.mxu0 0.0
    %294 = vmatprep.subr.mxu0 0.0
    %295 = vmatpush1.msra.mxu0 0.0
    %296 = vmatprep.subr.mxu0 0.0
    %297 = vmatpush1.msra.mxu0 0.0
    %298 = vmatprep.subr.mxu0 0.0
    %299 = vmatpush1.msra.mxu0 0.0
    %300 = vmatprep.subr.mxu0 0.0
    %301 = vmatpush1.msra.mxu0 0.0
    %302 = vmatprep.subr.mxu0 0.0
    %303 = vmatpush1.msra.mxu0 0.0
    %304 = vmatprep.subr.mxu0 0.0
    %305 = vmatpush1.msra.mxu0 %v130
    %306 = vmatprep.subr.mxu0 0.0
    %307 = vmatpush1.msra.mxu0 %v129
    %308 = vmatprep.subr.mxu0 0.0
    %309 = vmatpush2.msra.mxu0 0.0
    %310 = vmatprep.subr.mxu0 0.0
    %311 = vmatpush2.msra.mxu0 0.0
    %312 = vmatprep.subr.mxu0 0.0
    %313 = vmatpush2.msra.mxu0 0.0
    %314 = vmatprep.subr.mxu0 0.0
    %315 = vmatpush2.msra.mxu0 0.0
    %316 = vmatprep.subr.mxu0 0.0
    %317 = vmatpush2.msra.mxu0 0.0
    %318 = vmatprep.subr.mxu0 0.0
    %319 = vmatpush2.msra.mxu0 0.0
    %320 = vmatprep.subr.mxu0 0.0
    %321 = vmatpush2.msra.mxu0 0.0
    %322 = vmatprep.subr.mxu0 0.0
    %323 = vmatpush2.msra.mxu0 0.0
    %324 = vmatprep.subr.mxu0 0.0
    %325 = vmatpush2.msra.mxu0 0.0
    %326 = vmatprep.subr.mxu0 0.0
    %327 = vmatpush2.msra.mxu0 0.0
    %328 = vmatprep.subr.mxu0 0.0
    %329 = vmatpush2.msra.mxu0 0.0
    %330 = vmatprep.subr.mxu0 0.0
    %331 = vmatpush2.msra.mxu0 0.0
    %332 = vmatprep.subr.mxu0 0.0
    %333 = vmatpush2.msra.mxu0 0.0
    %334 = vmatprep.subr.mxu0 0.0
    %335 = vmatpush2.msra.mxu0 0.0
    %336 = vmatprep.subr.mxu0 0.0
    %337 = vmatpush2.msra.mxu0 0.0
    %338 = vmatprep.subr.mxu0 0.0
    %339 = vmatpush2.msra.mxu0 0.0
    %340 = vmatprep.mubr.f32.mxu0 0.0
    %341 = vmatmul.mubr.f32.gmra.mxu0 %v271
    %v342 = vpop.f32.mrf.mxu0
    %v343 = vadd.f32 0.0, %v342
    %v344 = vpop.f32.mrf.mxu0
    %345 = vmatprep.mubr.f32.mxu0 0.0
    %346 = vmatmul.mubr.f32.gmra.mxu0 %v274
    %v347 = vpop.f32.mrf.mxu0
    %v348 = vadd.f32 0.0, %v347
    %v349 = vpop.f32.mrf.mxu0
    %350 = vdwg.mxu0
    %v351 = vmul.f32 %v343, %v168
    %v352 = vmul.f32 %v348, %v170
    %v353 = vadd.f32 %v265, %v351
    %v354 = vadd.f32 %v266, %v352
    %s355 = scalar_lea.vmem %s2, 32
    %v356 = vld [vmem:[%s355] sm:$0xff]
    %v357 = vld [vmem:[%s355 + $0x8] sm:$0xff]
    %v359 = vsel %vm183, %v356, 0
    %v362 = vsel %vm183, %v357, 0
    %364 = vmatprep.subr.mxu0 0.0
    %365 = vmatpush1.msra.mxu0 0.0
    %366 = vmatprep.subr.mxu0 0.0
    %367 = vmatpush1.msra.mxu0 0.0
    %368 = vmatprep.subr.mxu0 0.0
    %369 = vmatpush1.msra.mxu0 0.0
    %370 = vmatprep.subr.mxu0 0.0
    %371 = vmatpush1.msra.mxu0 0.0
    %372 = vmatprep.subr.mxu0 0.0
    %373 = vmatpush1.msra.mxu0 0.0
    %374 = vmatprep.subr.mxu0 0.0
    %375 = vmatpush1.msra.mxu0 0.0
    %376 = vmatprep.subr.mxu0 0.0
    %377 = vmatpush1.msra.mxu0 0.0
    %378 = vmatprep.subr.mxu0 0.0
    %379 = vmatpush1.msra.mxu0 0.0
    %380 = vmatprep.subr.mxu0 0.0
    %381 = vmatpush1.msra.mxu0 0.0
    %382 = vmatprep.subr.mxu0 0.0
    %383 = vmatpush1.msra.mxu0 0.0
    %384 = vmatprep.subr.mxu0 0.0
    %385 = vmatpush1.msra.mxu0 0.0
    %386 = vmatprep.subr.mxu0 0.0
    %387 = vmatpush1.msra.mxu0 0.0
    %388 = vmatprep.subr.mxu0 0.0
    %389 = vmatpush1.msra.mxu0 0.0
    %390 = vmatprep.subr.mxu0 0.0
    %391 = vmatpush1.msra.mxu0 0.0
    %392 = vmatprep.subr.mxu0 0.0
    %393 = vmatpush1.msra.mxu0 %v130
    %394 = vmatprep.subr.mxu0 0.0
    %395 = vmatpush1.msra.mxu0 %v129
    %396 = vmatprep.subr.mxu0 0.0
    %397 = vmatpush2.msra.mxu0 0.0
    %398 = vmatprep.subr.mxu0 0.0
    %399 = vmatpush2.msra.mxu0 0.0
    %400 = vmatprep.subr.mxu0 0.0
    %401 = vmatpush2.msra.mxu0 0.0
    %402 = vmatprep.subr.mxu0 0.0
    %403 = vmatpush2.msra.mxu0 0.0
    %404 = vmatprep.subr.mxu0 0.0
    %405 = vmatpush2.msra.mxu0 0.0
    %406 = vmatprep.subr.mxu0 0.0
    %407 = vmatpush2.msra.mxu0 0.0
    %408 = vmatprep.subr.mxu0 0.0
    %409 = vmatpush2.msra.mxu0 0.0
    %410 = vmatprep.subr.mxu0 0.0
    %411 = vmatpush2.msra.mxu0 0.0
    %412 = vmatprep.subr.mxu0 0.0
    %413 = vmatpush2.msra.mxu0 0.0
    %414 = vmatprep.subr.mxu0 0.0
    %415 = vmatpush2.msra.mxu0 0.0
    %416 = vmatprep.subr.mxu0 0.0
    %417 = vmatpush2.msra.mxu0 0.0
    %418 = vmatprep.subr.mxu0 0.0
    %419 = vmatpush2.msra.mxu0 0.0
    %420 = vmatprep.subr.mxu0 0.0
    %421 = vmatpush2.msra.mxu0 0.0
    %422 = vmatprep.subr.mxu0 0.0
    %423 = vmatpush2.msra.mxu0 0.0
    %424 = vmatprep.subr.mxu0 0.0
    %425 = vmatpush2.msra.mxu0 0.0
    %426 = vmatprep.subr.mxu0 0.0
    %427 = vmatpush2.msra.mxu0 0.0
    %428 = vmatprep.mubr.f32.mxu0 0.0
    %429 = vmatmul.mubr.f32.gmra.mxu0 %v359
    %v430 = vpop.f32.mrf.mxu0
    %v431 = vadd.f32 0.0, %v430
    %v432 = vpop.f32.mrf.mxu0
    %433 = vmatprep.mubr.f32.mxu0 0.0
    %434 = vmatmul.mubr.f32.gmra.mxu0 %v362
    %v435 = vpop.f32.mrf.mxu0
    %v436 = vadd.f32 0.0, %v435
    %v437 = vpop.f32.mrf.mxu0
    %438 = vdwg.mxu0
    %v439 = vmul.f32 %v431, %v174
    %v440 = vmul.f32 %v436, %v176
    %v441 = vadd.f32 %v353, %v439
    %v442 = vadd.f32 %v354, %v440
    %v443 = vrcp.pop %v179
    %v444 = vmul.f32 %v441, %v443
    %v445 = vrcp.pop %v180
    %v446 = vmul.f32 %v442, %v445
    %v447 = vsel %vm76, %v444, 0.0
    %v448 = vsel %vm76, %v446, 0.0
    %v449 = vadd.f32 %v447, %v448
    %v450 = vrot.slane %v449, 4
    %v451 = vadd.f32 %v449, %v450
    %v452 = vrot.slane %v451, 2
    %v453 = vadd.f32 %v451, %v452
    %v454 = vrot.slane %v453, 1
    %v455 = vadd.f32 %v453, %v454
    %v456 = vmul.f32 %v455, 0.125
    %v457 = vld [vmem:[%s5] sm:$0x7f]
    %v459 = vsel %vm183, %v457, 0
    %461 = vmatprep.subr.mxu0 0.0
    %462 = vmatpush1.msra.mxu0 0.0
    %463 = vmatprep.subr.mxu0 0.0
    %464 = vmatpush1.msra.mxu0 0.0
    %465 = vmatprep.subr.mxu0 0.0
    %466 = vmatpush1.msra.mxu0 0.0
    %467 = vmatprep.subr.mxu0 0.0
    %468 = vmatpush1.msra.mxu0 0.0
    %469 = vmatprep.subr.mxu0 0.0
    %470 = vmatpush1.msra.mxu0 0.0
    %471 = vmatprep.subr.mxu0 0.0
    %472 = vmatpush1.msra.mxu0 0.0
    %473 = vmatprep.subr.mxu0 0.0
    %474 = vmatpush1.msra.mxu0 0.0
    %475 = vmatprep.subr.mxu0 0.0
    %476 = vmatpush1.msra.mxu0 0.0
    %477 = vmatprep.subr.mxu0 0.0
    %478 = vmatpush1.msra.mxu0 0.0
    %479 = vmatprep.subr.mxu0 0.0
    %480 = vmatpush1.msra.mxu0 0.0
    %481 = vmatprep.subr.mxu0 0.0
    %482 = vmatpush1.msra.mxu0 0.0
    %483 = vmatprep.subr.mxu0 0.0
    %484 = vmatpush1.msra.mxu0 0.0
    %485 = vmatprep.subr.mxu0 0.0
    %486 = vmatpush1.msra.mxu0 0.0
    %487 = vmatprep.subr.mxu0 0.0
    %488 = vmatpush1.msra.mxu0 0.0
    %489 = vmatprep.subr.mxu0 0.0
    %490 = vmatpush1.msra.mxu0 %v130
    %491 = vmatprep.subr.mxu0 0.0
    %492 = vmatpush1.msra.mxu0 %v129
    %493 = vmatprep.subr.mxu0 0.0
    %494 = vmatpush2.msra.mxu0 0.0
    %495 = vmatprep.subr.mxu0 0.0
    %496 = vmatpush2.msra.mxu0 0.0
    %497 = vmatprep.subr.mxu0 0.0
    %498 = vmatpush2.msra.mxu0 0.0
    %499 = vmatprep.subr.mxu0 0.0
    %500 = vmatpush2.msra.mxu0 0.0
    %501 = vmatprep.subr.mxu0 0.0
    %502 = vmatpush2.msra.mxu0 0.0
    %503 = vmatprep.subr.mxu0 0.0
    %504 = vmatpush2.msra.mxu0 0.0
    %505 = vmatprep.subr.mxu0 0.0
    %506 = vmatpush2.msra.mxu0 0.0
    %507 = vmatprep.subr.mxu0 0.0
    %508 = vmatpush2.msra.mxu0 0.0
    %509 = vmatprep.subr.mxu0 0.0
    %510 = vmatpush2.msra.mxu0 0.0
    %511 = vmatprep.subr.mxu0 0.0
    %512 = vmatpush2.msra.mxu0 0.0
    %513 = vmatprep.subr.mxu0 0.0
    %514 = vmatpush2.msra.mxu0 0.0
    %515 = vmatprep.subr.mxu0 0.0
    %516 = vmatpush2.msra.mxu0 0.0
    %517 = vmatprep.subr.mxu0 0.0
    %518 = vmatpush2.msra.mxu0 0.0
    %519 = vmatprep.subr.mxu0 0.0
    %520 = vmatpush2.msra.mxu0 0.0
    %521 = vmatprep.subr.mxu0 0.0
    %522 = vmatpush2.msra.mxu0 0.0
    %523 = vmatprep.subr.mxu0 0.0
    %524 = vmatpush2.msra.mxu0 0.0
    %525 = vmatprep.mubr.f32.mxu0 0.0
    %526 = vmatmul.mubr.f32.gmra.mxu0 %v459
    %v527 = vpop.f32.mrf.mxu0
    %v528 = vadd.f32 0.0, %v527
    %v529 = vpop.f32.mrf.mxu0
    %530 = vdwg.mxu0
    %s531 = scalar_lea.vmem %s5, 8
    %v532 = vld [vmem:[%s531] sm:$0x7f]
    %v534 = vsel %vm183, %v532, 0
    %536 = vmatprep.subr.mxu0 0.0
    %537 = vmatpush1.msra.mxu0 0.0
    %538 = vmatprep.subr.mxu0 0.0
    %539 = vmatpush1.msra.mxu0 0.0
    %540 = vmatprep.subr.mxu0 0.0
    %541 = vmatpush1.msra.mxu0 0.0
    %542 = vmatprep.subr.mxu0 0.0
    %543 = vmatpush1.msra.mxu0 0.0
    %544 = vmatprep.subr.mxu0 0.0
    %545 = vmatpush1.msra.mxu0 0.0
    %546 = vmatprep.subr.mxu0 0.0
    %547 = vmatpush1.msra.mxu0 0.0
    %548 = vmatprep.subr.mxu0 0.0
    %549 = vmatpush1.msra.mxu0 0.0
    %550 = vmatprep.subr.mxu0 0.0
    %551 = vmatpush1.msra.mxu0 0.0
    %552 = vmatprep.subr.mxu0 0.0
    %553 = vmatpush1.msra.mxu0 0.0
    %554 = vmatprep.subr.mxu0 0.0
    %555 = vmatpush1.msra.mxu0 0.0
    %556 = vmatprep.subr.mxu0 0.0
    %557 = vmatpush1.msra.mxu0 0.0
    %558 = vmatprep.subr.mxu0 0.0
    %559 = vmatpush1.msra.mxu0 0.0
    %560 = vmatprep.subr.mxu0 0.0
    %561 = vmatpush1.msra.mxu0 0.0
    %562 = vmatprep.subr.mxu0 0.0
    %563 = vmatpush1.msra.mxu0 0.0
    %564 = vmatprep.subr.mxu0 0.0
    %565 = vmatpush1.msra.mxu0 %v130
    %566 = vmatprep.subr.mxu0 0.0
    %567 = vmatpush1.msra.mxu0 %v129
    %568 = vmatprep.subr.mxu0 0.0
    %569 = vmatpush2.msra.mxu0 0.0
    %570 = vmatprep.subr.mxu0 0.0
    %571 = vmatpush2.msra.mxu0 0.0
    %572 = vmatprep.subr.mxu0 0.0
    %573 = vmatpush2.msra.mxu0 0.0
    %574 = vmatprep.subr.mxu0 0.0
    %575 = vmatpush2.msra.mxu0 0.0
    %576 = vmatprep.subr.mxu0 0.0
    %577 = vmatpush2.msra.mxu0 0.0
    %578 = vmatprep.subr.mxu0 0.0
    %579 = vmatpush2.msra.mxu0 0.0
    %580 = vmatprep.subr.mxu0 0.0
    %581 = vmatpush2.msra.mxu0 0.0
    %582 = vmatprep.subr.mxu0 0.0
    %583 = vmatpush2.msra.mxu0 0.0
    %584 = vmatprep.subr.mxu0 0.0
    %585 = vmatpush2.msra.mxu0 0.0
    %586 = vmatprep.subr.mxu0 0.0
    %587 = vmatpush2.msra.mxu0 0.0
    %588 = vmatprep.subr.mxu0 0.0
    %589 = vmatpush2.msra.mxu0 0.0
    %590 = vmatprep.subr.mxu0 0.0
    %591 = vmatpush2.msra.mxu0 0.0
    %592 = vmatprep.subr.mxu0 0.0
    %593 = vmatpush2.msra.mxu0 0.0
    %594 = vmatprep.subr.mxu0 0.0
    %595 = vmatpush2.msra.mxu0 0.0
    %596 = vmatprep.subr.mxu0 0.0
    %597 = vmatpush2.msra.mxu0 0.0
    %598 = vmatprep.subr.mxu0 0.0
    %599 = vmatpush2.msra.mxu0 0.0
    %600 = vmatprep.mubr.f32.mxu0 0.0
    %601 = vmatmul.mubr.f32.gmra.mxu0 %v534
    %v602 = vpop.f32.mrf.mxu0
    %v603 = vadd.f32 0.0, %v602
    %v604 = vpop.f32.mrf.mxu0
    %605 = vdwg.mxu0
    %v606 = vmul.f32 %v528, %v528
    %v607 = vmul.f32 %v603, %v603
    %v608 = vadd.f32 %v606, %v607
    %v609 = vlaneseq
    %v610 = vshrl.u32 %v609, 7
    %vm611 = vcmask 63488
    %v612 = vsel %vm611, %v608, -inf
    %v613 = vrot.slane %v612, 4
    %v614 = vmax.f32 %v612, %v613
    %v615 = vrot.slane %v614, 2
    %v616 = vmax.f32 %v614, %v615
    %v617 = vrot.slane %v616, 1
    %v618 = vmax.f32 %v616, %v617
    %vm619 = vcmp.ge.f32.partialorder %v608, %v618
    %v620 = vsel %vm619, %v610, 7
    %v621 = vsel %vm611, %v620, 2147483647
    %v622 = vrot.slane %v621, 4
    %vm623 = vcmp.lt.s32.totalorder %v621, %v622
    %v624 = vsel %vm623, %v621, %v622
    %v625 = vrot.slane %v624, 2
    %vm626 = vcmp.lt.s32.totalorder %v624, %v625
    %v627 = vsel %vm626, %v624, %v625
    %v628 = vrot.slane %v627, 1
    %vm629 = vcmp.lt.s32.totalorder %v627, %v628
    %v630 = vsel %vm629, %v627, %v628
    %vm631 = vcmp.eq.s32.totalorder %v610, %v630
    %v632 = vsel %vm631, 1.0, 0.0
    %v633 = vsel %vm631, -1.0, %v608
    %v634 = vsel %vm611, %v633, -inf
    %v635 = vrot.slane %v634, 4
    %v636 = vmax.f32 %v634, %v635
    %v637 = vrot.slane %v636, 2
    %v638 = vmax.f32 %v636, %v637
    %v639 = vrot.slane %v638, 1
    %v640 = vmax.f32 %v638, %v639
    %vm641 = vcmp.ge.f32.partialorder %v633, %v640
    %v642 = vsel %vm641, %v610, 7
    %v643 = vsel %vm611, %v642, 2147483647
    %v644 = vrot.slane %v643, 4
    %vm645 = vcmp.lt.s32.totalorder %v643, %v644
    %v646 = vsel %vm645, %v643, %v644
    %v647 = vrot.slane %v646, 2
    %vm648 = vcmp.lt.s32.totalorder %v646, %v647
    %v649 = vsel %vm648, %v646, %v647
    %v650 = vrot.slane %v649, 1
    %vm651 = vcmp.lt.s32.totalorder %v649, %v650
    %v652 = vsel %vm651, %v649, %v650
    %vm653 = vcmp.eq.s32.totalorder %v610, %v652
    %v654 = vsel %vm653, 1.0, %v632
    %v655 = vsel %vm653, -1.0, %v633
    %v656 = vsel %vm611, %v655, -inf
    %v657 = vrot.slane %v656, 4
    %v658 = vmax.f32 %v656, %v657
    %v659 = vrot.slane %v658, 2
    %v660 = vmax.f32 %v658, %v659
    %v661 = vrot.slane %v660, 1
    %v662 = vmax.f32 %v660, %v661
    %vm663 = vcmp.ge.f32.partialorder %v655, %v662
    %v664 = vsel %vm663, %v610, 7
    %v665 = vsel %vm611, %v664, 2147483647
    %v666 = vrot.slane %v665, 4
    %vm667 = vcmp.lt.s32.totalorder %v665, %v666
    %v668 = vsel %vm667, %v665, %v666
    %v669 = vrot.slane %v668, 2
    %vm670 = vcmp.lt.s32.totalorder %v668, %v669
    %v671 = vsel %vm670, %v668, %v669
    %v672 = vrot.slane %v671, 1
    %vm673 = vcmp.lt.s32.totalorder %v671, %v672
    %v674 = vsel %vm673, %v671, %v672
    %vm675 = vcmp.eq.s32.totalorder %v610, %v674
    %v676 = vsel %vm675, 1.0, %v654
    %v677 = vmul.f32 %v528, %v676
    %v678 = vmul.f32 %v603, %v676
    %v679 = vld [vmem:[%s6] sm:$0xff]
    %v680 = vld [vmem:[%s6 + $0x8] sm:$0xff]
    %v681 = vld [vmem:[%s6 + $0x10] sm:$0xff]
    %v682 = vld [vmem:[%s6 + $0x18] sm:$0xff]
    %v683 = vld [vmem:[%s6 + $0x20] sm:$0xff]
    %v684 = vld [vmem:[%s6 + $0x28] sm:$0xff]
    %v685 = vld [vmem:[%s6 + $0x30] sm:$0xff]
    %v686 = vld [vmem:[%s6 + $0x38] sm:$0xff]
    %v687 = vld [vmem:[%s6 + $0x40] sm:$0xff]
    %v688 = vld [vmem:[%s6 + $0x48] sm:$0xff]
    %v689 = vld [vmem:[%s6 + $0x50] sm:$0xff]
    %v690 = vld [vmem:[%s6 + $0x58] sm:$0xff]
    %v691 = vld [vmem:[%s6 + $0x60] sm:$0xff]
    %v692 = vld [vmem:[%s6 + $0x68] sm:$0xff]
    %v693 = vld [vmem:[%s6 + $0x70] sm:$0xff]
    %v694 = vld [vmem:[%s6 + $0x78] sm:$0xff]
    %v695 = vld [vmem:[%s6 + $0x80] sm:$0xff]
    %v696 = vld [vmem:[%s6 + $0x88] sm:$0xff]
    %v697 = vld [vmem:[%s6 + $0x90] sm:$0xff]
    %v698 = vld [vmem:[%s6 + $0x98] sm:$0xff]
    %v699 = vld [vmem:[%s6 + $0xa0] sm:$0xff]
    %v700 = vld [vmem:[%s6 + $0xa8] sm:$0xff]
    %v701 = vld [vmem:[%s6 + $0xb0] sm:$0xff]
    %v702 = vld [vmem:[%s6 + $0xb8] sm:$0xff]
    %v703 = vld [vmem:[%s6 + $0xc0] sm:$0xff]
    %v704 = vld [vmem:[%s6 + $0xc8] sm:$0xff]
    %v705 = vld [vmem:[%s6 + $0xd0] sm:$0xff]
    %v706 = vld [vmem:[%s6 + $0xd8] sm:$0xff]
    %v707 = vld [vmem:[%s6 + $0xe0] sm:$0xff]
    %v708 = vld [vmem:[%s6 + $0xe8] sm:$0xff]
    %v709 = vld [vmem:[%s6 + $0xf0] sm:$0xff]
    %v710 = vld [vmem:[%s6 + $0xf8] sm:$0xff]
    %s711 = scalar_lea.vmem %s6, 256
    %v712 = vld [vmem:[%s711] sm:$0xff]
    %v713 = vld [vmem:[%s711 + $0x8] sm:$0xff]
    %v714 = vld [vmem:[%s711 + $0x10] sm:$0xff]
    %v715 = vld [vmem:[%s711 + $0x18] sm:$0xff]
    %v716 = vld [vmem:[%s711 + $0x20] sm:$0xff]
    %v717 = vld [vmem:[%s711 + $0x28] sm:$0xff]
    %v718 = vld [vmem:[%s711 + $0x30] sm:$0xff]
    %v719 = vld [vmem:[%s711 + $0x38] sm:$0xff]
    %v720 = vld [vmem:[%s711 + $0x40] sm:$0xff]
    %v721 = vld [vmem:[%s711 + $0x48] sm:$0xff]
    %v722 = vld [vmem:[%s711 + $0x50] sm:$0xff]
    %v723 = vld [vmem:[%s711 + $0x58] sm:$0xff]
    %v724 = vld [vmem:[%s711 + $0x60] sm:$0xff]
    %v725 = vld [vmem:[%s711 + $0x68] sm:$0xff]
    %v726 = vld [vmem:[%s711 + $0x70] sm:$0xff]
    %v727 = vld [vmem:[%s711 + $0x78] sm:$0xff]
    %v728 = vld [vmem:[%s711 + $0x80] sm:$0xff]
    %v729 = vld [vmem:[%s711 + $0x88] sm:$0xff]
    %v730 = vld [vmem:[%s711 + $0x90] sm:$0xff]
    %v731 = vld [vmem:[%s711 + $0x98] sm:$0xff]
    %v732 = vld [vmem:[%s711 + $0xa0] sm:$0xff]
    %v733 = vld [vmem:[%s711 + $0xa8] sm:$0xff]
    %v734 = vld [vmem:[%s711 + $0xb0] sm:$0xff]
    %v735 = vld [vmem:[%s711 + $0xb8] sm:$0xff]
    %v736 = vld [vmem:[%s711 + $0xc0] sm:$0xff]
    %v737 = vld [vmem:[%s711 + $0xc8] sm:$0xff]
    %v738 = vld [vmem:[%s711 + $0xd0] sm:$0xff]
    %v739 = vld [vmem:[%s711 + $0xd8] sm:$0xff]
    %v740 = vld [vmem:[%s711 + $0xe0] sm:$0xff]
    %v741 = vld [vmem:[%s711 + $0xe8] sm:$0xff]
    %v742 = vld [vmem:[%s711 + $0xf0] sm:$0xff]
    %v743 = vld [vmem:[%s711 + $0xf8] sm:$0xff]
    %vm744 = vcmask 56320
    %v746 = vsel %vm744, %v712, 0
    %v749 = vsel %vm744, %v713, 0
    %v752 = vsel %vm744, %v714, 0
    %v755 = vsel %vm744, %v715, 0
    %v758 = vsel %vm744, %v716, 0
    %v761 = vsel %vm744, %v717, 0
    %v764 = vsel %vm744, %v718, 0
    %v767 = vsel %vm744, %v719, 0
    %v770 = vsel %vm744, %v720, 0
    %v773 = vsel %vm744, %v721, 0
    %v776 = vsel %vm744, %v722, 0
    %v779 = vsel %vm744, %v723, 0
    %v782 = vsel %vm744, %v724, 0
    %v785 = vsel %vm744, %v725, 0
    %v788 = vsel %vm744, %v726, 0
    %v791 = vsel %vm744, %v727, 0
    %v794 = vsel %vm744, %v728, 0
    %v797 = vsel %vm744, %v729, 0
    %v800 = vsel %vm744, %v730, 0
    %v803 = vsel %vm744, %v731, 0
    %v806 = vsel %vm744, %v732, 0
    %v809 = vsel %vm744, %v733, 0
    %v812 = vsel %vm744, %v734, 0
    %v815 = vsel %vm744, %v735, 0
    %v818 = vsel %vm744, %v736, 0
    %v821 = vsel %vm744, %v737, 0
    %v824 = vsel %vm744, %v738, 0
    %v827 = vsel %vm744, %v739, 0
    %v830 = vsel %vm744, %v740, 0
    %v833 = vsel %vm744, %v741, 0
    %v836 = vsel %vm744, %v742, 0
    %v839 = vsel %vm744, %v743, 0
    %vm841 = vcmask 1046528
    %v843 = vsel %vm841, %v678, 0
    %845 = vmatprep.subr.mxu0 0.0
    %846 = vmatpush1.msra.mxu0 0.0
    %847 = vmatprep.subr.mxu0 0.0
    %848 = vmatpush1.msra.mxu0 0.0
    %849 = vmatprep.subr.mxu0 0.0
    %850 = vmatpush1.msra.mxu0 0.0
    %851 = vmatprep.subr.mxu0 0.0
    %852 = vmatpush1.msra.mxu0 0.0
    %853 = vmatprep.subr.mxu0 0.0
    %854 = vmatpush1.msra.mxu0 0.0
    %855 = vmatprep.subr.mxu0 0.0
    %856 = vmatpush1.msra.mxu0 0.0
    %857 = vmatprep.subr.mxu0 0.0
    %858 = vmatpush1.msra.mxu0 0.0
    %859 = vmatprep.subr.mxu0 0.0
    %860 = vmatpush1.msra.mxu0 0.0
    %861 = vmatprep.subr.mxu0 0.0
    %862 = vmatpush1.msra.mxu0 0.0
    %863 = vmatprep.subr.mxu0 0.0
    %864 = vmatpush1.msra.mxu0 0.0
    %865 = vmatprep.subr.mxu0 0.0
    %866 = vmatpush1.msra.mxu0 0.0
    %867 = vmatprep.subr.mxu0 0.0
    %868 = vmatpush1.msra.mxu0 0.0
    %869 = vmatprep.subr.mxu0 0.0
    %870 = vmatpush1.msra.mxu0 0.0
    %871 = vmatprep.subr.mxu0 0.0
    %872 = vmatpush1.msra.mxu0 0.0
    %873 = vmatprep.subr.mxu0 0.0
    %874 = vmatpush1.msra.mxu0 0.0
    %875 = vmatprep.subr.mxu0 0.0
    %876 = vmatpush1.msra.mxu0 %v843
    %877 = vmatprep.subr.mxu0 0.0
    %878 = vmatpush2.msra.mxu0 0.0
    %879 = vmatprep.subr.mxu0 0.0
    %880 = vmatpush2.msra.mxu0 0.0
    %881 = vmatprep.subr.mxu0 0.0
    %882 = vmatpush2.msra.mxu0 0.0
    %883 = vmatprep.subr.mxu0 0.0
    %884 = vmatpush2.msra.mxu0 0.0
    %885 = vmatprep.subr.mxu0 0.0
    %886 = vmatpush2.msra.mxu0 0.0
    %887 = vmatprep.subr.mxu0 0.0
    %888 = vmatpush2.msra.mxu0 0.0
    %889 = vmatprep.subr.mxu0 0.0
    %890 = vmatpush2.msra.mxu0 0.0
    %891 = vmatprep.subr.mxu0 0.0
    %892 = vmatpush2.msra.mxu0 0.0
    %893 = vmatprep.subr.mxu0 0.0
    %894 = vmatpush2.msra.mxu0 0.0
    %895 = vmatprep.subr.mxu0 0.0
    %896 = vmatpush2.msra.mxu0 0.0
    %897 = vmatprep.subr.mxu0 0.0
    %898 = vmatpush2.msra.mxu0 0.0
    %899 = vmatprep.subr.mxu0 0.0
    %900 = vmatpush2.msra.mxu0 0.0
    %901 = vmatprep.subr.mxu0 0.0
    %902 = vmatpush2.msra.mxu0 0.0
    %903 = vmatprep.subr.mxu0 0.0
    %904 = vmatpush2.msra.mxu0 0.0
    %905 = vmatprep.subr.mxu0 0.0
    %906 = vmatpush2.msra.mxu0 0.0
    %907 = vmatprep.subr.mxu0 0.0
    %908 = vmatpush2.msra.mxu0 0.0
    %909 = vmatprep.mubr.f32.mxu0 0.0
    %910 = vmatmul.mubr.f32.gmra.mxu0 %v746
    %v911 = vpop.f32.mrf.mxu0
    %v912 = vadd.f32 0.0, %v911
    %v913 = vpop.f32.mrf.mxu0
    %914 = vmatprep.mubr.f32.mxu0 0.0
    %915 = vmatmul.mubr.f32.gmra.mxu0 %v749
    %v916 = vpop.f32.mrf.mxu0
    %v917 = vadd.f32 0.0, %v916
    %v918 = vpop.f32.mrf.mxu0
    %919 = vmatprep.mubr.f32.mxu0 0.0
    %920 = vmatmul.mubr.f32.gmra.mxu0 %v752
    %v921 = vpop.f32.mrf.mxu0
    %v922 = vadd.f32 0.0, %v921
    %v923 = vpop.f32.mrf.mxu0
    %924 = vmatprep.mubr.f32.mxu0 0.0
    %925 = vmatmul.mubr.f32.gmra.mxu0 %v755
    %v926 = vpop.f32.mrf.mxu0
    %v927 = vadd.f32 0.0, %v926
    %v928 = vpop.f32.mrf.mxu0
    %929 = vmatprep.mubr.f32.mxu0 0.0
    %930 = vmatmul.mubr.f32.gmra.mxu0 %v758
    %v931 = vpop.f32.mrf.mxu0
    %v932 = vadd.f32 0.0, %v931
    %v933 = vpop.f32.mrf.mxu0
    %934 = vmatprep.mubr.f32.mxu0 0.0
    %935 = vmatmul.mubr.f32.gmra.mxu0 %v761
    %v936 = vpop.f32.mrf.mxu0
    %v937 = vadd.f32 0.0, %v936
    %v938 = vpop.f32.mrf.mxu0
    %939 = vmatprep.mubr.f32.mxu0 0.0
    %940 = vmatmul.mubr.f32.gmra.mxu0 %v764
    %v941 = vpop.f32.mrf.mxu0
    %v942 = vadd.f32 0.0, %v941
    %v943 = vpop.f32.mrf.mxu0
    %944 = vmatprep.mubr.f32.mxu0 0.0
    %945 = vmatmul.mubr.f32.gmra.mxu0 %v767
    %v946 = vpop.f32.mrf.mxu0
    %v947 = vadd.f32 0.0, %v946
    %v948 = vpop.f32.mrf.mxu0
    %949 = vmatprep.mubr.f32.mxu0 0.0
    %950 = vmatmul.mubr.f32.gmra.mxu0 %v770
    %v951 = vpop.f32.mrf.mxu0
    %v952 = vadd.f32 0.0, %v951
    %v953 = vpop.f32.mrf.mxu0
    %954 = vmatprep.mubr.f32.mxu0 0.0
    %955 = vmatmul.mubr.f32.gmra.mxu0 %v773
    %v956 = vpop.f32.mrf.mxu0
    %v957 = vadd.f32 0.0, %v956
    %v958 = vpop.f32.mrf.mxu0
    %959 = vmatprep.mubr.f32.mxu0 0.0
    %960 = vmatmul.mubr.f32.gmra.mxu0 %v776
    %v961 = vpop.f32.mrf.mxu0
    %v962 = vadd.f32 0.0, %v961
    %v963 = vpop.f32.mrf.mxu0
    %964 = vmatprep.mubr.f32.mxu0 0.0
    %965 = vmatmul.mubr.f32.gmra.mxu0 %v779
    %v966 = vpop.f32.mrf.mxu0
    %v967 = vadd.f32 0.0, %v966
    %v968 = vpop.f32.mrf.mxu0
    %969 = vmatprep.mubr.f32.mxu0 0.0
    %970 = vmatmul.mubr.f32.gmra.mxu0 %v782
    %v971 = vpop.f32.mrf.mxu0
    %v972 = vadd.f32 0.0, %v971
    %v973 = vpop.f32.mrf.mxu0
    %974 = vmatprep.mubr.f32.mxu0 0.0
    %975 = vmatmul.mubr.f32.gmra.mxu0 %v785
    %v976 = vpop.f32.mrf.mxu0
    %v977 = vadd.f32 0.0, %v976
    %v978 = vpop.f32.mrf.mxu0
    %979 = vmatprep.mubr.f32.mxu0 0.0
    %980 = vmatmul.mubr.f32.gmra.mxu0 %v788
    %v981 = vpop.f32.mrf.mxu0
    %v982 = vadd.f32 0.0, %v981
    %v983 = vpop.f32.mrf.mxu0
    %984 = vmatprep.mubr.f32.mxu0 0.0
    %985 = vmatmul.mubr.f32.gmra.mxu0 %v791
    %v986 = vpop.f32.mrf.mxu0
    %v987 = vadd.f32 0.0, %v986
    %v988 = vpop.f32.mrf.mxu0
    %989 = vmatprep.mubr.f32.mxu0 0.0
    %990 = vmatmul.mubr.f32.gmra.mxu0 %v794
    %v991 = vpop.f32.mrf.mxu0
    %v992 = vadd.f32 0.0, %v991
    %v993 = vpop.f32.mrf.mxu0
    %994 = vmatprep.mubr.f32.mxu0 0.0
    %995 = vmatmul.mubr.f32.gmra.mxu0 %v797
    %v996 = vpop.f32.mrf.mxu0
    %v997 = vadd.f32 0.0, %v996
    %v998 = vpop.f32.mrf.mxu0
    %999 = vmatprep.mubr.f32.mxu0 0.0
    %1000 = vmatmul.mubr.f32.gmra.mxu0 %v800
    %v1001 = vpop.f32.mrf.mxu0
    %v1002 = vadd.f32 0.0, %v1001
    %v1003 = vpop.f32.mrf.mxu0
    %1004 = vmatprep.mubr.f32.mxu0 0.0
    %1005 = vmatmul.mubr.f32.gmra.mxu0 %v803
    %v1006 = vpop.f32.mrf.mxu0
    %v1007 = vadd.f32 0.0, %v1006
    %v1008 = vpop.f32.mrf.mxu0
    %1009 = vmatprep.mubr.f32.mxu0 0.0
    %1010 = vmatmul.mubr.f32.gmra.mxu0 %v806
    %v1011 = vpop.f32.mrf.mxu0
    %v1012 = vadd.f32 0.0, %v1011
    %v1013 = vpop.f32.mrf.mxu0
    %1014 = vmatprep.mubr.f32.mxu0 0.0
    %1015 = vmatmul.mubr.f32.gmra.mxu0 %v809
    %v1016 = vpop.f32.mrf.mxu0
    %v1017 = vadd.f32 0.0, %v1016
    %v1018 = vpop.f32.mrf.mxu0
    %1019 = vmatprep.mubr.f32.mxu0 0.0
    %1020 = vmatmul.mubr.f32.gmra.mxu0 %v812
    %v1021 = vpop.f32.mrf.mxu0
    %v1022 = vadd.f32 0.0, %v1021
    %v1023 = vpop.f32.mrf.mxu0
    %1024 = vmatprep.mubr.f32.mxu0 0.0
    %1025 = vmatmul.mubr.f32.gmra.mxu0 %v815
    %v1026 = vpop.f32.mrf.mxu0
    %v1027 = vadd.f32 0.0, %v1026
    %v1028 = vpop.f32.mrf.mxu0
    %1029 = vmatprep.mubr.f32.mxu0 0.0
    %1030 = vmatmul.mubr.f32.gmra.mxu0 %v818
    %v1031 = vpop.f32.mrf.mxu0
    %v1032 = vadd.f32 0.0, %v1031
    %v1033 = vpop.f32.mrf.mxu0
    %1034 = vmatprep.mubr.f32.mxu0 0.0
    %1035 = vmatmul.mubr.f32.gmra.mxu0 %v821
    %v1036 = vpop.f32.mrf.mxu0
    %v1037 = vadd.f32 0.0, %v1036
    %v1038 = vpop.f32.mrf.mxu0
    %1039 = vmatprep.mubr.f32.mxu0 0.0
    %1040 = vmatmul.mubr.f32.gmra.mxu0 %v824
    %v1041 = vpop.f32.mrf.mxu0
    %v1042 = vadd.f32 0.0, %v1041
    %v1043 = vpop.f32.mrf.mxu0
    %1044 = vmatprep.mubr.f32.mxu0 0.0
    %1045 = vmatmul.mubr.f32.gmra.mxu0 %v827
    %v1046 = vpop.f32.mrf.mxu0
    %v1047 = vadd.f32 0.0, %v1046
    %v1048 = vpop.f32.mrf.mxu0
    %1049 = vmatprep.mubr.f32.mxu0 0.0
    %1050 = vmatmul.mubr.f32.gmra.mxu0 %v830
    %v1051 = vpop.f32.mrf.mxu0
    %v1052 = vadd.f32 0.0, %v1051
    %v1053 = vpop.f32.mrf.mxu0
    %1054 = vmatprep.mubr.f32.mxu0 0.0
    %1055 = vmatmul.mubr.f32.gmra.mxu0 %v833
    %v1056 = vpop.f32.mrf.mxu0
    %v1057 = vadd.f32 0.0, %v1056
    %v1058 = vpop.f32.mrf.mxu0
    %1059 = vmatprep.mubr.f32.mxu0 0.0
    %1060 = vmatmul.mubr.f32.gmra.mxu0 %v836
    %v1061 = vpop.f32.mrf.mxu0
    %v1062 = vadd.f32 0.0, %v1061
    %v1063 = vpop.f32.mrf.mxu0
    %1064 = vmatprep.mubr.f32.mxu0 0.0
    %1065 = vmatmul.mubr.f32.gmra.mxu0 %v839
    %v1066 = vpop.f32.mrf.mxu0
    %v1067 = vadd.f32 0.0, %v1066
    %v1068 = vpop.f32.mrf.mxu0
    %1069 = vdwg.mxu0
    %v1071 = vsel %vm744, %v679, 0
    %v1074 = vsel %vm744, %v680, 0
    %v1077 = vsel %vm744, %v681, 0
    %v1080 = vsel %vm744, %v682, 0
    %v1083 = vsel %vm744, %v683, 0
    %v1086 = vsel %vm744, %v684, 0
    %v1089 = vsel %vm744, %v685, 0
    %v1092 = vsel %vm744, %v686, 0
    %v1095 = vsel %vm744, %v687, 0
    %v1098 = vsel %vm744, %v688, 0
    %v1101 = vsel %vm744, %v689, 0
    %v1104 = vsel %vm744, %v690, 0
    %v1107 = vsel %vm744, %v691, 0
    %v1110 = vsel %vm744, %v692, 0
    %v1113 = vsel %vm744, %v693, 0
    %v1116 = vsel %vm744, %v694, 0
    %v1119 = vsel %vm744, %v695, 0
    %v1122 = vsel %vm744, %v696, 0
    %v1125 = vsel %vm744, %v697, 0
    %v1128 = vsel %vm744, %v698, 0
    %v1131 = vsel %vm744, %v699, 0
    %v1134 = vsel %vm744, %v700, 0
    %v1137 = vsel %vm744, %v701, 0
    %v1140 = vsel %vm744, %v702, 0
    %v1143 = vsel %vm744, %v703, 0
    %v1146 = vsel %vm744, %v704, 0
    %v1149 = vsel %vm744, %v705, 0
    %v1152 = vsel %vm744, %v706, 0
    %v1155 = vsel %vm744, %v707, 0
    %v1158 = vsel %vm744, %v708, 0
    %v1161 = vsel %vm744, %v709, 0
    %v1164 = vsel %vm744, %v710, 0
    %v1167 = vsel %vm841, %v677, 0
    %1169 = vmatprep.subr.mxu0 0.0
    %1170 = vmatpush1.msra.mxu0 0.0
    %1171 = vmatprep.subr.mxu0 0.0
    %1172 = vmatpush1.msra.mxu0 0.0
    %1173 = vmatprep.subr.mxu0 0.0
    %1174 = vmatpush1.msra.mxu0 0.0
    %1175 = vmatprep.subr.mxu0 0.0
    %1176 = vmatpush1.msra.mxu0 0.0
    %1177 = vmatprep.subr.mxu0 0.0
    %1178 = vmatpush1.msra.mxu0 0.0
    %1179 = vmatprep.subr.mxu0 0.0
    %1180 = vmatpush1.msra.mxu0 0.0
    %1181 = vmatprep.subr.mxu0 0.0
    %1182 = vmatpush1.msra.mxu0 0.0
    %1183 = vmatprep.subr.mxu0 0.0
    %1184 = vmatpush1.msra.mxu0 0.0
    %1185 = vmatprep.subr.mxu0 0.0
    %1186 = vmatpush1.msra.mxu0 0.0
    %1187 = vmatprep.subr.mxu0 0.0
    %1188 = vmatpush1.msra.mxu0 0.0
    %1189 = vmatprep.subr.mxu0 0.0
    %1190 = vmatpush1.msra.mxu0 0.0
    %1191 = vmatprep.subr.mxu0 0.0
    %1192 = vmatpush1.msra.mxu0 0.0
    %1193 = vmatprep.subr.mxu0 0.0
    %1194 = vmatpush1.msra.mxu0 0.0
    %1195 = vmatprep.subr.mxu0 0.0
    %1196 = vmatpush1.msra.mxu0 0.0
    %1197 = vmatprep.subr.mxu0 0.0
    %1198 = vmatpush1.msra.mxu0 0.0
    %1199 = vmatprep.subr.mxu0 0.0
    %1200 = vmatpush1.msra.mxu0 %v1167
    %1201 = vmatprep.subr.mxu0 0.0
    %1202 = vmatpush2.msra.mxu0 0.0
    %1203 = vmatprep.subr.mxu0 0.0
    %1204 = vmatpush2.msra.mxu0 0.0
    %1205 = vmatprep.subr.mxu0 0.0
    %1206 = vmatpush2.msra.mxu0 0.0
    %1207 = vmatprep.subr.mxu0 0.0
    %1208 = vmatpush2.msra.mxu0 0.0
    %1209 = vmatprep.subr.mxu0 0.0
    %1210 = vmatpush2.msra.mxu0 0.0
    %1211 = vmatprep.subr.mxu0 0.0
    %1212 = vmatpush2.msra.mxu0 0.0
    %1213 = vmatprep.subr.mxu0 0.0
    %1214 = vmatpush2.msra.mxu0 0.0
    %1215 = vmatprep.subr.mxu0 0.0
    %1216 = vmatpush2.msra.mxu0 0.0
    %1217 = vmatprep.subr.mxu0 0.0
    %1218 = vmatpush2.msra.mxu0 0.0
    %1219 = vmatprep.subr.mxu0 0.0
    %1220 = vmatpush2.msra.mxu0 0.0
    %1221 = vmatprep.subr.mxu0 0.0
    %1222 = vmatpush2.msra.mxu0 0.0
    %1223 = vmatprep.subr.mxu0 0.0
    %1224 = vmatpush2.msra.mxu0 0.0
    %1225 = vmatprep.subr.mxu0 0.0
    %1226 = vmatpush2.msra.mxu0 0.0
    %1227 = vmatprep.subr.mxu0 0.0
    %1228 = vmatpush2.msra.mxu0 0.0
    %1229 = vmatprep.subr.mxu0 0.0
    %1230 = vmatpush2.msra.mxu0 0.0
    %1231 = vmatprep.subr.mxu0 0.0
    %1232 = vmatpush2.msra.mxu0 0.0
    %1233 = vmatprep.mubr.f32.mxu0 0.0
    %1234 = vmatmul.mubr.f32.gmra.mxu0 %v1071
    %v1235 = vpop.f32.mrf.mxu0
    %v1236 = vadd.f32 %v912, %v1235
    %v1237 = vpop.f32.mrf.mxu0
    %1238 = vmatprep.mubr.f32.mxu0 0.0
    %1239 = vmatmul.mubr.f32.gmra.mxu0 %v1074
    %v1240 = vpop.f32.mrf.mxu0
    %v1241 = vadd.f32 %v917, %v1240
    %v1242 = vpop.f32.mrf.mxu0
    %1243 = vmatprep.mubr.f32.mxu0 0.0
    %1244 = vmatmul.mubr.f32.gmra.mxu0 %v1077
    %v1245 = vpop.f32.mrf.mxu0
    %v1246 = vadd.f32 %v922, %v1245
    %v1247 = vpop.f32.mrf.mxu0
    %1248 = vmatprep.mubr.f32.mxu0 0.0
    %1249 = vmatmul.mubr.f32.gmra.mxu0 %v1080
    %v1250 = vpop.f32.mrf.mxu0
    %v1251 = vadd.f32 %v927, %v1250
    %v1252 = vpop.f32.mrf.mxu0
    %1253 = vmatprep.mubr.f32.mxu0 0.0
    %1254 = vmatmul.mubr.f32.gmra.mxu0 %v1083
    %v1255 = vpop.f32.mrf.mxu0
    %v1256 = vadd.f32 %v932, %v1255
    %v1257 = vpop.f32.mrf.mxu0
    %1258 = vmatprep.mubr.f32.mxu0 0.0
    %1259 = vmatmul.mubr.f32.gmra.mxu0 %v1086
    %v1260 = vpop.f32.mrf.mxu0
    %v1261 = vadd.f32 %v937, %v1260
    %v1262 = vpop.f32.mrf.mxu0
    %1263 = vmatprep.mubr.f32.mxu0 0.0
    %1264 = vmatmul.mubr.f32.gmra.mxu0 %v1089
    %v1265 = vpop.f32.mrf.mxu0
    %v1266 = vadd.f32 %v942, %v1265
    %v1267 = vpop.f32.mrf.mxu0
    %1268 = vmatprep.mubr.f32.mxu0 0.0
    %1269 = vmatmul.mubr.f32.gmra.mxu0 %v1092
    %v1270 = vpop.f32.mrf.mxu0
    %v1271 = vadd.f32 %v947, %v1270
    %v1272 = vpop.f32.mrf.mxu0
    %1273 = vmatprep.mubr.f32.mxu0 0.0
    %1274 = vmatmul.mubr.f32.gmra.mxu0 %v1095
    %v1275 = vpop.f32.mrf.mxu0
    %v1276 = vadd.f32 %v952, %v1275
    %v1277 = vpop.f32.mrf.mxu0
    %1278 = vmatprep.mubr.f32.mxu0 0.0
    %1279 = vmatmul.mubr.f32.gmra.mxu0 %v1098
    %v1280 = vpop.f32.mrf.mxu0
    %v1281 = vadd.f32 %v957, %v1280
    %v1282 = vpop.f32.mrf.mxu0
    %1283 = vmatprep.mubr.f32.mxu0 0.0
    %1284 = vmatmul.mubr.f32.gmra.mxu0 %v1101
    %v1285 = vpop.f32.mrf.mxu0
    %v1286 = vadd.f32 %v962, %v1285
    %v1287 = vpop.f32.mrf.mxu0
    %1288 = vmatprep.mubr.f32.mxu0 0.0
    %1289 = vmatmul.mubr.f32.gmra.mxu0 %v1104
    %v1290 = vpop.f32.mrf.mxu0
    %v1291 = vadd.f32 %v967, %v1290
    %v1292 = vpop.f32.mrf.mxu0
    %1293 = vmatprep.mubr.f32.mxu0 0.0
    %1294 = vmatmul.mubr.f32.gmra.mxu0 %v1107
    %v1295 = vpop.f32.mrf.mxu0
    %v1296 = vadd.f32 %v972, %v1295
    %v1297 = vpop.f32.mrf.mxu0
    %1298 = vmatprep.mubr.f32.mxu0 0.0
    %1299 = vmatmul.mubr.f32.gmra.mxu0 %v1110
    %v1300 = vpop.f32.mrf.mxu0
    %v1301 = vadd.f32 %v977, %v1300
    %v1302 = vpop.f32.mrf.mxu0
    %1303 = vmatprep.mubr.f32.mxu0 0.0
    %1304 = vmatmul.mubr.f32.gmra.mxu0 %v1113
    %v1305 = vpop.f32.mrf.mxu0
    %v1306 = vadd.f32 %v982, %v1305
    %v1307 = vpop.f32.mrf.mxu0
    %1308 = vmatprep.mubr.f32.mxu0 0.0
    %1309 = vmatmul.mubr.f32.gmra.mxu0 %v1116
    %v1310 = vpop.f32.mrf.mxu0
    %v1311 = vadd.f32 %v987, %v1310
    %v1312 = vpop.f32.mrf.mxu0
    %1313 = vmatprep.mubr.f32.mxu0 0.0
    %1314 = vmatmul.mubr.f32.gmra.mxu0 %v1119
    %v1315 = vpop.f32.mrf.mxu0
    %v1316 = vadd.f32 %v992, %v1315
    %v1317 = vpop.f32.mrf.mxu0
    %1318 = vmatprep.mubr.f32.mxu0 0.0
    %1319 = vmatmul.mubr.f32.gmra.mxu0 %v1122
    %v1320 = vpop.f32.mrf.mxu0
    %v1321 = vadd.f32 %v997, %v1320
    %v1322 = vpop.f32.mrf.mxu0
    %1323 = vmatprep.mubr.f32.mxu0 0.0
    %1324 = vmatmul.mubr.f32.gmra.mxu0 %v1125
    %v1325 = vpop.f32.mrf.mxu0
    %v1326 = vadd.f32 %v1002, %v1325
    %v1327 = vpop.f32.mrf.mxu0
    %1328 = vmatprep.mubr.f32.mxu0 0.0
    %1329 = vmatmul.mubr.f32.gmra.mxu0 %v1128
    %v1330 = vpop.f32.mrf.mxu0
    %v1331 = vadd.f32 %v1007, %v1330
    %v1332 = vpop.f32.mrf.mxu0
    %1333 = vmatprep.mubr.f32.mxu0 0.0
    %1334 = vmatmul.mubr.f32.gmra.mxu0 %v1131
    %v1335 = vpop.f32.mrf.mxu0
    %v1336 = vadd.f32 %v1012, %v1335
    %v1337 = vpop.f32.mrf.mxu0
    %1338 = vmatprep.mubr.f32.mxu0 0.0
    %1339 = vmatmul.mubr.f32.gmra.mxu0 %v1134
    %v1340 = vpop.f32.mrf.mxu0
    %v1341 = vadd.f32 %v1017, %v1340
    %v1342 = vpop.f32.mrf.mxu0
    %1343 = vmatprep.mubr.f32.mxu0 0.0
    %1344 = vmatmul.mubr.f32.gmra.mxu0 %v1137
    %v1345 = vpop.f32.mrf.mxu0
    %v1346 = vadd.f32 %v1022, %v1345
    %v1347 = vpop.f32.mrf.mxu0
    %1348 = vmatprep.mubr.f32.mxu0 0.0
    %1349 = vmatmul.mubr.f32.gmra.mxu0 %v1140
    %v1350 = vpop.f32.mrf.mxu0
    %v1351 = vadd.f32 %v1027, %v1350
    %v1352 = vpop.f32.mrf.mxu0
    %1353 = vmatprep.mubr.f32.mxu0 0.0
    %1354 = vmatmul.mubr.f32.gmra.mxu0 %v1143
    %v1355 = vpop.f32.mrf.mxu0
    %v1356 = vadd.f32 %v1032, %v1355
    %v1357 = vpop.f32.mrf.mxu0
    %1358 = vmatprep.mubr.f32.mxu0 0.0
    %1359 = vmatmul.mubr.f32.gmra.mxu0 %v1146
    %v1360 = vpop.f32.mrf.mxu0
    %v1361 = vadd.f32 %v1037, %v1360
    %v1362 = vpop.f32.mrf.mxu0
    %1363 = vmatprep.mubr.f32.mxu0 0.0
    %1364 = vmatmul.mubr.f32.gmra.mxu0 %v1149
    %v1365 = vpop.f32.mrf.mxu0
    %v1366 = vadd.f32 %v1042, %v1365
    %v1367 = vpop.f32.mrf.mxu0
    %1368 = vmatprep.mubr.f32.mxu0 0.0
    %1369 = vmatmul.mubr.f32.gmra.mxu0 %v1152
    %v1370 = vpop.f32.mrf.mxu0
    %v1371 = vadd.f32 %v1047, %v1370
    %v1372 = vpop.f32.mrf.mxu0
    %1373 = vmatprep.mubr.f32.mxu0 0.0
    %1374 = vmatmul.mubr.f32.gmra.mxu0 %v1155
    %v1375 = vpop.f32.mrf.mxu0
    %v1376 = vadd.f32 %v1052, %v1375
    %v1377 = vpop.f32.mrf.mxu0
    %1378 = vmatprep.mubr.f32.mxu0 0.0
    %1379 = vmatmul.mubr.f32.gmra.mxu0 %v1158
    %v1380 = vpop.f32.mrf.mxu0
    %v1381 = vadd.f32 %v1057, %v1380
    %v1382 = vpop.f32.mrf.mxu0
    %1383 = vmatprep.mubr.f32.mxu0 0.0
    %1384 = vmatmul.mubr.f32.gmra.mxu0 %v1161
    %v1385 = vpop.f32.mrf.mxu0
    %v1386 = vadd.f32 %v1062, %v1385
    %v1387 = vpop.f32.mrf.mxu0
    %1388 = vmatprep.mubr.f32.mxu0 0.0
    %1389 = vmatmul.mubr.f32.gmra.mxu0 %v1164
    %v1390 = vpop.f32.mrf.mxu0
    %v1391 = vadd.f32 %v1067, %v1390
    %v1392 = vpop.f32.mrf.mxu0
    %1393 = vdwg.mxu0
    %1398 = vrot.lane.b32.xlu0 %v1256, 8
    %v1399 = vpop.permute.xlu0 %1398
    %1400 = vrot.lane.b32.xlu0 %v1261, 8
    %v1401 = vpop.permute.xlu0 %1400
    %1402 = vrot.lane.b32.xlu0 %v1266, 8
    %v1403 = vpop.permute.xlu0 %1402
    %1404 = vrot.lane.b32.xlu0 %v1271, 8
    %v1405 = vpop.permute.xlu0 %1404
    %1414 = vrot.lane.b32.xlu0 %v1276, 16
    %v1415 = vpop.permute.xlu0 %1414
    %1416 = vrot.lane.b32.xlu0 %v1281, 16
    %v1417 = vpop.permute.xlu0 %1416
    %1418 = vrot.lane.b32.xlu0 %v1286, 16
    %v1419 = vpop.permute.xlu0 %1418
    %1420 = vrot.lane.b32.xlu0 %v1291, 16
    %v1421 = vpop.permute.xlu0 %1420
    %1430 = vrot.lane.b32.xlu0 %v1296, 24
    %v1431 = vpop.permute.xlu0 %1430
    %1432 = vrot.lane.b32.xlu0 %v1301, 24
    %v1433 = vpop.permute.xlu0 %1432
    %1434 = vrot.lane.b32.xlu0 %v1306, 24
    %v1435 = vpop.permute.xlu0 %1434
    %1436 = vrot.lane.b32.xlu0 %v1311, 24
    %v1437 = vpop.permute.xlu0 %1436
    %1446 = vrot.lane.b32.xlu0 %v1316, 32
    %v1447 = vpop.permute.xlu0 %1446
    %1448 = vrot.lane.b32.xlu0 %v1321, 32
    %v1449 = vpop.permute.xlu0 %1448
    %1450 = vrot.lane.b32.xlu0 %v1326, 32
    %v1451 = vpop.permute.xlu0 %1450
    %1452 = vrot.lane.b32.xlu0 %v1331, 32
    %v1453 = vpop.permute.xlu0 %1452
    %1462 = vrot.lane.b32.xlu0 %v1336, 40
    %v1463 = vpop.permute.xlu0 %1462
    %1464 = vrot.lane.b32.xlu0 %v1341, 40
    %v1465 = vpop.permute.xlu0 %1464
    %1466 = vrot.lane.b32.xlu0 %v1346, 40
    %v1467 = vpop.permute.xlu0 %1466
    %1468 = vrot.lane.b32.xlu0 %v1351, 40
    %v1469 = vpop.permute.xlu0 %1468
    %1478 = vrot.lane.b32.xlu0 %v1356, 48
    %v1479 = vpop.permute.xlu0 %1478
    %1480 = vrot.lane.b32.xlu0 %v1361, 48
    %v1481 = vpop.permute.xlu0 %1480
    %1482 = vrot.lane.b32.xlu0 %v1366, 48
    %v1483 = vpop.permute.xlu0 %1482
    %1484 = vrot.lane.b32.xlu0 %v1371, 48
    %v1485 = vpop.permute.xlu0 %1484
    %1494 = vrot.lane.b32.xlu0 %v1376, 56
    %v1495 = vpop.permute.xlu0 %1494
    %1496 = vrot.lane.b32.xlu0 %v1381, 56
    %v1497 = vpop.permute.xlu0 %1496
    %1498 = vrot.lane.b32.xlu0 %v1386, 56
    %v1499 = vpop.permute.xlu0 %1498
    %1500 = vrot.lane.b32.xlu0 %v1391, 56
    %v1501 = vpop.permute.xlu0 %1500
    %v1506 = vsel %vm76, %v1236, %v1399
    %v1507 = vsel %vm76, %v1241, %v1401
    %v1508 = vsel %vm76, %v1246, %v1403
    %v1509 = vsel %vm76, %v1251, %v1405
    %v1510 = vsel %vm183, %v1506, %v1415
    %v1511 = vsel %vm183, %v1507, %v1417
    %v1512 = vsel %vm183, %v1508, %v1419
    %v1513 = vsel %vm183, %v1509, %v1421
    %vm1514 = vcmask 195584
    %v1515 = vsel %vm1514, %v1510, %v1431
    %v1516 = vsel %vm1514, %v1511, %v1433
    %v1517 = vsel %vm1514, %v1512, %v1435
    %v1518 = vsel %vm1514, %v1513, %v1437
    %vm1519 = vcmask 261120
    %v1520 = vsel %vm1519, %v1515, %v1447
    %v1521 = vsel %vm1519, %v1516, %v1449
    %v1522 = vsel %vm1519, %v1517, %v1451
    %v1523 = vsel %vm1519, %v1518, %v1453
    %vm1524 = vcmask 326656
    %v1525 = vsel %vm1524, %v1520, %v1463
    %v1526 = vsel %vm1524, %v1521, %v1465
    %v1527 = vsel %vm1524, %v1522, %v1467
    %v1528 = vsel %vm1524, %v1523, %v1469
    %vm1529 = vcmask 392192
    %v1530 = vsel %vm1529, %v1525, %v1479
    %v1531 = vsel %vm1529, %v1526, %v1481
    %v1532 = vsel %vm1529, %v1527, %v1483
    %v1533 = vsel %vm1529, %v1528, %v1485
    %vm1534 = vcmask 457728
    %v1535 = vsel %vm1534, %v1530, %v1495
    %v1536 = vsel %vm1534, %v1531, %v1497
    %v1537 = vsel %vm1534, %v1532, %v1499
    %v1538 = vsel %vm1534, %v1533, %v1501
    %v1539 = vld [vmem:[%s7] sm:$0xff]
    %v1540 = vld [vmem:[%s7 + $0x8] sm:$0xff]
    %v1541 = vld [vmem:[%s7 + $0x10] sm:$0xff]
    %v1542 = vld [vmem:[%s7 + $0x18] sm:$0xff]
    %v1543 = vadd.f32 %v1535, %v1539
    %v1544 = vadd.f32 %v1536, %v1540
    %v1545 = vadd.f32 %v1537, %v1541
    %v1546 = vadd.f32 %v1538, %v1542
    %v1547 = vld [vmem:[%s10] sm:$0xff]
    %v1548 = vld [vmem:[%s10 + $0x8] sm:$0xff]
    %v1549 = vld [vmem:[%s10 + $0x10] sm:$0xff]
    %v1550 = vld [vmem:[%s10 + $0x18] sm:$0xff]
    %v1551 = vld [vmem:[%s10 + $0x20] sm:$0xff]
    %v1552 = vld [vmem:[%s10 + $0x28] sm:$0xff]
    %v1553 = vld [vmem:[%s10 + $0x30] sm:$0xff]
    %v1554 = vld [vmem:[%s10 + $0x38] sm:$0xff]
    %s1555 = scalar_lea.vmem %s10, 64
    %v1556 = vld [vmem:[%s1555] sm:$0xff]
    %v1557 = vld [vmem:[%s1555 + $0x8] sm:$0xff]
    %v1558 = vld [vmem:[%s1555 + $0x10] sm:$0xff]
    %v1559 = vld [vmem:[%s1555 + $0x18] sm:$0xff]
    %v1560 = vld [vmem:[%s1555 + $0x20] sm:$0xff]
    %v1561 = vld [vmem:[%s1555 + $0x28] sm:$0xff]
    %v1562 = vld [vmem:[%s1555 + $0x30] sm:$0xff]
    %v1563 = vld [vmem:[%s1555 + $0x38] sm:$0xff]
    %v1564 = vld [vmem:[%s11] sm:$0xff]
    %v1565 = vld [vmem:[%s11 + $0x8] sm:$0xff]
    %v1566 = vld [vmem:[%s11 + $0x10] sm:$0xff]
    %v1567 = vld [vmem:[%s11 + $0x18] sm:$0xff]
    %v1568 = vld [vmem:[%s11 + $0x20] sm:$0xff]
    %s1569 = scalar_lea.vmem %s11, 40
    %v1570 = vld [vmem:[%s1569] sm:$0xff]
    %v1571 = vld [vmem:[%s1569 + $0x8] sm:$0xff]
    %v1572 = vld [vmem:[%s1569 + $0x10] sm:$0xff]
    %v1573 = vld [vmem:[%s1569 + $0x18] sm:$0xff]
    %v1574 = vld [vmem:[%s1569 + $0x20] sm:$0xff]
    %v1575 = vld [vmem:[%s8] sm:$0xff]
    %v1576 = vld [vmem:[%s8 + $0x8] sm:$0xff]
    %v1577 = vld [vmem:[%s8 + $0x10] sm:$0xff]
    %v1578 = vld [vmem:[%s8 + $0x18] sm:$0xff]
    %v1579 = vld [vmem:[%s9] sm:$0xff]
    %1582 = vrot.lane.b32.xlu0 %v1543, 8
    %v1583 = vpop.permute.xlu0 %1582
    %1584 = vrot.lane.b32.xlu0 %v1544, 8
    %v1585 = vpop.permute.xlu0 %1584
    %v1588 = vsel %vm76, 0.0, %v1583
    %v1589 = vsel %vm76, 0.0, %v1585
    %1590 = vrot.lane.b32.xlu0 %v1543, 120
    %v1591 = vpop.permute.xlu0 %1590
    %1592 = vrot.lane.b32.xlu0 %v1544, 120
    %v1593 = vpop.permute.xlu0 %1592
    %v1596 = vsel %vm1534, %v1591, 0.0
    %v1597 = vsel %vm1534, %v1593, 0.0
    %1600 = vrot.lane.b32.xlu0 %v1545, 8
    %v1601 = vpop.permute.xlu0 %1600
    %1602 = vrot.lane.b32.xlu0 %v1546, 8
    %v1603 = vpop.permute.xlu0 %1602
    %v1606 = vsel %vm76, 0.0, %v1601
    %v1607 = vsel %vm76, 0.0, %v1603
    %1608 = vrot.lane.b32.xlu0 %v1545, 120
    %v1609 = vpop.permute.xlu0 %1608
    %1610 = vrot.lane.b32.xlu0 %v1546, 120
    %v1611 = vpop.permute.xlu0 %1610
    %v1614 = vsel %vm1534, %v1609, 0.0
    %v1615 = vsel %vm1534, %v1611, 0.0
    %1617 = vset.pattern.permute.xlu0 24
    %1618 = vperm.xlu0 %1617, %v1576
    %v1619 = vpop.permute.xlu0 %1618
    %1622 = vset.pattern.permute.xlu0 24
    %1623 = vperm.xlu0 %1622, %v1578
    %v1624 = vpop.permute.xlu0 %1623
    %vm1626 = vcmask 785408
    %v1628 = vsel %vm1626, %v1575, 0
    %v1631 = vsel %vm1626, %v1577, 0
    %1633 = vmatprep.subr.mxu0 0.0
    %1634 = vmatpush1.msra.mxu0 0.0
    %1635 = vmatprep.subr.mxu0 0.0
    %1636 = vmatpush1.msra.mxu0 0.0
    %1637 = vmatprep.subr.mxu0 0.0
    %1638 = vmatpush1.msra.mxu0 0.0
    %1639 = vmatprep.subr.mxu0 0.0
    %1640 = vmatpush1.msra.mxu0 0.0
    %1641 = vmatprep.subr.mxu0 0.0
    %1642 = vmatpush1.msra.mxu0 %v1615
    %1643 = vmatprep.subr.mxu0 0.0
    %1644 = vmatpush1.msra.mxu0 %v1614
    %1645 = vmatprep.subr.mxu0 0.0
    %1646 = vmatpush1.msra.mxu0 %v1546
    %1647 = vmatprep.subr.mxu0 0.0
    %1648 = vmatpush1.msra.mxu0 %v1545
    %1649 = vmatprep.subr.mxu0 0.0
    %1650 = vmatpush1.msra.mxu0 %v1607
    %1651 = vmatprep.subr.mxu0 0.0
    %1652 = vmatpush1.msra.mxu0 %v1606
    %1653 = vmatprep.subr.mxu0 0.0
    %1654 = vmatpush1.msra.mxu0 %v1597
    %1655 = vmatprep.subr.mxu0 0.0
    %1656 = vmatpush1.msra.mxu0 %v1596
    %1657 = vmatprep.subr.mxu0 0.0
    %1658 = vmatpush1.msra.mxu0 %v1544
    %1659 = vmatprep.subr.mxu0 0.0
    %1660 = vmatpush1.msra.mxu0 %v1543
    %1661 = vmatprep.subr.mxu0 0.0
    %1662 = vmatpush1.msra.mxu0 %v1589
    %1663 = vmatprep.subr.mxu0 0.0
    %1664 = vmatpush1.msra.mxu0 %v1588
    %1665 = vmatprep.subr.mxu0 0.0
    %1666 = vmatpush2.msra.mxu0 0.0
    %1667 = vmatprep.subr.mxu0 0.0
    %1668 = vmatpush2.msra.mxu0 0.0
    %1669 = vmatprep.subr.mxu0 0.0
    %1670 = vmatpush2.msra.mxu0 0.0
    %1671 = vmatprep.subr.mxu0 0.0
    %1672 = vmatpush2.msra.mxu0 0.0
    %1673 = vmatprep.subr.mxu0 0.0
    %1674 = vmatpush2.msra.mxu0 0.0
    %1675 = vmatprep.subr.mxu0 0.0
    %1676 = vmatpush2.msra.mxu0 0.0
    %1677 = vmatprep.subr.mxu0 0.0
    %1678 = vmatpush2.msra.mxu0 0.0
    %1679 = vmatprep.subr.mxu0 0.0
    %1680 = vmatpush2.msra.mxu0 0.0
    %1681 = vmatprep.subr.mxu0 0.0
    %1682 = vmatpush2.msra.mxu0 0.0
    %1683 = vmatprep.subr.mxu0 0.0
    %1684 = vmatpush2.msra.mxu0 0.0
    %1685 = vmatprep.subr.mxu0 0.0
    %1686 = vmatpush2.msra.mxu0 0.0
    %1687 = vmatprep.subr.mxu0 0.0
    %1688 = vmatpush2.msra.mxu0 0.0
    %1689 = vmatprep.subr.mxu0 0.0
    %1690 = vmatpush2.msra.mxu0 0.0
    %1691 = vmatprep.subr.mxu0 0.0
    %1692 = vmatpush2.msra.mxu0 0.0
    %1693 = vmatprep.subr.mxu0 0.0
    %1694 = vmatpush2.msra.mxu0 0.0
    %1695 = vmatprep.subr.mxu0 0.0
    %1696 = vmatpush2.msra.mxu0 0.0
    %1697 = vmatprep.mubr.f32.mxu0 0.0
    %1698 = vmatmul.mubr.f32.gmra.mxu0 %v1628
    %v1699 = vpop.f32.mrf.mxu0
    %v1700 = vadd.f32 %v1619, %v1699
    %v1701 = vpop.f32.mrf.mxu0
    %1702 = vmatprep.mubr.f32.mxu0 0.0
    %1703 = vmatmul.mubr.f32.gmra.mxu0 %v1631
    %v1704 = vpop.f32.mrf.mxu0
    %v1705 = vadd.f32 %v1624, %v1704
    %v1706 = vpop.f32.mrf.mxu0
    %1707 = vdwg.mxu0
    %1709 = vset.pattern.permute.xlu0 48
    %1710 = vperm.xlu0 %1709, %v1579
    %v1711 = vpop.permute.xlu0 %1710
    %v1713 = vsel %vm183, %v1579, 0
    %1715 = vmatprep.subr.mxu0 0.0
    %1716 = vmatpush1.msra.mxu0 0.0
    %1717 = vmatprep.subr.mxu0 0.0
    %1718 = vmatpush1.msra.mxu0 0.0
    %1719 = vmatprep.subr.mxu0 0.0
    %1720 = vmatpush1.msra.mxu0 0.0
    %1721 = vmatprep.subr.mxu0 0.0
    %1722 = vmatpush1.msra.mxu0 0.0
    %1723 = vmatprep.subr.mxu0 0.0
    %1724 = vmatpush1.msra.mxu0 0.0
    %1725 = vmatprep.subr.mxu0 0.0
    %1726 = vmatpush1.msra.mxu0 0.0
    %1727 = vmatprep.subr.mxu0 0.0
    %1728 = vmatpush1.msra.mxu0 0.0
    %1729 = vmatprep.subr.mxu0 0.0
    %1730 = vmatpush1.msra.mxu0 0.0
    %1731 = vmatprep.subr.mxu0 0.0
    %1732 = vmatpush1.msra.mxu0 0.0
    %1733 = vmatprep.subr.mxu0 0.0
    %1734 = vmatpush1.msra.mxu0 0.0
    %1735 = vmatprep.subr.mxu0 0.0
    %1736 = vmatpush1.msra.mxu0 0.0
    %1737 = vmatprep.subr.mxu0 0.0
    %1738 = vmatpush1.msra.mxu0 0.0
    %1739 = vmatprep.subr.mxu0 0.0
    %1740 = vmatpush1.msra.mxu0 0.0
    %1741 = vmatprep.subr.mxu0 0.0
    %1742 = vmatpush1.msra.mxu0 0.0
    %1743 = vmatprep.subr.mxu0 0.0
    %1744 = vmatpush1.msra.mxu0 %v1546
    %1745 = vmatprep.subr.mxu0 0.0
    %1746 = vmatpush1.msra.mxu0 %v1545
    %1747 = vmatprep.subr.mxu0 0.0
    %1748 = vmatpush2.msra.mxu0 0.0
    %1749 = vmatprep.subr.mxu0 0.0
    %1750 = vmatpush2.msra.mxu0 0.0
    %1751 = vmatprep.subr.mxu0 0.0
    %1752 = vmatpush2.msra.mxu0 0.0
    %1753 = vmatprep.subr.mxu0 0.0
    %1754 = vmatpush2.msra.mxu0 0.0
    %1755 = vmatprep.subr.mxu0 0.0
    %1756 = vmatpush2.msra.mxu0 0.0
    %1757 = vmatprep.subr.mxu0 0.0
    %1758 = vmatpush2.msra.mxu0 0.0
    %1759 = vmatprep.subr.mxu0 0.0
    %1760 = vmatpush2.msra.mxu0 0.0
    %1761 = vmatprep.subr.mxu0 0.0
    %1762 = vmatpush2.msra.mxu0 0.0
    %1763 = vmatprep.subr.mxu0 0.0
    %1764 = vmatpush2.msra.mxu0 0.0
    %1765 = vmatprep.subr.mxu0 0.0
    %1766 = vmatpush2.msra.mxu0 0.0
    %1767 = vmatprep.subr.mxu0 0.0
    %1768 = vmatpush2.msra.mxu0 0.0
    %1769 = vmatprep.subr.mxu0 0.0
    %1770 = vmatpush2.msra.mxu0 0.0
    %1771 = vmatprep.subr.mxu0 0.0
    %1772 = vmatpush2.msra.mxu0 0.0
    %1773 = vmatprep.subr.mxu0 0.0
    %1774 = vmatpush2.msra.mxu0 0.0
    %1775 = vmatprep.subr.mxu0 0.0
    %1776 = vmatpush2.msra.mxu0 0.0
    %1777 = vmatprep.subr.mxu0 0.0
    %1778 = vmatpush2.msra.mxu0 0.0
    %1779 = vmatprep.mubr.f32.mxu0 0.0
    %1780 = vmatmul.mubr.f32.gmra.mxu0 %v1713
    %v1781 = vpop.f32.mrf.mxu0
    %v1782 = vadd.f32 %v1711, %v1781
    %v1783 = vpop.f32.mrf.mxu0
    %1784 = vdwg.mxu0
    %v1785 = vmax.f32 %v1782, 0.0
    %vm1786 = vcmask 523264
    %v1788 = vsel %vm1786, %v1785, 0
    %1790 = vmatprep.subr.mxu0 0.0
    %1791 = vmatpush1.msra.mxu0 0.0
    %1792 = vmatprep.subr.mxu0 0.0
    %1793 = vmatpush1.msra.mxu0 0.0
    %1794 = vmatprep.subr.mxu0 0.0
    %1795 = vmatpush1.msra.mxu0 0.0
    %1796 = vmatprep.subr.mxu0 0.0
    %1797 = vmatpush1.msra.mxu0 0.0
    %1798 = vmatprep.subr.mxu0 0.0
    %1799 = vmatpush1.msra.mxu0 0.0
    %1800 = vmatprep.subr.mxu0 0.0
    %1801 = vmatpush1.msra.mxu0 0.0
    %1802 = vmatprep.subr.mxu0 0.0
    %1803 = vmatpush1.msra.mxu0 0.0
    %1804 = vmatprep.subr.mxu0 0.0
    %1805 = vmatpush1.msra.mxu0 0.0
    %1806 = vmatprep.subr.mxu0 0.0
    %1807 = vmatpush1.msra.mxu0 %v1554
    %1808 = vmatprep.subr.mxu0 0.0
    %1809 = vmatpush1.msra.mxu0 %v1553
    %1810 = vmatprep.subr.mxu0 0.0
    %1811 = vmatpush1.msra.mxu0 %v1552
    %1812 = vmatprep.subr.mxu0 0.0
    %1813 = vmatpush1.msra.mxu0 %v1551
    %1814 = vmatprep.subr.mxu0 0.0
    %1815 = vmatpush1.msra.mxu0 %v1550
    %1816 = vmatprep.subr.mxu0 0.0
    %1817 = vmatpush1.msra.mxu0 %v1549
    %1818 = vmatprep.subr.mxu0 0.0
    %1819 = vmatpush1.msra.mxu0 %v1548
    %1820 = vmatprep.subr.mxu0 0.0
    %1821 = vmatpush1.msra.mxu0 %v1547
    %1822 = vmatprep.subr.mxu0 0.0
    %1823 = vmatpush2.msra.mxu0 0.0
    %1824 = vmatprep.subr.mxu0 0.0
    %1825 = vmatpush2.msra.mxu0 0.0
    %1826 = vmatprep.subr.mxu0 0.0
    %1827 = vmatpush2.msra.mxu0 0.0
    %1828 = vmatprep.subr.mxu0 0.0
    %1829 = vmatpush2.msra.mxu0 0.0
    %1830 = vmatprep.subr.mxu0 0.0
    %1831 = vmatpush2.msra.mxu0 0.0
    %1832 = vmatprep.subr.mxu0 0.0
    %1833 = vmatpush2.msra.mxu0 0.0
    %1834 = vmatprep.subr.mxu0 0.0
    %1835 = vmatpush2.msra.mxu0 0.0
    %1836 = vmatprep.subr.mxu0 0.0
    %1837 = vmatpush2.msra.mxu0 0.0
    %1838 = vmatprep.subr.mxu0 0.0
    %1839 = vmatpush2.msra.mxu0 0.0
    %1840 = vmatprep.subr.mxu0 0.0
    %1841 = vmatpush2.msra.mxu0 0.0
    %1842 = vmatprep.subr.mxu0 0.0
    %1843 = vmatpush2.msra.mxu0 0.0
    %1844 = vmatprep.subr.mxu0 0.0
    %1845 = vmatpush2.msra.mxu0 0.0
    %1846 = vmatprep.subr.mxu0 0.0
    %1847 = vmatpush2.msra.mxu0 0.0
    %1848 = vmatprep.subr.mxu0 0.0
    %1849 = vmatpush2.msra.mxu0 0.0
    %1850 = vmatprep.subr.mxu0 0.0
    %1851 = vmatpush2.msra.mxu0 0.0
    %1852 = vmatprep.subr.mxu0 0.0
    %1853 = vmatpush2.msra.mxu0 0.0
    %1854 = vmatprep.mubr.f32.mxu0 0.0
    %1855 = vmatmul.mubr.f32.gmra.mxu0 %v1788
    %v1856 = vpop.f32.mrf.mxu0
    %v1857 = vadd.f32 0.0, %v1856
    %v1858 = vpop.f32.mrf.mxu0
    %1859 = vdwg.mxu0
    %1860 = vmatprep.subr.mxu0 0.0
    %1861 = vmatpush1.msra.mxu0 0.0
    %1862 = vmatprep.subr.mxu0 0.0
    %1863 = vmatpush1.msra.mxu0 0.0
    %1864 = vmatprep.subr.mxu0 0.0
    %1865 = vmatpush1.msra.mxu0 0.0
    %1866 = vmatprep.subr.mxu0 0.0
    %1867 = vmatpush1.msra.mxu0 0.0
    %1868 = vmatprep.subr.mxu0 0.0
    %1869 = vmatpush1.msra.mxu0 0.0
    %1870 = vmatprep.subr.mxu0 0.0
    %1871 = vmatpush1.msra.mxu0 0.0
    %1872 = vmatprep.subr.mxu0 0.0
    %1873 = vmatpush1.msra.mxu0 0.0
    %1874 = vmatprep.subr.mxu0 0.0
    %1875 = vmatpush1.msra.mxu0 0.0
    %1876 = vmatprep.subr.mxu0 0.0
    %1877 = vmatpush1.msra.mxu0 %v1563
    %1878 = vmatprep.subr.mxu0 0.0
    %1879 = vmatpush1.msra.mxu0 %v1562
    %1880 = vmatprep.subr.mxu0 0.0
    %1881 = vmatpush1.msra.mxu0 %v1561
    %1882 = vmatprep.subr.mxu0 0.0
    %1883 = vmatpush1.msra.mxu0 %v1560
    %1884 = vmatprep.subr.mxu0 0.0
    %1885 = vmatpush1.msra.mxu0 %v1559
    %1886 = vmatprep.subr.mxu0 0.0
    %1887 = vmatpush1.msra.mxu0 %v1558
    %1888 = vmatprep.subr.mxu0 0.0
    %1889 = vmatpush1.msra.mxu0 %v1557
    %1890 = vmatprep.subr.mxu0 0.0
    %1891 = vmatpush1.msra.mxu0 %v1556
    %1892 = vmatprep.subr.mxu0 0.0
    %1893 = vmatpush2.msra.mxu0 0.0
    %1894 = vmatprep.subr.mxu0 0.0
    %1895 = vmatpush2.msra.mxu0 0.0
    %1896 = vmatprep.subr.mxu0 0.0
    %1897 = vmatpush2.msra.mxu0 0.0
    %1898 = vmatprep.subr.mxu0 0.0
    %1899 = vmatpush2.msra.mxu0 0.0
    %1900 = vmatprep.subr.mxu0 0.0
    %1901 = vmatpush2.msra.mxu0 0.0
    %1902 = vmatprep.subr.mxu0 0.0
    %1903 = vmatpush2.msra.mxu0 0.0
    %1904 = vmatprep.subr.mxu0 0.0
    %1905 = vmatpush2.msra.mxu0 0.0
    %1906 = vmatprep.subr.mxu0 0.0
    %1907 = vmatpush2.msra.mxu0 0.0
    %1908 = vmatprep.subr.mxu0 0.0
    %1909 = vmatpush2.msra.mxu0 0.0
    %1910 = vmatprep.subr.mxu0 0.0
    %1911 = vmatpush2.msra.mxu0 0.0
    %1912 = vmatprep.subr.mxu0 0.0
    %1913 = vmatpush2.msra.mxu0 0.0
    %1914 = vmatprep.subr.mxu0 0.0
    %1915 = vmatpush2.msra.mxu0 0.0
    %1916 = vmatprep.subr.mxu0 0.0
    %1917 = vmatpush2.msra.mxu0 0.0
    %1918 = vmatprep.subr.mxu0 0.0
    %1919 = vmatpush2.msra.mxu0 0.0
    %1920 = vmatprep.subr.mxu0 0.0
    %1921 = vmatpush2.msra.mxu0 0.0
    %1922 = vmatprep.subr.mxu0 0.0
    %1923 = vmatpush2.msra.mxu0 0.0
    %1924 = vmatprep.mubr.f32.mxu0 0.0
    %1925 = vmatmul.mubr.f32.gmra.mxu0 %v1788
    %v1926 = vpop.f32.mrf.mxu0
    %v1927 = vadd.f32 0.0, %v1926
    %v1928 = vpop.f32.mrf.mxu0
    %1929 = vdwg.mxu0
    %1930 = vset.pattern.permute.xlu0 49
    %1931 = vperm.xlu0 %1930, %v1579
    %v1932 = vpop.permute.xlu0 %1931
    %1934 = vrot.lane.b32.xlu0 %v1579, 112
    %v1935 = vpop.permute.xlu0 %1934
    %v1936 = vsel %vm183, %v1935, 0
    %1938 = vmatprep.subr.mxu0 0.0
    %1939 = vmatpush1.msra.mxu0 0.0
    %1940 = vmatprep.subr.mxu0 0.0
    %1941 = vmatpush1.msra.mxu0 0.0
    %1942 = vmatprep.subr.mxu0 0.0
    %1943 = vmatpush1.msra.mxu0 0.0
    %1944 = vmatprep.subr.mxu0 0.0
    %1945 = vmatpush1.msra.mxu0 0.0
    %1946 = vmatprep.subr.mxu0 0.0
    %1947 = vmatpush1.msra.mxu0 0.0
    %1948 = vmatprep.subr.mxu0 0.0
    %1949 = vmatpush1.msra.mxu0 0.0
    %1950 = vmatprep.subr.mxu0 0.0
    %1951 = vmatpush1.msra.mxu0 0.0
    %1952 = vmatprep.subr.mxu0 0.0
    %1953 = vmatpush1.msra.mxu0 0.0
    %1954 = vmatprep.subr.mxu0 0.0
    %1955 = vmatpush1.msra.mxu0 0.0
    %1956 = vmatprep.subr.mxu0 0.0
    %1957 = vmatpush1.msra.mxu0 0.0
    %1958 = vmatprep.subr.mxu0 0.0
    %1959 = vmatpush1.msra.mxu0 0.0
    %1960 = vmatprep.subr.mxu0 0.0
    %1961 = vmatpush1.msra.mxu0 0.0
    %1962 = vmatprep.subr.mxu0 0.0
    %1963 = vmatpush1.msra.mxu0 0.0
    %1964 = vmatprep.subr.mxu0 0.0
    %1965 = vmatpush1.msra.mxu0 0.0
    %1966 = vmatprep.subr.mxu0 0.0
    %1967 = vmatpush1.msra.mxu0 %v1927
    %1968 = vmatprep.subr.mxu0 0.0
    %1969 = vmatpush1.msra.mxu0 %v1857
    %1970 = vmatprep.subr.mxu0 0.0
    %1971 = vmatpush2.msra.mxu0 0.0
    %1972 = vmatprep.subr.mxu0 0.0
    %1973 = vmatpush2.msra.mxu0 0.0
    %1974 = vmatprep.subr.mxu0 0.0
    %1975 = vmatpush2.msra.mxu0 0.0
    %1976 = vmatprep.subr.mxu0 0.0
    %1977 = vmatpush2.msra.mxu0 0.0
    %1978 = vmatprep.subr.mxu0 0.0
    %1979 = vmatpush2.msra.mxu0 0.0
    %1980 = vmatprep.subr.mxu0 0.0
    %1981 = vmatpush2.msra.mxu0 0.0
    %1982 = vmatprep.subr.mxu0 0.0
    %1983 = vmatpush2.msra.mxu0 0.0
    %1984 = vmatprep.subr.mxu0 0.0
    %1985 = vmatpush2.msra.mxu0 0.0
    %1986 = vmatprep.subr.mxu0 0.0
    %1987 = vmatpush2.msra.mxu0 0.0
    %1988 = vmatprep.subr.mxu0 0.0
    %1989 = vmatpush2.msra.mxu0 0.0
    %1990 = vmatprep.subr.mxu0 0.0
    %1991 = vmatpush2.msra.mxu0 0.0
    %1992 = vmatprep.subr.mxu0 0.0
    %1993 = vmatpush2.msra.mxu0 0.0
    %1994 = vmatprep.subr.mxu0 0.0
    %1995 = vmatpush2.msra.mxu0 0.0
    %1996 = vmatprep.subr.mxu0 0.0
    %1997 = vmatpush2.msra.mxu0 0.0
    %1998 = vmatprep.subr.mxu0 0.0
    %1999 = vmatpush2.msra.mxu0 0.0
    %2000 = vmatprep.subr.mxu0 0.0
    %2001 = vmatpush2.msra.mxu0 0.0
    %2002 = vmatprep.mubr.f32.mxu0 0.0
    %2003 = vmatmul.mubr.f32.gmra.mxu0 %v1936
    %v2004 = vpop.f32.mrf.mxu0
    %v2005 = vadd.f32 %v1932, %v2004
    %v2006 = vpop.f32.mrf.mxu0
    %2007 = vdwg.mxu0
    %v2008 = vmax.f32 %v2005, 0.0
    %2009 = vset.pattern.permute.xlu0 50
    %2010 = vperm.xlu0 %2009, %v1579
    %v2011 = vpop.permute.xlu0 %2010
    %2013 = vrot.lane.b32.xlu0 %v1579, 96
    %v2014 = vpop.permute.xlu0 %2013
    %v2015 = vsel %vm183, %v2014, 0
    %2017 = vmatprep.subr.mxu0 0.0
    %2018 = vmatpush1.msra.mxu0 0.0
    %2019 = vmatprep.subr.mxu0 0.0
    %2020 = vmatpush1.msra.mxu0 0.0
    %2021 = vmatprep.subr.mxu0 0.0
    %2022 = vmatpush1.msra.mxu0 0.0
    %2023 = vmatprep.subr.mxu0 0.0
    %2024 = vmatpush1.msra.mxu0 0.0
    %2025 = vmatprep.subr.mxu0 0.0
    %2026 = vmatpush1.msra.mxu0 0.0
    %2027 = vmatprep.subr.mxu0 0.0
    %2028 = vmatpush1.msra.mxu0 0.0
    %2029 = vmatprep.subr.mxu0 0.0
    %2030 = vmatpush1.msra.mxu0 0.0
    %2031 = vmatprep.subr.mxu0 0.0
    %2032 = vmatpush1.msra.mxu0 0.0
    %2033 = vmatprep.subr.mxu0 0.0
    %2034 = vmatpush1.msra.mxu0 0.0
    %2035 = vmatprep.subr.mxu0 0.0
    %2036 = vmatpush1.msra.mxu0 0.0
    %2037 = vmatprep.subr.mxu0 0.0
    %2038 = vmatpush1.msra.mxu0 0.0
    %2039 = vmatprep.subr.mxu0 0.0
    %2040 = vmatpush1.msra.mxu0 0.0
    %2041 = vmatprep.subr.mxu0 0.0
    %2042 = vmatpush1.msra.mxu0 0.0
    %2043 = vmatprep.subr.mxu0 0.0
    %2044 = vmatpush1.msra.mxu0 0.0
    %2045 = vmatprep.subr.mxu0 0.0
    %2046 = vmatpush1.msra.mxu0 %v1927
    %2047 = vmatprep.subr.mxu0 0.0
    %2048 = vmatpush1.msra.mxu0 %v1857
    %2049 = vmatprep.subr.mxu0 0.0
    %2050 = vmatpush2.msra.mxu0 0.0
    %2051 = vmatprep.subr.mxu0 0.0
    %2052 = vmatpush2.msra.mxu0 0.0
    %2053 = vmatprep.subr.mxu0 0.0
    %2054 = vmatpush2.msra.mxu0 0.0
    %2055 = vmatprep.subr.mxu0 0.0
    %2056 = vmatpush2.msra.mxu0 0.0
    %2057 = vmatprep.subr.mxu0 0.0
    %2058 = vmatpush2.msra.mxu0 0.0
    %2059 = vmatprep.subr.mxu0 0.0
    %2060 = vmatpush2.msra.mxu0 0.0
    %2061 = vmatprep.subr.mxu0 0.0
    %2062 = vmatpush2.msra.mxu0 0.0
    %2063 = vmatprep.subr.mxu0 0.0
    %2064 = vmatpush2.msra.mxu0 0.0
    %2065 = vmatprep.subr.mxu0 0.0
    %2066 = vmatpush2.msra.mxu0 0.0
    %2067 = vmatprep.subr.mxu0 0.0
    %2068 = vmatpush2.msra.mxu0 0.0
    %2069 = vmatprep.subr.mxu0 0.0
    %2070 = vmatpush2.msra.mxu0 0.0
    %2071 = vmatprep.subr.mxu0 0.0
    %2072 = vmatpush2.msra.mxu0 0.0
    %2073 = vmatprep.subr.mxu0 0.0
    %2074 = vmatpush2.msra.mxu0 0.0
    %2075 = vmatprep.subr.mxu0 0.0
    %2076 = vmatpush2.msra.mxu0 0.0
    %2077 = vmatprep.subr.mxu0 0.0
    %2078 = vmatpush2.msra.mxu0 0.0
    %2079 = vmatprep.subr.mxu0 0.0
    %2080 = vmatpush2.msra.mxu0 0.0
    %2081 = vmatprep.mubr.f32.mxu0 0.0
    %2082 = vmatmul.mubr.f32.gmra.mxu0 %v2015
    %v2083 = vpop.f32.mrf.mxu0
    %v2084 = vadd.f32 %v2011, %v2083
    %v2085 = vpop.f32.mrf.mxu0
    %2086 = vdwg.mxu0
    %v2087 = vmax.f32 %v2084, 0.0
    %v2089 = vsel %vm1524, %v2087, 0
    %2091 = vmatprep.subr.mxu0 0.0
    %2092 = vmatpush1.msra.mxu0 0.0
    %2093 = vmatprep.subr.mxu0 0.0
    %2094 = vmatpush1.msra.mxu0 0.0
    %2095 = vmatprep.subr.mxu0 0.0
    %2096 = vmatpush1.msra.mxu0 0.0
    %2097 = vmatprep.subr.mxu0 0.0
    %2098 = vmatpush1.msra.mxu0 0.0
    %2099 = vmatprep.subr.mxu0 0.0
    %2100 = vmatpush1.msra.mxu0 0.0
    %2101 = vmatprep.subr.mxu0 0.0
    %2102 = vmatpush1.msra.mxu0 0.0
    %2103 = vmatprep.subr.mxu0 0.0
    %2104 = vmatpush1.msra.mxu0 0.0
    %2105 = vmatprep.subr.mxu0 0.0
    %2106 = vmatpush1.msra.mxu0 0.0
    %2107 = vmatprep.subr.mxu0 0.0
    %2108 = vmatpush1.msra.mxu0 0.0
    %2109 = vmatprep.subr.mxu0 0.0
    %2110 = vmatpush1.msra.mxu0 0.0
    %2111 = vmatprep.subr.mxu0 0.0
    %2112 = vmatpush1.msra.mxu0 0.0
    %2113 = vmatprep.subr.mxu0 0.0
    %2114 = vmatpush1.msra.mxu0 %v1574
    %2115 = vmatprep.subr.mxu0 0.0
    %2116 = vmatpush1.msra.mxu0 %v1573
    %2117 = vmatprep.subr.mxu0 0.0
    %2118 = vmatpush1.msra.mxu0 %v1572
    %2119 = vmatprep.subr.mxu0 0.0
    %2120 = vmatpush1.msra.mxu0 %v1571
    %2121 = vmatprep.subr.mxu0 0.0
    %2122 = vmatpush1.msra.mxu0 %v1570
    %2123 = vmatprep.subr.mxu0 0.0
    %2124 = vmatpush2.msra.mxu0 0.0
    %2125 = vmatprep.subr.mxu0 0.0
    %2126 = vmatpush2.msra.mxu0 0.0
    %2127 = vmatprep.subr.mxu0 0.0
    %2128 = vmatpush2.msra.mxu0 0.0
    %2129 = vmatprep.subr.mxu0 0.0
    %2130 = vmatpush2.msra.mxu0 0.0
    %2131 = vmatprep.subr.mxu0 0.0
    %2132 = vmatpush2.msra.mxu0 0.0
    %2133 = vmatprep.subr.mxu0 0.0
    %2134 = vmatpush2.msra.mxu0 0.0
    %2135 = vmatprep.subr.mxu0 0.0
    %2136 = vmatpush2.msra.mxu0 0.0
    %2137 = vmatprep.subr.mxu0 0.0
    %2138 = vmatpush2.msra.mxu0 0.0
    %2139 = vmatprep.subr.mxu0 0.0
    %2140 = vmatpush2.msra.mxu0 0.0
    %2141 = vmatprep.subr.mxu0 0.0
    %2142 = vmatpush2.msra.mxu0 0.0
    %2143 = vmatprep.subr.mxu0 0.0
    %2144 = vmatpush2.msra.mxu0 0.0
    %2145 = vmatprep.subr.mxu0 0.0
    %2146 = vmatpush2.msra.mxu0 0.0
    %2147 = vmatprep.subr.mxu0 0.0
    %2148 = vmatpush2.msra.mxu0 0.0
    %2149 = vmatprep.subr.mxu0 0.0
    %2150 = vmatpush2.msra.mxu0 0.0
    %2151 = vmatprep.subr.mxu0 0.0
    %2152 = vmatpush2.msra.mxu0 0.0
    %2153 = vmatprep.subr.mxu0 0.0
    %2154 = vmatpush2.msra.mxu0 0.0
    %2155 = vmatprep.mubr.f32.mxu0 0.0
    %2156 = vmatmul.mubr.f32.gmra.mxu0 %v2089
    %v2157 = vpop.f32.mrf.mxu0
    %v2158 = vadd.f32 0.0, %v2157
    %v2159 = vpop.f32.mrf.mxu0
    %2160 = vdwg.mxu0
    %v2162 = vsel %vm1524, %v2008, 0
    %2164 = vmatprep.subr.mxu0 0.0
    %2165 = vmatpush1.msra.mxu0 0.0
    %2166 = vmatprep.subr.mxu0 0.0
    %2167 = vmatpush1.msra.mxu0 0.0
    %2168 = vmatprep.subr.mxu0 0.0
    %2169 = vmatpush1.msra.mxu0 0.0
    %2170 = vmatprep.subr.mxu0 0.0
    %2171 = vmatpush1.msra.mxu0 0.0
    %2172 = vmatprep.subr.mxu0 0.0
    %2173 = vmatpush1.msra.mxu0 0.0
    %2174 = vmatprep.subr.mxu0 0.0
    %2175 = vmatpush1.msra.mxu0 0.0
    %2176 = vmatprep.subr.mxu0 0.0
    %2177 = vmatpush1.msra.mxu0 0.0
    %2178 = vmatprep.subr.mxu0 0.0
    %2179 = vmatpush1.msra.mxu0 0.0
    %2180 = vmatprep.subr.mxu0 0.0
    %2181 = vmatpush1.msra.mxu0 0.0
    %2182 = vmatprep.subr.mxu0 0.0
    %2183 = vmatpush1.msra.mxu0 0.0
    %2184 = vmatprep.subr.mxu0 0.0
    %2185 = vmatpush1.msra.mxu0 0.0
    %2186 = vmatprep.subr.mxu0 0.0
    %2187 = vmatpush1.msra.mxu0 %v1568
    %2188 = vmatprep.subr.mxu0 0.0
    %2189 = vmatpush1.msra.mxu0 %v1567
    %2190 = vmatprep.subr.mxu0 0.0
    %2191 = vmatpush1.msra.mxu0 %v1566
    %2192 = vmatprep.subr.mxu0 0.0
    %2193 = vmatpush1.msra.mxu0 %v1565
    %2194 = vmatprep.subr.mxu0 0.0
    %2195 = vmatpush1.msra.mxu0 %v1564
    %2196 = vmatprep.subr.mxu0 0.0
    %2197 = vmatpush2.msra.mxu0 0.0
    %2198 = vmatprep.subr.mxu0 0.0
    %2199 = vmatpush2.msra.mxu0 0.0
    %2200 = vmatprep.subr.mxu0 0.0
    %2201 = vmatpush2.msra.mxu0 0.0
    %2202 = vmatprep.subr.mxu0 0.0
    %2203 = vmatpush2.msra.mxu0 0.0
    %2204 = vmatprep.subr.mxu0 0.0
    %2205 = vmatpush2.msra.mxu0 0.0
    %2206 = vmatprep.subr.mxu0 0.0
    %2207 = vmatpush2.msra.mxu0 0.0
    %2208 = vmatprep.subr.mxu0 0.0
    %2209 = vmatpush2.msra.mxu0 0.0
    %2210 = vmatprep.subr.mxu0 0.0
    %2211 = vmatpush2.msra.mxu0 0.0
    %2212 = vmatprep.subr.mxu0 0.0
    %2213 = vmatpush2.msra.mxu0 0.0
    %2214 = vmatprep.subr.mxu0 0.0
    %2215 = vmatpush2.msra.mxu0 0.0
    %2216 = vmatprep.subr.mxu0 0.0
    %2217 = vmatpush2.msra.mxu0 0.0
    %2218 = vmatprep.subr.mxu0 0.0
    %2219 = vmatpush2.msra.mxu0 0.0
    %2220 = vmatprep.subr.mxu0 0.0
    %2221 = vmatpush2.msra.mxu0 0.0
    %2222 = vmatprep.subr.mxu0 0.0
    %2223 = vmatpush2.msra.mxu0 0.0
    %2224 = vmatprep.subr.mxu0 0.0
    %2225 = vmatpush2.msra.mxu0 0.0
    %2226 = vmatprep.subr.mxu0 0.0
    %2227 = vmatpush2.msra.mxu0 0.0
    %2228 = vmatprep.mubr.f32.mxu0 0.0
    %2229 = vmatmul.mubr.f32.gmra.mxu0 %v2162
    %v2230 = vpop.f32.mrf.mxu0
    %v2231 = vadd.f32 %v2158, %v2230
    %v2232 = vpop.f32.mrf.mxu0
    %2233 = vdwg.mxu0
    %v2234 = vadd.f32 %v1785, %v2231
    %2235 = vrot.lane.b32.xlu0 %v1576, 112
    %v2236 = vpop.permute.xlu0 %2235
    %2237 = vrot.lane.b32.xlu0 %v1578, 112
    %v2238 = vpop.permute.xlu0 %2237
    %v2239 = vsel %vm76, %v2236, 0
    %v2241 = vsel %vm76, %v2238, 0
    %2243 = vmatprep.subr.mxu0 0.0
    %2244 = vmatpush1.msra.mxu0 0.0
    %2245 = vmatprep.subr.mxu0 0.0
    %2246 = vmatpush1.msra.mxu0 0.0
    %2247 = vmatprep.subr.mxu0 0.0
    %2248 = vmatpush1.msra.mxu0 0.0
    %2249 = vmatprep.subr.mxu0 0.0
    %2250 = vmatpush1.msra.mxu0 0.0
    %2251 = vmatprep.subr.mxu0 0.0
    %2252 = vmatpush1.msra.mxu0 0.0
    %2253 = vmatprep.subr.mxu0 0.0
    %2254 = vmatpush1.msra.mxu0 0.0
    %2255 = vmatprep.subr.mxu0 0.0
    %2256 = vmatpush1.msra.mxu0 0.0
    %2257 = vmatprep.subr.mxu0 0.0
    %2258 = vmatpush1.msra.mxu0 0.0
    %2259 = vmatprep.subr.mxu0 0.0
    %2260 = vmatpush1.msra.mxu0 0.0
    %2261 = vmatprep.subr.mxu0 0.0
    %2262 = vmatpush1.msra.mxu0 0.0
    %2263 = vmatprep.subr.mxu0 0.0
    %2264 = vmatpush1.msra.mxu0 0.0
    %2265 = vmatprep.subr.mxu0 0.0
    %2266 = vmatpush1.msra.mxu0 0.0
    %2267 = vmatprep.subr.mxu0 0.0
    %2268 = vmatpush1.msra.mxu0 0.0
    %2269 = vmatprep.subr.mxu0 0.0
    %2270 = vmatpush1.msra.mxu0 0.0
    %2271 = vmatprep.subr.mxu0 0.0
    %2272 = vmatpush1.msra.mxu0 0.0
    %2273 = vmatprep.subr.mxu0 0.0
    %2274 = vmatpush1.msra.mxu0 %v2234
    %2275 = vmatprep.subr.mxu0 0.0
    %2276 = vmatpush2.msra.mxu0 0.0
    %2277 = vmatprep.subr.mxu0 0.0
    %2278 = vmatpush2.msra.mxu0 0.0
    %2279 = vmatprep.subr.mxu0 0.0
    %2280 = vmatpush2.msra.mxu0 0.0
    %2281 = vmatprep.subr.mxu0 0.0
    %2282 = vmatpush2.msra.mxu0 0.0
    %2283 = vmatprep.subr.mxu0 0.0
    %2284 = vmatpush2.msra.mxu0 0.0
    %2285 = vmatprep.subr.mxu0 0.0
    %2286 = vmatpush2.msra.mxu0 0.0
    %2287 = vmatprep.subr.mxu0 0.0
    %2288 = vmatpush2.msra.mxu0 0.0
    %2289 = vmatprep.subr.mxu0 0.0
    %2290 = vmatpush2.msra.mxu0 0.0
    %2291 = vmatprep.subr.mxu0 0.0
    %2292 = vmatpush2.msra.mxu0 0.0
    %2293 = vmatprep.subr.mxu0 0.0
    %2294 = vmatpush2.msra.mxu0 0.0
    %2295 = vmatprep.subr.mxu0 0.0
    %2296 = vmatpush2.msra.mxu0 0.0
    %2297 = vmatprep.subr.mxu0 0.0
    %2298 = vmatpush2.msra.mxu0 0.0
    %2299 = vmatprep.subr.mxu0 0.0
    %2300 = vmatpush2.msra.mxu0 0.0
    %2301 = vmatprep.subr.mxu0 0.0
    %2302 = vmatpush2.msra.mxu0 0.0
    %2303 = vmatprep.subr.mxu0 0.0
    %2304 = vmatpush2.msra.mxu0 0.0
    %2305 = vmatprep.subr.mxu0 0.0
    %2306 = vmatpush2.msra.mxu0 0.0
    %2307 = vmatprep.mubr.f32.mxu0 0.0
    %2308 = vmatmul.mubr.f32.gmra.mxu0 %v2239
    %v2309 = vpop.f32.mrf.mxu0
    %v2310 = vadd.f32 0.0, %v2309
    %v2311 = vpop.f32.mrf.mxu0
    %2312 = vmatprep.mubr.f32.mxu0 0.0
    %2313 = vmatmul.mubr.f32.gmra.mxu0 %v2241
    %v2314 = vpop.f32.mrf.mxu0
    %v2315 = vadd.f32 0.0, %v2314
    %v2316 = vpop.f32.mrf.mxu0
    %2317 = vdwg.mxu0
    %2318 = vrot.lane.b32.xlu0 %v1575, 32
    %v2319 = vpop.permute.xlu0 %2318
    %2320 = vrot.lane.b32.xlu0 %v1576, 32
    %v2321 = vpop.permute.xlu0 %2320
    %2322 = vrot.lane.b32.xlu0 %v1577, 32
    %v2323 = vpop.permute.xlu0 %2322
    %2324 = vrot.lane.b32.xlu0 %v1578, 32
    %v2325 = vpop.permute.xlu0 %2324
    %v2326 = vsel %vm1519, %v2319, %v2321
    %v2327 = vsel %vm1519, %v2323, %v2325
    %v2328 = vsel %vm1529, %v2326, 0
    %v2330 = vsel %vm1529, %v2327, 0
    %2332 = vmatprep.subr.mxu0 0.0
    %2333 = vmatpush1.msra.mxu0 0.0
    %2334 = vmatprep.subr.mxu0 0.0
    %2335 = vmatpush1.msra.mxu0 0.0
    %2336 = vmatprep.subr.mxu0 0.0
    %2337 = vmatpush1.msra.mxu0 0.0
    %2338 = vmatprep.subr.mxu0 0.0
    %2339 = vmatpush1.msra.mxu0 0.0
    %2340 = vmatprep.subr.mxu0 0.0
    %2341 = vmatpush1.msra.mxu0 0.0
    %2342 = vmatprep.subr.mxu0 0.0
    %2343 = vmatpush1.msra.mxu0 0.0
    %2344 = vmatprep.subr.mxu0 0.0
    %2345 = vmatpush1.msra.mxu0 0.0
    %2346 = vmatprep.subr.mxu0 0.0
    %2347 = vmatpush1.msra.mxu0 0.0
    %2348 = vmatprep.subr.mxu0 0.0
    %2349 = vmatpush1.msra.mxu0 0.0
    %2350 = vmatprep.subr.mxu0 0.0
    %2351 = vmatpush1.msra.mxu0 0.0
    %2352 = vmatprep.subr.mxu0 0.0
    %2353 = vmatpush1.msra.mxu0 %v1597
    %2354 = vmatprep.subr.mxu0 0.0
    %2355 = vmatpush1.msra.mxu0 %v1596
    %2356 = vmatprep.subr.mxu0 0.0
    %2357 = vmatpush1.msra.mxu0 %v1544
    %2358 = vmatprep.subr.mxu0 0.0
    %2359 = vmatpush1.msra.mxu0 %v1543
    %2360 = vmatprep.subr.mxu0 0.0
    %2361 = vmatpush1.msra.mxu0 %v1589
    %2362 = vmatprep.subr.mxu0 0.0
    %2363 = vmatpush1.msra.mxu0 %v1588
    %2364 = vmatprep.subr.mxu0 0.0
    %2365 = vmatpush2.msra.mxu0 0.0
    %2366 = vmatprep.subr.mxu0 0.0
    %2367 = vmatpush2.msra.mxu0 0.0
    %2368 = vmatprep.subr.mxu0 0.0
    %2369 = vmatpush2.msra.mxu0 0.0
    %2370 = vmatprep.subr.mxu0 0.0
    %2371 = vmatpush2.msra.mxu0 0.0
    %2372 = vmatprep.subr.mxu0 0.0
    %2373 = vmatpush2.msra.mxu0 0.0
    %2374 = vmatprep.subr.mxu0 0.0
    %2375 = vmatpush2.msra.mxu0 0.0
    %2376 = vmatprep.subr.mxu0 0.0
    %2377 = vmatpush2.msra.mxu0 0.0
    %2378 = vmatprep.subr.mxu0 0.0
    %2379 = vmatpush2.msra.mxu0 0.0
    %2380 = vmatprep.subr.mxu0 0.0
    %2381 = vmatpush2.msra.mxu0 0.0
    %2382 = vmatprep.subr.mxu0 0.0
    %2383 = vmatpush2.msra.mxu0 0.0
    %2384 = vmatprep.subr.mxu0 0.0
    %2385 = vmatpush2.msra.mxu0 0.0
    %2386 = vmatprep.subr.mxu0 0.0
    %2387 = vmatpush2.msra.mxu0 0.0
    %2388 = vmatprep.subr.mxu0 0.0
    %2389 = vmatpush2.msra.mxu0 0.0
    %2390 = vmatprep.subr.mxu0 0.0
    %2391 = vmatpush2.msra.mxu0 0.0
    %2392 = vmatprep.subr.mxu0 0.0
    %2393 = vmatpush2.msra.mxu0 0.0
    %2394 = vmatprep.subr.mxu0 0.0
    %2395 = vmatpush2.msra.mxu0 0.0
    %2396 = vmatprep.mubr.f32.mxu0 0.0
    %2397 = vmatmul.mubr.f32.gmra.mxu0 %v2328
    %v2398 = vpop.f32.mrf.mxu0
    %v2399 = vadd.f32 %v2310, %v2398
    %v2400 = vpop.f32.mrf.mxu0
    %2401 = vmatprep.mubr.f32.mxu0 0.0
    %2402 = vmatmul.mubr.f32.gmra.mxu0 %v2330
    %v2403 = vpop.f32.mrf.mxu0
    %v2404 = vadd.f32 %v2315, %v2403
    %v2405 = vpop.f32.mrf.mxu0
    %2406 = vdwg.mxu0
    %2407 = vset.pattern.permute.xlu0 25
    %2408 = vperm.xlu0 %2407, %v1576
    %v2409 = vpop.permute.xlu0 %2408
    %2411 = vset.pattern.permute.xlu0 25
    %2412 = vperm.xlu0 %2411, %v1578
    %v2413 = vpop.permute.xlu0 %2412
    %v2415 = vadd.f32 %v2399, %v2409
    %v2416 = vadd.f32 %v2404, %v2413
    %v2417 = vmax.f32 %v1700, 0.0
    %v2418 = vmax.f32 %v1705, 0.0
    %v2419 = vmax.f32 %v2415, 0.0
    %v2420 = vmax.f32 %v2416, 0.0
    %s2421 = scalar_lea.vmem %s8, 32
    %v2422 = vld [vmem:[%s2421] sm:$0xff]
    %v2423 = vld [vmem:[%s2421 + $0x8] sm:$0xff]
    %v2424 = vld [vmem:[%s2421 + $0x10] sm:$0xff]
    %v2425 = vld [vmem:[%s2421 + $0x18] sm:$0xff]
    %s2426 = scalar_lea.vmem %s9, 8
    %v2427 = vld [vmem:[%s2426] sm:$0xff]
    %2430 = vrot.lane.b32.xlu0 %v2417, 8
    %v2431 = vpop.permute.xlu0 %2430
    %2432 = vrot.lane.b32.xlu0 %v2418, 8
    %v2433 = vpop.permute.xlu0 %2432
    %v2436 = vsel %vm76, 0.0, %v2431
    %v2437 = vsel %vm76, 0.0, %v2433
    %2438 = vrot.lane.b32.xlu0 %v2417, 120
    %v2439 = vpop.permute.xlu0 %2438
    %2440 = vrot.lane.b32.xlu0 %v2418, 120
    %v2441 = vpop.permute.xlu0 %2440
    %v2444 = vsel %vm1534, %v2439, 0.0
    %v2445 = vsel %vm1534, %v2441, 0.0
    %2448 = vrot.lane.b32.xlu0 %v2419, 8
    %v2449 = vpop.permute.xlu0 %2448
    %2450 = vrot.lane.b32.xlu0 %v2420, 8
    %v2451 = vpop.permute.xlu0 %2450
    %v2454 = vsel %vm76, 0.0, %v2449
    %v2455 = vsel %vm76, 0.0, %v2451
    %2456 = vrot.lane.b32.xlu0 %v2419, 120
    %v2457 = vpop.permute.xlu0 %2456
    %2458 = vrot.lane.b32.xlu0 %v2420, 120
    %v2459 = vpop.permute.xlu0 %2458
    %v2462 = vsel %vm1534, %v2457, 0.0
    %v2463 = vsel %vm1534, %v2459, 0.0
    %2465 = vset.pattern.permute.xlu0 24
    %2466 = vperm.xlu0 %2465, %v2423
    %v2467 = vpop.permute.xlu0 %2466
    %2470 = vset.pattern.permute.xlu0 24
    %2471 = vperm.xlu0 %2470, %v2425
    %v2472 = vpop.permute.xlu0 %2471
    %v2475 = vsel %vm1626, %v2422, 0
    %v2478 = vsel %vm1626, %v2424, 0
    %2480 = vmatprep.subr.mxu0 0.0
    %2481 = vmatpush1.msra.mxu0 0.0
    %2482 = vmatprep.subr.mxu0 0.0
    %2483 = vmatpush1.msra.mxu0 0.0
    %2484 = vmatprep.subr.mxu0 0.0
    %2485 = vmatpush1.msra.mxu0 0.0
    %2486 = vmatprep.subr.mxu0 0.0
    %2487 = vmatpush1.msra.mxu0 0.0
    %2488 = vmatprep.subr.mxu0 0.0
    %2489 = vmatpush1.msra.mxu0 %v2463
    %2490 = vmatprep.subr.mxu0 0.0
    %2491 = vmatpush1.msra.mxu0 %v2462
    %2492 = vmatprep.subr.mxu0 0.0
    %2493 = vmatpush1.msra.mxu0 %v2420
    %2494 = vmatprep.subr.mxu0 0.0
    %2495 = vmatpush1.msra.mxu0 %v2419
    %2496 = vmatprep.subr.mxu0 0.0
    %2497 = vmatpush1.msra.mxu0 %v2455
    %2498 = vmatprep.subr.mxu0 0.0
    %2499 = vmatpush1.msra.mxu0 %v2454
    %2500 = vmatprep.subr.mxu0 0.0
    %2501 = vmatpush1.msra.mxu0 %v2445
    %2502 = vmatprep.subr.mxu0 0.0
    %2503 = vmatpush1.msra.mxu0 %v2444
    %2504 = vmatprep.subr.mxu0 0.0
    %2505 = vmatpush1.msra.mxu0 %v2418
    %2506 = vmatprep.subr.mxu0 0.0
    %2507 = vmatpush1.msra.mxu0 %v2417
    %2508 = vmatprep.subr.mxu0 0.0
    %2509 = vmatpush1.msra.mxu0 %v2437
    %2510 = vmatprep.subr.mxu0 0.0
    %2511 = vmatpush1.msra.mxu0 %v2436
    %2512 = vmatprep.subr.mxu0 0.0
    %2513 = vmatpush2.msra.mxu0 0.0
    %2514 = vmatprep.subr.mxu0 0.0
    %2515 = vmatpush2.msra.mxu0 0.0
    %2516 = vmatprep.subr.mxu0 0.0
    %2517 = vmatpush2.msra.mxu0 0.0
    %2518 = vmatprep.subr.mxu0 0.0
    %2519 = vmatpush2.msra.mxu0 0.0
    %2520 = vmatprep.subr.mxu0 0.0
    %2521 = vmatpush2.msra.mxu0 0.0
    %2522 = vmatprep.subr.mxu0 0.0
    %2523 = vmatpush2.msra.mxu0 0.0
    %2524 = vmatprep.subr.mxu0 0.0
    %2525 = vmatpush2.msra.mxu0 0.0
    %2526 = vmatprep.subr.mxu0 0.0
    %2527 = vmatpush2.msra.mxu0 0.0
    %2528 = vmatprep.subr.mxu0 0.0
    %2529 = vmatpush2.msra.mxu0 0.0
    %2530 = vmatprep.subr.mxu0 0.0
    %2531 = vmatpush2.msra.mxu0 0.0
    %2532 = vmatprep.subr.mxu0 0.0
    %2533 = vmatpush2.msra.mxu0 0.0
    %2534 = vmatprep.subr.mxu0 0.0
    %2535 = vmatpush2.msra.mxu0 0.0
    %2536 = vmatprep.subr.mxu0 0.0
    %2537 = vmatpush2.msra.mxu0 0.0
    %2538 = vmatprep.subr.mxu0 0.0
    %2539 = vmatpush2.msra.mxu0 0.0
    %2540 = vmatprep.subr.mxu0 0.0
    %2541 = vmatpush2.msra.mxu0 0.0
    %2542 = vmatprep.subr.mxu0 0.0
    %2543 = vmatpush2.msra.mxu0 0.0
    %2544 = vmatprep.mubr.f32.mxu0 0.0
    %2545 = vmatmul.mubr.f32.gmra.mxu0 %v2475
    %v2546 = vpop.f32.mrf.mxu0
    %v2547 = vadd.f32 %v2467, %v2546
    %v2548 = vpop.f32.mrf.mxu0
    %2549 = vmatprep.mubr.f32.mxu0 0.0
    %2550 = vmatmul.mubr.f32.gmra.mxu0 %v2478
    %v2551 = vpop.f32.mrf.mxu0
    %v2552 = vadd.f32 %v2472, %v2551
    %v2553 = vpop.f32.mrf.mxu0
    %2554 = vdwg.mxu0
    %2556 = vset.pattern.permute.xlu0 48
    %2557 = vperm.xlu0 %2556, %v2427
    %v2558 = vpop.permute.xlu0 %2557
    %v2560 = vsel %vm183, %v2427, 0
    %2562 = vmatprep.subr.mxu0 0.0
    %2563 = vmatpush1.msra.mxu0 0.0
    %2564 = vmatprep.subr.mxu0 0.0
    %2565 = vmatpush1.msra.mxu0 0.0
    %2566 = vmatprep.subr.mxu0 0.0
    %2567 = vmatpush1.msra.mxu0 0.0
    %2568 = vmatprep.subr.mxu0 0.0
    %2569 = vmatpush1.msra.mxu0 0.0
    %2570 = vmatprep.subr.mxu0 0.0
    %2571 = vmatpush1.msra.mxu0 0.0
    %2572 = vmatprep.subr.mxu0 0.0
    %2573 = vmatpush1.msra.mxu0 0.0
    %2574 = vmatprep.subr.mxu0 0.0
    %2575 = vmatpush1.msra.mxu0 0.0
    %2576 = vmatprep.subr.mxu0 0.0
    %2577 = vmatpush1.msra.mxu0 0.0
    %2578 = vmatprep.subr.mxu0 0.0
    %2579 = vmatpush1.msra.mxu0 0.0
    %2580 = vmatprep.subr.mxu0 0.0
    %2581 = vmatpush1.msra.mxu0 0.0
    %2582 = vmatprep.subr.mxu0 0.0
    %2583 = vmatpush1.msra.mxu0 0.0
    %2584 = vmatprep.subr.mxu0 0.0
    %2585 = vmatpush1.msra.mxu0 0.0
    %2586 = vmatprep.subr.mxu0 0.0
    %2587 = vmatpush1.msra.mxu0 0.0
    %2588 = vmatprep.subr.mxu0 0.0
    %2589 = vmatpush1.msra.mxu0 0.0
    %2590 = vmatprep.subr.mxu0 0.0
    %2591 = vmatpush1.msra.mxu0 %v2420
    %2592 = vmatprep.subr.mxu0 0.0
    %2593 = vmatpush1.msra.mxu0 %v2419
    %2594 = vmatprep.subr.mxu0 0.0
    %2595 = vmatpush2.msra.mxu0 0.0
    %2596 = vmatprep.subr.mxu0 0.0
    %2597 = vmatpush2.msra.mxu0 0.0
    %2598 = vmatprep.subr.mxu0 0.0
    %2599 = vmatpush2.msra.mxu0 0.0
    %2600 = vmatprep.subr.mxu0 0.0
    %2601 = vmatpush2.msra.mxu0 0.0
    %2602 = vmatprep.subr.mxu0 0.0
    %2603 = vmatpush2.msra.mxu0 0.0
    %2604 = vmatprep.subr.mxu0 0.0
    %2605 = vmatpush2.msra.mxu0 0.0
    %2606 = vmatprep.subr.mxu0 0.0
    %2607 = vmatpush2.msra.mxu0 0.0
    %2608 = vmatprep.subr.mxu0 0.0
    %2609 = vmatpush2.msra.mxu0 0.0
    %2610 = vmatprep.subr.mxu0 0.0
    %2611 = vmatpush2.msra.mxu0 0.0
    %2612 = vmatprep.subr.mxu0 0.0
    %2613 = vmatpush2.msra.mxu0 0.0
    %2614 = vmatprep.subr.mxu0 0.0
    %2615 = vmatpush2.msra.mxu0 0.0
    %2616 = vmatprep.subr.mxu0 0.0
    %2617 = vmatpush2.msra.mxu0 0.0
    %2618 = vmatprep.subr.mxu0 0.0
    %2619 = vmatpush2.msra.mxu0 0.0
    %2620 = vmatprep.subr.mxu0 0.0
    %2621 = vmatpush2.msra.mxu0 0.0
    %2622 = vmatprep.subr.mxu0 0.0
    %2623 = vmatpush2.msra.mxu0 0.0
    %2624 = vmatprep.subr.mxu0 0.0
    %2625 = vmatpush2.msra.mxu0 0.0
    %2626 = vmatprep.mubr.f32.mxu0 0.0
    %2627 = vmatmul.mubr.f32.gmra.mxu0 %v2560
    %v2628 = vpop.f32.mrf.mxu0
    %v2629 = vadd.f32 %v2558, %v2628
    %v2630 = vpop.f32.mrf.mxu0
    %2631 = vdwg.mxu0
    %v2632 = vmax.f32 %v2629, 0.0
    %v2634 = vsel %vm1786, %v2632, 0
    %2636 = vmatprep.subr.mxu0 0.0
    %2637 = vmatpush1.msra.mxu0 0.0
    %2638 = vmatprep.subr.mxu0 0.0
    %2639 = vmatpush1.msra.mxu0 0.0
    %2640 = vmatprep.subr.mxu0 0.0
    %2641 = vmatpush1.msra.mxu0 0.0
    %2642 = vmatprep.subr.mxu0 0.0
    %2643 = vmatpush1.msra.mxu0 0.0
    %2644 = vmatprep.subr.mxu0 0.0
    %2645 = vmatpush1.msra.mxu0 0.0
    %2646 = vmatprep.subr.mxu0 0.0
    %2647 = vmatpush1.msra.mxu0 0.0
    %2648 = vmatprep.subr.mxu0 0.0
    %2649 = vmatpush1.msra.mxu0 0.0
    %2650 = vmatprep.subr.mxu0 0.0
    %2651 = vmatpush1.msra.mxu0 0.0
    %2652 = vmatprep.subr.mxu0 0.0
    %2653 = vmatpush1.msra.mxu0 %v1554
    %2654 = vmatprep.subr.mxu0 0.0
    %2655 = vmatpush1.msra.mxu0 %v1553
    %2656 = vmatprep.subr.mxu0 0.0
    %2657 = vmatpush1.msra.mxu0 %v1552
    %2658 = vmatprep.subr.mxu0 0.0
    %2659 = vmatpush1.msra.mxu0 %v1551
    %2660 = vmatprep.subr.mxu0 0.0
    %2661 = vmatpush1.msra.mxu0 %v1550
    %2662 = vmatprep.subr.mxu0 0.0
    %2663 = vmatpush1.msra.mxu0 %v1549
    %2664 = vmatprep.subr.mxu0 0.0
    %2665 = vmatpush1.msra.mxu0 %v1548
    %2666 = vmatprep.subr.mxu0 0.0
    %2667 = vmatpush1.msra.mxu0 %v1547
    %2668 = vmatprep.subr.mxu0 0.0
    %2669 = vmatpush2.msra.mxu0 0.0
    %2670 = vmatprep.subr.mxu0 0.0
    %2671 = vmatpush2.msra.mxu0 0.0
    %2672 = vmatprep.subr.mxu0 0.0
    %2673 = vmatpush2.msra.mxu0 0.0
    %2674 = vmatprep.subr.mxu0 0.0
    %2675 = vmatpush2.msra.mxu0 0.0
    %2676 = vmatprep.subr.mxu0 0.0
    %2677 = vmatpush2.msra.mxu0 0.0
    %2678 = vmatprep.subr.mxu0 0.0
    %2679 = vmatpush2.msra.mxu0 0.0
    %2680 = vmatprep.subr.mxu0 0.0
    %2681 = vmatpush2.msra.mxu0 0.0
    %2682 = vmatprep.subr.mxu0 0.0
    %2683 = vmatpush2.msra.mxu0 0.0
    %2684 = vmatprep.subr.mxu0 0.0
    %2685 = vmatpush2.msra.mxu0 0.0
    %2686 = vmatprep.subr.mxu0 0.0
    %2687 = vmatpush2.msra.mxu0 0.0
    %2688 = vmatprep.subr.mxu0 0.0
    %2689 = vmatpush2.msra.mxu0 0.0
    %2690 = vmatprep.subr.mxu0 0.0
    %2691 = vmatpush2.msra.mxu0 0.0
    %2692 = vmatprep.subr.mxu0 0.0
    %2693 = vmatpush2.msra.mxu0 0.0
    %2694 = vmatprep.subr.mxu0 0.0
    %2695 = vmatpush2.msra.mxu0 0.0
    %2696 = vmatprep.subr.mxu0 0.0
    %2697 = vmatpush2.msra.mxu0 0.0
    %2698 = vmatprep.subr.mxu0 0.0
    %2699 = vmatpush2.msra.mxu0 0.0
    %2700 = vmatprep.mubr.f32.mxu0 0.0
    %2701 = vmatmul.mubr.f32.gmra.mxu0 %v2634
    %v2702 = vpop.f32.mrf.mxu0
    %v2703 = vadd.f32 0.0, %v2702
    %v2704 = vpop.f32.mrf.mxu0
    %2705 = vdwg.mxu0
    %2706 = vmatprep.subr.mxu0 0.0
    %2707 = vmatpush1.msra.mxu0 0.0
    %2708 = vmatprep.subr.mxu0 0.0
    %2709 = vmatpush1.msra.mxu0 0.0
    %2710 = vmatprep.subr.mxu0 0.0
    %2711 = vmatpush1.msra.mxu0 0.0
    %2712 = vmatprep.subr.mxu0 0.0
    %2713 = vmatpush1.msra.mxu0 0.0
    %2714 = vmatprep.subr.mxu0 0.0
    %2715 = vmatpush1.msra.mxu0 0.0
    %2716 = vmatprep.subr.mxu0 0.0
    %2717 = vmatpush1.msra.mxu0 0.0
    %2718 = vmatprep.subr.mxu0 0.0
    %2719 = vmatpush1.msra.mxu0 0.0
    %2720 = vmatprep.subr.mxu0 0.0
    %2721 = vmatpush1.msra.mxu0 0.0
    %2722 = vmatprep.subr.mxu0 0.0
    %2723 = vmatpush1.msra.mxu0 %v1563
    %2724 = vmatprep.subr.mxu0 0.0
    %2725 = vmatpush1.msra.mxu0 %v1562
    %2726 = vmatprep.subr.mxu0 0.0
    %2727 = vmatpush1.msra.mxu0 %v1561
    %2728 = vmatprep.subr.mxu0 0.0
    %2729 = vmatpush1.msra.mxu0 %v1560
    %2730 = vmatprep.subr.mxu0 0.0
    %2731 = vmatpush1.msra.mxu0 %v1559
    %2732 = vmatprep.subr.mxu0 0.0
    %2733 = vmatpush1.msra.mxu0 %v1558
    %2734 = vmatprep.subr.mxu0 0.0
    %2735 = vmatpush1.msra.mxu0 %v1557
    %2736 = vmatprep.subr.mxu0 0.0
    %2737 = vmatpush1.msra.mxu0 %v1556
    %2738 = vmatprep.subr.mxu0 0.0
    %2739 = vmatpush2.msra.mxu0 0.0
    %2740 = vmatprep.subr.mxu0 0.0
    %2741 = vmatpush2.msra.mxu0 0.0
    %2742 = vmatprep.subr.mxu0 0.0
    %2743 = vmatpush2.msra.mxu0 0.0
    %2744 = vmatprep.subr.mxu0 0.0
    %2745 = vmatpush2.msra.mxu0 0.0
    %2746 = vmatprep.subr.mxu0 0.0
    %2747 = vmatpush2.msra.mxu0 0.0
    %2748 = vmatprep.subr.mxu0 0.0
    %2749 = vmatpush2.msra.mxu0 0.0
    %2750 = vmatprep.subr.mxu0 0.0
    %2751 = vmatpush2.msra.mxu0 0.0
    %2752 = vmatprep.subr.mxu0 0.0
    %2753 = vmatpush2.msra.mxu0 0.0
    %2754 = vmatprep.subr.mxu0 0.0
    %2755 = vmatpush2.msra.mxu0 0.0
    %2756 = vmatprep.subr.mxu0 0.0
    %2757 = vmatpush2.msra.mxu0 0.0
    %2758 = vmatprep.subr.mxu0 0.0
    %2759 = vmatpush2.msra.mxu0 0.0
    %2760 = vmatprep.subr.mxu0 0.0
    %2761 = vmatpush2.msra.mxu0 0.0
    %2762 = vmatprep.subr.mxu0 0.0
    %2763 = vmatpush2.msra.mxu0 0.0
    %2764 = vmatprep.subr.mxu0 0.0
    %2765 = vmatpush2.msra.mxu0 0.0
    %2766 = vmatprep.subr.mxu0 0.0
    %2767 = vmatpush2.msra.mxu0 0.0
    %2768 = vmatprep.subr.mxu0 0.0
    %2769 = vmatpush2.msra.mxu0 0.0
    %2770 = vmatprep.mubr.f32.mxu0 0.0
    %2771 = vmatmul.mubr.f32.gmra.mxu0 %v2634
    %v2772 = vpop.f32.mrf.mxu0
    %v2773 = vadd.f32 0.0, %v2772
    %v2774 = vpop.f32.mrf.mxu0
    %2775 = vdwg.mxu0
    %2776 = vset.pattern.permute.xlu0 49
    %2777 = vperm.xlu0 %2776, %v2427
    %v2778 = vpop.permute.xlu0 %2777
    %2780 = vrot.lane.b32.xlu0 %v2427, 112
    %v2781 = vpop.permute.xlu0 %2780
    %v2782 = vsel %vm183, %v2781, 0
    %2784 = vmatprep.subr.mxu0 0.0
    %2785 = vmatpush1.msra.mxu0 0.0
    %2786 = vmatprep.subr.mxu0 0.0
    %2787 = vmatpush1.msra.mxu0 0.0
    %2788 = vmatprep.subr.mxu0 0.0
    %2789 = vmatpush1.msra.mxu0 0.0
    %2790 = vmatprep.subr.mxu0 0.0
    %2791 = vmatpush1.msra.mxu0 0.0
    %2792 = vmatprep.subr.mxu0 0.0
    %2793 = vmatpush1.msra.mxu0 0.0
    %2794 = vmatprep.subr.mxu0 0.0
    %2795 = vmatpush1.msra.mxu0 0.0
    %2796 = vmatprep.subr.mxu0 0.0
    %2797 = vmatpush1.msra.mxu0 0.0
    %2798 = vmatprep.subr.mxu0 0.0
    %2799 = vmatpush1.msra.mxu0 0.0
    %2800 = vmatprep.subr.mxu0 0.0
    %2801 = vmatpush1.msra.mxu0 0.0
    %2802 = vmatprep.subr.mxu0 0.0
    %2803 = vmatpush1.msra.mxu0 0.0
    %2804 = vmatprep.subr.mxu0 0.0
    %2805 = vmatpush1.msra.mxu0 0.0
    %2806 = vmatprep.subr.mxu0 0.0
    %2807 = vmatpush1.msra.mxu0 0.0
    %2808 = vmatprep.subr.mxu0 0.0
    %2809 = vmatpush1.msra.mxu0 0.0
    %2810 = vmatprep.subr.mxu0 0.0
    %2811 = vmatpush1.msra.mxu0 0.0
    %2812 = vmatprep.subr.mxu0 0.0
    %2813 = vmatpush1.msra.mxu0 %v2773
    %2814 = vmatprep.subr.mxu0 0.0
    %2815 = vmatpush1.msra.mxu0 %v2703
    %2816 = vmatprep.subr.mxu0 0.0
    %2817 = vmatpush2.msra.mxu0 0.0
    %2818 = vmatprep.subr.mxu0 0.0
    %2819 = vmatpush2.msra.mxu0 0.0
    %2820 = vmatprep.subr.mxu0 0.0
    %2821 = vmatpush2.msra.mxu0 0.0
    %2822 = vmatprep.subr.mxu0 0.0
    %2823 = vmatpush2.msra.mxu0 0.0
    %2824 = vmatprep.subr.mxu0 0.0
    %2825 = vmatpush2.msra.mxu0 0.0
    %2826 = vmatprep.subr.mxu0 0.0
    %2827 = vmatpush2.msra.mxu0 0.0
    %2828 = vmatprep.subr.mxu0 0.0
    %2829 = vmatpush2.msra.mxu0 0.0
    %2830 = vmatprep.subr.mxu0 0.0
    %2831 = vmatpush2.msra.mxu0 0.0
    %2832 = vmatprep.subr.mxu0 0.0
    %2833 = vmatpush2.msra.mxu0 0.0
    %2834 = vmatprep.subr.mxu0 0.0
    %2835 = vmatpush2.msra.mxu0 0.0
    %2836 = vmatprep.subr.mxu0 0.0
    %2837 = vmatpush2.msra.mxu0 0.0
    %2838 = vmatprep.subr.mxu0 0.0
    %2839 = vmatpush2.msra.mxu0 0.0
    %2840 = vmatprep.subr.mxu0 0.0
    %2841 = vmatpush2.msra.mxu0 0.0
    %2842 = vmatprep.subr.mxu0 0.0
    %2843 = vmatpush2.msra.mxu0 0.0
    %2844 = vmatprep.subr.mxu0 0.0
    %2845 = vmatpush2.msra.mxu0 0.0
    %2846 = vmatprep.subr.mxu0 0.0
    %2847 = vmatpush2.msra.mxu0 0.0
    %2848 = vmatprep.mubr.f32.mxu0 0.0
    %2849 = vmatmul.mubr.f32.gmra.mxu0 %v2782
    %v2850 = vpop.f32.mrf.mxu0
    %v2851 = vadd.f32 %v2778, %v2850
    %v2852 = vpop.f32.mrf.mxu0
    %2853 = vdwg.mxu0
    %v2854 = vmax.f32 %v2851, 0.0
    %2855 = vset.pattern.permute.xlu0 50
    %2856 = vperm.xlu0 %2855, %v2427
    %v2857 = vpop.permute.xlu0 %2856
    %2859 = vrot.lane.b32.xlu0 %v2427, 96
    %v2860 = vpop.permute.xlu0 %2859
    %v2861 = vsel %vm183, %v2860, 0
    %2863 = vmatprep.subr.mxu0 0.0
    %2864 = vmatpush1.msra.mxu0 0.0
    %2865 = vmatprep.subr.mxu0 0.0
    %2866 = vmatpush1.msra.mxu0 0.0
    %2867 = vmatprep.subr.mxu0 0.0
    %2868 = vmatpush1.msra.mxu0 0.0
    %2869 = vmatprep.subr.mxu0 0.0
    %2870 = vmatpush1.msra.mxu0 0.0
    %2871 = vmatprep.subr.mxu0 0.0
    %2872 = vmatpush1.msra.mxu0 0.0
    %2873 = vmatprep.subr.mxu0 0.0
    %2874 = vmatpush1.msra.mxu0 0.0
    %2875 = vmatprep.subr.mxu0 0.0
    %2876 = vmatpush1.msra.mxu0 0.0
    %2877 = vmatprep.subr.mxu0 0.0
    %2878 = vmatpush1.msra.mxu0 0.0
    %2879 = vmatprep.subr.mxu0 0.0
    %2880 = vmatpush1.msra.mxu0 0.0
    %2881 = vmatprep.subr.mxu0 0.0
    %2882 = vmatpush1.msra.mxu0 0.0
    %2883 = vmatprep.subr.mxu0 0.0
    %2884 = vmatpush1.msra.mxu0 0.0
    %2885 = vmatprep.subr.mxu0 0.0
    %2886 = vmatpush1.msra.mxu0 0.0
    %2887 = vmatprep.subr.mxu0 0.0
    %2888 = vmatpush1.msra.mxu0 0.0
    %2889 = vmatprep.subr.mxu0 0.0
    %2890 = vmatpush1.msra.mxu0 0.0
    %2891 = vmatprep.subr.mxu0 0.0
    %2892 = vmatpush1.msra.mxu0 %v2773
    %2893 = vmatprep.subr.mxu0 0.0
    %2894 = vmatpush1.msra.mxu0 %v2703
    %2895 = vmatprep.subr.mxu0 0.0
    %2896 = vmatpush2.msra.mxu0 0.0
    %2897 = vmatprep.subr.mxu0 0.0
    %2898 = vmatpush2.msra.mxu0 0.0
    %2899 = vmatprep.subr.mxu0 0.0
    %2900 = vmatpush2.msra.mxu0 0.0
    %2901 = vmatprep.subr.mxu0 0.0
    %2902 = vmatpush2.msra.mxu0 0.0
    %2903 = vmatprep.subr.mxu0 0.0
    %2904 = vmatpush2.msra.mxu0 0.0
    %2905 = vmatprep.subr.mxu0 0.0
    %2906 = vmatpush2.msra.mxu0 0.0
    %2907 = vmatprep.subr.mxu0 0.0
    %2908 = vmatpush2.msra.mxu0 0.0
    %2909 = vmatprep.subr.mxu0 0.0
    %2910 = vmatpush2.msra.mxu0 0.0
    %2911 = vmatprep.subr.mxu0 0.0
    %2912 = vmatpush2.msra.mxu0 0.0
    %2913 = vmatprep.subr.mxu0 0.0
    %2914 = vmatpush2.msra.mxu0 0.0
    %2915 = vmatprep.subr.mxu0 0.0
    %2916 = vmatpush2.msra.mxu0 0.0
    %2917 = vmatprep.subr.mxu0 0.0
    %2918 = vmatpush2.msra.mxu0 0.0
    %2919 = vmatprep.subr.mxu0 0.0
    %2920 = vmatpush2.msra.mxu0 0.0
    %2921 = vmatprep.subr.mxu0 0.0
    %2922 = vmatpush2.msra.mxu0 0.0
    %2923 = vmatprep.subr.mxu0 0.0
    %2924 = vmatpush2.msra.mxu0 0.0
    %2925 = vmatprep.subr.mxu0 0.0
    %2926 = vmatpush2.msra.mxu0 0.0
    %2927 = vmatprep.mubr.f32.mxu0 0.0
    %2928 = vmatmul.mubr.f32.gmra.mxu0 %v2861
    %v2929 = vpop.f32.mrf.mxu0
    %v2930 = vadd.f32 %v2857, %v2929
    %v2931 = vpop.f32.mrf.mxu0
    %2932 = vdwg.mxu0
    %v2933 = vmax.f32 %v2930, 0.0
    %v2935 = vsel %vm1524, %v2933, 0
    %2937 = vmatprep.subr.mxu0 0.0
    %2938 = vmatpush1.msra.mxu0 0.0
    %2939 = vmatprep.subr.mxu0 0.0
    %2940 = vmatpush1.msra.mxu0 0.0
    %2941 = vmatprep.subr.mxu0 0.0
    %2942 = vmatpush1.msra.mxu0 0.0
    %2943 = vmatprep.subr.mxu0 0.0
    %2944 = vmatpush1.msra.mxu0 0.0
    %2945 = vmatprep.subr.mxu0 0.0
    %2946 = vmatpush1.msra.mxu0 0.0
    %2947 = vmatprep.subr.mxu0 0.0
    %2948 = vmatpush1.msra.mxu0 0.0
    %2949 = vmatprep.subr.mxu0 0.0
    %2950 = vmatpush1.msra.mxu0 0.0
    %2951 = vmatprep.subr.mxu0 0.0
    %2952 = vmatpush1.msra.mxu0 0.0
    %2953 = vmatprep.subr.mxu0 0.0
    %2954 = vmatpush1.msra.mxu0 0.0
    %2955 = vmatprep.subr.mxu0 0.0
    %2956 = vmatpush1.msra.mxu0 0.0
    %2957 = vmatprep.subr.mxu0 0.0
    %2958 = vmatpush1.msra.mxu0 0.0
    %2959 = vmatprep.subr.mxu0 0.0
    %2960 = vmatpush1.msra.mxu0 %v1574
    %2961 = vmatprep.subr.mxu0 0.0
    %2962 = vmatpush1.msra.mxu0 %v1573
    %2963 = vmatprep.subr.mxu0 0.0
    %2964 = vmatpush1.msra.mxu0 %v1572
    %2965 = vmatprep.subr.mxu0 0.0
    %2966 = vmatpush1.msra.mxu0 %v1571
    %2967 = vmatprep.subr.mxu0 0.0
    %2968 = vmatpush1.msra.mxu0 %v1570
    %2969 = vmatprep.subr.mxu0 0.0
    %2970 = vmatpush2.msra.mxu0 0.0
    %2971 = vmatprep.subr.mxu0 0.0
    %2972 = vmatpush2.msra.mxu0 0.0
    %2973 = vmatprep.subr.mxu0 0.0
    %2974 = vmatpush2.msra.mxu0 0.0
    %2975 = vmatprep.subr.mxu0 0.0
    %2976 = vmatpush2.msra.mxu0 0.0
    %2977 = vmatprep.subr.mxu0 0.0
    %2978 = vmatpush2.msra.mxu0 0.0
    %2979 = vmatprep.subr.mxu0 0.0
    %2980 = vmatpush2.msra.mxu0 0.0
    %2981 = vmatprep.subr.mxu0 0.0
    %2982 = vmatpush2.msra.mxu0 0.0
    %2983 = vmatprep.subr.mxu0 0.0
    %2984 = vmatpush2.msra.mxu0 0.0
    %2985 = vmatprep.subr.mxu0 0.0
    %2986 = vmatpush2.msra.mxu0 0.0
    %2987 = vmatprep.subr.mxu0 0.0
    %2988 = vmatpush2.msra.mxu0 0.0
    %2989 = vmatprep.subr.mxu0 0.0
    %2990 = vmatpush2.msra.mxu0 0.0
    %2991 = vmatprep.subr.mxu0 0.0
    %2992 = vmatpush2.msra.mxu0 0.0
    %2993 = vmatprep.subr.mxu0 0.0
    %2994 = vmatpush2.msra.mxu0 0.0
    %2995 = vmatprep.subr.mxu0 0.0
    %2996 = vmatpush2.msra.mxu0 0.0
    %2997 = vmatprep.subr.mxu0 0.0
    %2998 = vmatpush2.msra.mxu0 0.0
    %2999 = vmatprep.subr.mxu0 0.0
    %3000 = vmatpush2.msra.mxu0 0.0
    %3001 = vmatprep.mubr.f32.mxu0 0.0
    %3002 = vmatmul.mubr.f32.gmra.mxu0 %v2935
    %v3003 = vpop.f32.mrf.mxu0
    %v3004 = vadd.f32 0.0, %v3003
    %v3005 = vpop.f32.mrf.mxu0
    %3006 = vdwg.mxu0
    %v3008 = vsel %vm1524, %v2854, 0
    %3010 = vmatprep.subr.mxu0 0.0
    %3011 = vmatpush1.msra.mxu0 0.0
    %3012 = vmatprep.subr.mxu0 0.0
    %3013 = vmatpush1.msra.mxu0 0.0
    %3014 = vmatprep.subr.mxu0 0.0
    %3015 = vmatpush1.msra.mxu0 0.0
    %3016 = vmatprep.subr.mxu0 0.0
    %3017 = vmatpush1.msra.mxu0 0.0
    %3018 = vmatprep.subr.mxu0 0.0
    %3019 = vmatpush1.msra.mxu0 0.0
    %3020 = vmatprep.subr.mxu0 0.0
    %3021 = vmatpush1.msra.mxu0 0.0
    %3022 = vmatprep.subr.mxu0 0.0
    %3023 = vmatpush1.msra.mxu0 0.0
    %3024 = vmatprep.subr.mxu0 0.0
    %3025 = vmatpush1.msra.mxu0 0.0
    %3026 = vmatprep.subr.mxu0 0.0
    %3027 = vmatpush1.msra.mxu0 0.0
    %3028 = vmatprep.subr.mxu0 0.0
    %3029 = vmatpush1.msra.mxu0 0.0
    %3030 = vmatprep.subr.mxu0 0.0
    %3031 = vmatpush1.msra.mxu0 0.0
    %3032 = vmatprep.subr.mxu0 0.0
    %3033 = vmatpush1.msra.mxu0 %v1568
    %3034 = vmatprep.subr.mxu0 0.0
    %3035 = vmatpush1.msra.mxu0 %v1567
    %3036 = vmatprep.subr.mxu0 0.0
    %3037 = vmatpush1.msra.mxu0 %v1566
    %3038 = vmatprep.subr.mxu0 0.0
    %3039 = vmatpush1.msra.mxu0 %v1565
    %3040 = vmatprep.subr.mxu0 0.0
    %3041 = vmatpush1.msra.mxu0 %v1564
    %3042 = vmatprep.subr.mxu0 0.0
    %3043 = vmatpush2.msra.mxu0 0.0
    %3044 = vmatprep.subr.mxu0 0.0
    %3045 = vmatpush2.msra.mxu0 0.0
    %3046 = vmatprep.subr.mxu0 0.0
    %3047 = vmatpush2.msra.mxu0 0.0
    %3048 = vmatprep.subr.mxu0 0.0
    %3049 = vmatpush2.msra.mxu0 0.0
    %3050 = vmatprep.subr.mxu0 0.0
    %3051 = vmatpush2.msra.mxu0 0.0
    %3052 = vmatprep.subr.mxu0 0.0
    %3053 = vmatpush2.msra.mxu0 0.0
    %3054 = vmatprep.subr.mxu0 0.0
    %3055 = vmatpush2.msra.mxu0 0.0
    %3056 = vmatprep.subr.mxu0 0.0
    %3057 = vmatpush2.msra.mxu0 0.0
    %3058 = vmatprep.subr.mxu0 0.0
    %3059 = vmatpush2.msra.mxu0 0.0
    %3060 = vmatprep.subr.mxu0 0.0
    %3061 = vmatpush2.msra.mxu0 0.0
    %3062 = vmatprep.subr.mxu0 0.0
    %3063 = vmatpush2.msra.mxu0 0.0
    %3064 = vmatprep.subr.mxu0 0.0
    %3065 = vmatpush2.msra.mxu0 0.0
    %3066 = vmatprep.subr.mxu0 0.0
    %3067 = vmatpush2.msra.mxu0 0.0
    %3068 = vmatprep.subr.mxu0 0.0
    %3069 = vmatpush2.msra.mxu0 0.0
    %3070 = vmatprep.subr.mxu0 0.0
    %3071 = vmatpush2.msra.mxu0 0.0
    %3072 = vmatprep.subr.mxu0 0.0
    %3073 = vmatpush2.msra.mxu0 0.0
    %3074 = vmatprep.mubr.f32.mxu0 0.0
    %3075 = vmatmul.mubr.f32.gmra.mxu0 %v3008
    %v3076 = vpop.f32.mrf.mxu0
    %v3077 = vadd.f32 %v3004, %v3076
    %v3078 = vpop.f32.mrf.mxu0
    %3079 = vdwg.mxu0
    %v3080 = vadd.f32 %v2632, %v3077
    %3081 = vrot.lane.b32.xlu0 %v2423, 112
    %v3082 = vpop.permute.xlu0 %3081
    %3083 = vrot.lane.b32.xlu0 %v2425, 112
    %v3084 = vpop.permute.xlu0 %3083
    %v3085 = vsel %vm76, %v3082, 0
    %v3087 = vsel %vm76, %v3084, 0
    %3089 = vmatprep.subr.mxu0 0.0
    %3090 = vmatpush1.msra.mxu0 0.0
    %3091 = vmatprep.subr.mxu0 0.0
    %3092 = vmatpush1.msra.mxu0 0.0
    %3093 = vmatprep.subr.mxu0 0.0
    %3094 = vmatpush1.msra.mxu0 0.0
    %3095 = vmatprep.subr.mxu0 0.0
    %3096 = vmatpush1.msra.mxu0 0.0
    %3097 = vmatprep.subr.mxu0 0.0
    %3098 = vmatpush1.msra.mxu0 0.0
    %3099 = vmatprep.subr.mxu0 0.0
    %3100 = vmatpush1.msra.mxu0 0.0
    %3101 = vmatprep.subr.mxu0 0.0
    %3102 = vmatpush1.msra.mxu0 0.0
    %3103 = vmatprep.subr.mxu0 0.0
    %3104 = vmatpush1.msra.mxu0 0.0
    %3105 = vmatprep.subr.mxu0 0.0
    %3106 = vmatpush1.msra.mxu0 0.0
    %3107 = vmatprep.subr.mxu0 0.0
    %3108 = vmatpush1.msra.mxu0 0.0
    %3109 = vmatprep.subr.mxu0 0.0
    %3110 = vmatpush1.msra.mxu0 0.0
    %3111 = vmatprep.subr.mxu0 0.0
    %3112 = vmatpush1.msra.mxu0 0.0
    %3113 = vmatprep.subr.mxu0 0.0
    %3114 = vmatpush1.msra.mxu0 0.0
    %3115 = vmatprep.subr.mxu0 0.0
    %3116 = vmatpush1.msra.mxu0 0.0
    %3117 = vmatprep.subr.mxu0 0.0
    %3118 = vmatpush1.msra.mxu0 0.0
    %3119 = vmatprep.subr.mxu0 0.0
    %3120 = vmatpush1.msra.mxu0 %v3080
    %3121 = vmatprep.subr.mxu0 0.0
    %3122 = vmatpush2.msra.mxu0 0.0
    %3123 = vmatprep.subr.mxu0 0.0
    %3124 = vmatpush2.msra.mxu0 0.0
    %3125 = vmatprep.subr.mxu0 0.0
    %3126 = vmatpush2.msra.mxu0 0.0
    %3127 = vmatprep.subr.mxu0 0.0
    %3128 = vmatpush2.msra.mxu0 0.0
    %3129 = vmatprep.subr.mxu0 0.0
    %3130 = vmatpush2.msra.mxu0 0.0
    %3131 = vmatprep.subr.mxu0 0.0
    %3132 = vmatpush2.msra.mxu0 0.0
    %3133 = vmatprep.subr.mxu0 0.0
    %3134 = vmatpush2.msra.mxu0 0.0
    %3135 = vmatprep.subr.mxu0 0.0
    %3136 = vmatpush2.msra.mxu0 0.0
    %3137 = vmatprep.subr.mxu0 0.0
    %3138 = vmatpush2.msra.mxu0 0.0
    %3139 = vmatprep.subr.mxu0 0.0
    %3140 = vmatpush2.msra.mxu0 0.0
    %3141 = vmatprep.subr.mxu0 0.0
    %3142 = vmatpush2.msra.mxu0 0.0
    %3143 = vmatprep.subr.mxu0 0.0
    %3144 = vmatpush2.msra.mxu0 0.0
    %3145 = vmatprep.subr.mxu0 0.0
    %3146 = vmatpush2.msra.mxu0 0.0
    %3147 = vmatprep.subr.mxu0 0.0
    %3148 = vmatpush2.msra.mxu0 0.0
    %3149 = vmatprep.subr.mxu0 0.0
    %3150 = vmatpush2.msra.mxu0 0.0
    %3151 = vmatprep.subr.mxu0 0.0
    %3152 = vmatpush2.msra.mxu0 0.0
    %3153 = vmatprep.mubr.f32.mxu0 0.0
    %3154 = vmatmul.mubr.f32.gmra.mxu0 %v3085
    %v3155 = vpop.f32.mrf.mxu0
    %v3156 = vadd.f32 0.0, %v3155
    %v3157 = vpop.f32.mrf.mxu0
    %3158 = vmatprep.mubr.f32.mxu0 0.0
    %3159 = vmatmul.mubr.f32.gmra.mxu0 %v3087
    %v3160 = vpop.f32.mrf.mxu0
    %v3161 = vadd.f32 0.0, %v3160
    %v3162 = vpop.f32.mrf.mxu0
    %3163 = vdwg.mxu0
    %3164 = vrot.lane.b32.xlu0 %v2422, 32
    %v3165 = vpop.permute.xlu0 %3164
    %3166 = vrot.lane.b32.xlu0 %v2423, 32
    %v3167 = vpop.permute.xlu0 %3166
    %3168 = vrot.lane.b32.xlu0 %v2424, 32
    %v3169 = vpop.permute.xlu0 %3168
    %3170 = vrot.lane.b32.xlu0 %v2425, 32
    %v3171 = vpop.permute.xlu0 %3170
    %v3172 = vsel %vm1519, %v3165, %v3167
    %v3173 = vsel %vm1519, %v3169, %v3171
    %v3174 = vsel %vm1529, %v3172, 0
    %v3176 = vsel %vm1529, %v3173, 0
    %3178 = vmatprep.subr.mxu0 0.0
    %3179 = vmatpush1.msra.mxu0 0.0
    %3180 = vmatprep.subr.mxu0 0.0
    %3181 = vmatpush1.msra.mxu0 0.0
    %3182 = vmatprep.subr.mxu0 0.0
    %3183 = vmatpush1.msra.mxu0 0.0
    %3184 = vmatprep.subr.mxu0 0.0
    %3185 = vmatpush1.msra.mxu0 0.0
    %3186 = vmatprep.subr.mxu0 0.0
    %3187 = vmatpush1.msra.mxu0 0.0
    %3188 = vmatprep.subr.mxu0 0.0
    %3189 = vmatpush1.msra.mxu0 0.0
    %3190 = vmatprep.subr.mxu0 0.0
    %3191 = vmatpush1.msra.mxu0 0.0
    %3192 = vmatprep.subr.mxu0 0.0
    %3193 = vmatpush1.msra.mxu0 0.0
    %3194 = vmatprep.subr.mxu0 0.0
    %3195 = vmatpush1.msra.mxu0 0.0
    %3196 = vmatprep.subr.mxu0 0.0
    %3197 = vmatpush1.msra.mxu0 0.0
    %3198 = vmatprep.subr.mxu0 0.0
    %3199 = vmatpush1.msra.mxu0 %v2445
    %3200 = vmatprep.subr.mxu0 0.0
    %3201 = vmatpush1.msra.mxu0 %v2444
    %3202 = vmatprep.subr.mxu0 0.0
    %3203 = vmatpush1.msra.mxu0 %v2418
    %3204 = vmatprep.subr.mxu0 0.0
    %3205 = vmatpush1.msra.mxu0 %v2417
    %3206 = vmatprep.subr.mxu0 0.0
    %3207 = vmatpush1.msra.mxu0 %v2437
    %3208 = vmatprep.subr.mxu0 0.0
    %3209 = vmatpush1.msra.mxu0 %v2436
    %3210 = vmatprep.subr.mxu0 0.0
    %3211 = vmatpush2.msra.mxu0 0.0
    %3212 = vmatprep.subr.mxu0 0.0
    %3213 = vmatpush2.msra.mxu0 0.0
    %3214 = vmatprep.subr.mxu0 0.0
    %3215 = vmatpush2.msra.mxu0 0.0
    %3216 = vmatprep.subr.mxu0 0.0
    %3217 = vmatpush2.msra.mxu0 0.0
    %3218 = vmatprep.subr.mxu0 0.0
    %3219 = vmatpush2.msra.mxu0 0.0
    %3220 = vmatprep.subr.mxu0 0.0
    %3221 = vmatpush2.msra.mxu0 0.0
    %3222 = vmatprep.subr.mxu0 0.0
    %3223 = vmatpush2.msra.mxu0 0.0
    %3224 = vmatprep.subr.mxu0 0.0
    %3225 = vmatpush2.msra.mxu0 0.0
    %3226 = vmatprep.subr.mxu0 0.0
    %3227 = vmatpush2.msra.mxu0 0.0
    %3228 = vmatprep.subr.mxu0 0.0
    %3229 = vmatpush2.msra.mxu0 0.0
    %3230 = vmatprep.subr.mxu0 0.0
    %3231 = vmatpush2.msra.mxu0 0.0
    %3232 = vmatprep.subr.mxu0 0.0
    %3233 = vmatpush2.msra.mxu0 0.0
    %3234 = vmatprep.subr.mxu0 0.0
    %3235 = vmatpush2.msra.mxu0 0.0
    %3236 = vmatprep.subr.mxu0 0.0
    %3237 = vmatpush2.msra.mxu0 0.0
    %3238 = vmatprep.subr.mxu0 0.0
    %3239 = vmatpush2.msra.mxu0 0.0
    %3240 = vmatprep.subr.mxu0 0.0
    %3241 = vmatpush2.msra.mxu0 0.0
    %3242 = vmatprep.mubr.f32.mxu0 0.0
    %3243 = vmatmul.mubr.f32.gmra.mxu0 %v3174
    %v3244 = vpop.f32.mrf.mxu0
    %v3245 = vadd.f32 %v3156, %v3244
    %v3246 = vpop.f32.mrf.mxu0
    %3247 = vmatprep.mubr.f32.mxu0 0.0
    %3248 = vmatmul.mubr.f32.gmra.mxu0 %v3176
    %v3249 = vpop.f32.mrf.mxu0
    %v3250 = vadd.f32 %v3161, %v3249
    %v3251 = vpop.f32.mrf.mxu0
    %3252 = vdwg.mxu0
    %3253 = vset.pattern.permute.xlu0 25
    %3254 = vperm.xlu0 %3253, %v2423
    %v3255 = vpop.permute.xlu0 %3254
    %3257 = vset.pattern.permute.xlu0 25
    %3258 = vperm.xlu0 %3257, %v2425
    %v3259 = vpop.permute.xlu0 %3258
    %v3261 = vadd.f32 %v3245, %v3255
    %v3262 = vadd.f32 %v3250, %v3259
    %v3263 = vadd.f32 %v2547, %v1543
    %v3264 = vadd.f32 %v2552, %v1544
    %v3265 = vmax.f32 %v3263, 0.0
    %v3266 = vmax.f32 %v3264, 0.0
    %v3267 = vadd.f32 %v3261, %v1545
    %v3268 = vadd.f32 %v3262, %v1546
    %v3269 = vmax.f32 %v3267, 0.0
    %v3270 = vmax.f32 %v3268, 0.0
    %s3271 = scalar_lea.vmem %s8, 64
    %v3272 = vld [vmem:[%s3271] sm:$0xff]
    %v3273 = vld [vmem:[%s3271 + $0x8] sm:$0xff]
    %v3274 = vld [vmem:[%s3271 + $0x10] sm:$0xff]
    %v3275 = vld [vmem:[%s3271 + $0x18] sm:$0xff]
    %s3276 = scalar_lea.vmem %s9, 16
    %v3277 = vld [vmem:[%s3276] sm:$0xff]
    %3280 = vrot.lane.b32.xlu0 %v3265, 8
    %v3281 = vpop.permute.xlu0 %3280
    %3282 = vrot.lane.b32.xlu0 %v3266, 8
    %v3283 = vpop.permute.xlu0 %3282
    %v3286 = vsel %vm76, 0.0, %v3281
    %v3287 = vsel %vm76, 0.0, %v3283
    %3288 = vrot.lane.b32.xlu0 %v3265, 120
    %v3289 = vpop.permute.xlu0 %3288
    %3290 = vrot.lane.b32.xlu0 %v3266, 120
    %v3291 = vpop.permute.xlu0 %3290
    %v3294 = vsel %vm1534, %v3289, 0.0
    %v3295 = vsel %vm1534, %v3291, 0.0
    %3298 = vrot.lane.b32.xlu0 %v3269, 8
    %v3299 = vpop.permute.xlu0 %3298
    %3300 = vrot.lane.b32.xlu0 %v3270, 8
    %v3301 = vpop.permute.xlu0 %3300
    %v3304 = vsel %vm76, 0.0, %v3299
    %v3305 = vsel %vm76, 0.0, %v3301
    %3306 = vrot.lane.b32.xlu0 %v3269, 120
    %v3307 = vpop.permute.xlu0 %3306
    %3308 = vrot.lane.b32.xlu0 %v3270, 120
    %v3309 = vpop.permute.xlu0 %3308
    %v3312 = vsel %vm1534, %v3307, 0.0
    %v3313 = vsel %vm1534, %v3309, 0.0
    %3315 = vset.pattern.permute.xlu0 24
    %3316 = vperm.xlu0 %3315, %v3273
    %v3317 = vpop.permute.xlu0 %3316
    %3320 = vset.pattern.permute.xlu0 24
    %3321 = vperm.xlu0 %3320, %v3275
    %v3322 = vpop.permute.xlu0 %3321
    %v3325 = vsel %vm1626, %v3272, 0
    %v3328 = vsel %vm1626, %v3274, 0
    %3330 = vmatprep.subr.mxu0 0.0
    %3331 = vmatpush1.msra.mxu0 0.0
    %3332 = vmatprep.subr.mxu0 0.0
    %3333 = vmatpush1.msra.mxu0 0.0
    %3334 = vmatprep.subr.mxu0 0.0
    %3335 = vmatpush1.msra.mxu0 0.0
    %3336 = vmatprep.subr.mxu0 0.0
    %3337 = vmatpush1.msra.mxu0 0.0
    %3338 = vmatprep.subr.mxu0 0.0
    %3339 = vmatpush1.msra.mxu0 %v3313
    %3340 = vmatprep.subr.mxu0 0.0
    %3341 = vmatpush1.msra.mxu0 %v3312
    %3342 = vmatprep.subr.mxu0 0.0
    %3343 = vmatpush1.msra.mxu0 %v3270
    %3344 = vmatprep.subr.mxu0 0.0
    %3345 = vmatpush1.msra.mxu0 %v3269
    %3346 = vmatprep.subr.mxu0 0.0
    %3347 = vmatpush1.msra.mxu0 %v3305
    %3348 = vmatprep.subr.mxu0 0.0
    %3349 = vmatpush1.msra.mxu0 %v3304
    %3350 = vmatprep.subr.mxu0 0.0
    %3351 = vmatpush1.msra.mxu0 %v3295
    %3352 = vmatprep.subr.mxu0 0.0
    %3353 = vmatpush1.msra.mxu0 %v3294
    %3354 = vmatprep.subr.mxu0 0.0
    %3355 = vmatpush1.msra.mxu0 %v3266
    %3356 = vmatprep.subr.mxu0 0.0
    %3357 = vmatpush1.msra.mxu0 %v3265
    %3358 = vmatprep.subr.mxu0 0.0
    %3359 = vmatpush1.msra.mxu0 %v3287
    %3360 = vmatprep.subr.mxu0 0.0
    %3361 = vmatpush1.msra.mxu0 %v3286
    %3362 = vmatprep.subr.mxu0 0.0
    %3363 = vmatpush2.msra.mxu0 0.0
    %3364 = vmatprep.subr.mxu0 0.0
    %3365 = vmatpush2.msra.mxu0 0.0
    %3366 = vmatprep.subr.mxu0 0.0
    %3367 = vmatpush2.msra.mxu0 0.0
    %3368 = vmatprep.subr.mxu0 0.0
    %3369 = vmatpush2.msra.mxu0 0.0
    %3370 = vmatprep.subr.mxu0 0.0
    %3371 = vmatpush2.msra.mxu0 0.0
    %3372 = vmatprep.subr.mxu0 0.0
    %3373 = vmatpush2.msra.mxu0 0.0
    %3374 = vmatprep.subr.mxu0 0.0
    %3375 = vmatpush2.msra.mxu0 0.0
    %3376 = vmatprep.subr.mxu0 0.0
    %3377 = vmatpush2.msra.mxu0 0.0
    %3378 = vmatprep.subr.mxu0 0.0
    %3379 = vmatpush2.msra.mxu0 0.0
    %3380 = vmatprep.subr.mxu0 0.0
    %3381 = vmatpush2.msra.mxu0 0.0
    %3382 = vmatprep.subr.mxu0 0.0
    %3383 = vmatpush2.msra.mxu0 0.0
    %3384 = vmatprep.subr.mxu0 0.0
    %3385 = vmatpush2.msra.mxu0 0.0
    %3386 = vmatprep.subr.mxu0 0.0
    %3387 = vmatpush2.msra.mxu0 0.0
    %3388 = vmatprep.subr.mxu0 0.0
    %3389 = vmatpush2.msra.mxu0 0.0
    %3390 = vmatprep.subr.mxu0 0.0
    %3391 = vmatpush2.msra.mxu0 0.0
    %3392 = vmatprep.subr.mxu0 0.0
    %3393 = vmatpush2.msra.mxu0 0.0
    %3394 = vmatprep.mubr.f32.mxu0 0.0
    %3395 = vmatmul.mubr.f32.gmra.mxu0 %v3325
    %v3396 = vpop.f32.mrf.mxu0
    %v3397 = vadd.f32 %v3317, %v3396
    %v3398 = vpop.f32.mrf.mxu0
    %3399 = vmatprep.mubr.f32.mxu0 0.0
    %3400 = vmatmul.mubr.f32.gmra.mxu0 %v3328
    %v3401 = vpop.f32.mrf.mxu0
    %v3402 = vadd.f32 %v3322, %v3401
    %v3403 = vpop.f32.mrf.mxu0
    %3404 = vdwg.mxu0
    %3406 = vset.pattern.permute.xlu0 48
    %3407 = vperm.xlu0 %3406, %v3277
    %v3408 = vpop.permute.xlu0 %3407
    %v3410 = vsel %vm183, %v3277, 0
    %3412 = vmatprep.subr.mxu0 0.0
    %3413 = vmatpush1.msra.mxu0 0.0
    %3414 = vmatprep.subr.mxu0 0.0
    %3415 = vmatpush1.msra.mxu0 0.0
    %3416 = vmatprep.subr.mxu0 0.0
    %3417 = vmatpush1.msra.mxu0 0.0
    %3418 = vmatprep.subr.mxu0 0.0
    %3419 = vmatpush1.msra.mxu0 0.0
    %3420 = vmatprep.subr.mxu0 0.0
    %3421 = vmatpush1.msra.mxu0 0.0
    %3422 = vmatprep.subr.mxu0 0.0
    %3423 = vmatpush1.msra.mxu0 0.0
    %3424 = vmatprep.subr.mxu0 0.0
    %3425 = vmatpush1.msra.mxu0 0.0
    %3426 = vmatprep.subr.mxu0 0.0
    %3427 = vmatpush1.msra.mxu0 0.0
    %3428 = vmatprep.subr.mxu0 0.0
    %3429 = vmatpush1.msra.mxu0 0.0
    %3430 = vmatprep.subr.mxu0 0.0
    %3431 = vmatpush1.msra.mxu0 0.0
    %3432 = vmatprep.subr.mxu0 0.0
    %3433 = vmatpush1.msra.mxu0 0.0
    %3434 = vmatprep.subr.mxu0 0.0
    %3435 = vmatpush1.msra.mxu0 0.0
    %3436 = vmatprep.subr.mxu0 0.0
    %3437 = vmatpush1.msra.mxu0 0.0
    %3438 = vmatprep.subr.mxu0 0.0
    %3439 = vmatpush1.msra.mxu0 0.0
    %3440 = vmatprep.subr.mxu0 0.0
    %3441 = vmatpush1.msra.mxu0 %v3270
    %3442 = vmatprep.subr.mxu0 0.0
    %3443 = vmatpush1.msra.mxu0 %v3269
    %3444 = vmatprep.subr.mxu0 0.0
    %3445 = vmatpush2.msra.mxu0 0.0
    %3446 = vmatprep.subr.mxu0 0.0
    %3447 = vmatpush2.msra.mxu0 0.0
    %3448 = vmatprep.subr.mxu0 0.0
    %3449 = vmatpush2.msra.mxu0 0.0
    %3450 = vmatprep.subr.mxu0 0.0
    %3451 = vmatpush2.msra.mxu0 0.0
    %3452 = vmatprep.subr.mxu0 0.0
    %3453 = vmatpush2.msra.mxu0 0.0
    %3454 = vmatprep.subr.mxu0 0.0
    %3455 = vmatpush2.msra.mxu0 0.0
    %3456 = vmatprep.subr.mxu0 0.0
    %3457 = vmatpush2.msra.mxu0 0.0
    %3458 = vmatprep.subr.mxu0 0.0
    %3459 = vmatpush2.msra.mxu0 0.0
    %3460 = vmatprep.subr.mxu0 0.0
    %3461 = vmatpush2.msra.mxu0 0.0
    %3462 = vmatprep.subr.mxu0 0.0
    %3463 = vmatpush2.msra.mxu0 0.0
    %3464 = vmatprep.subr.mxu0 0.0
    %3465 = vmatpush2.msra.mxu0 0.0
    %3466 = vmatprep.subr.mxu0 0.0
    %3467 = vmatpush2.msra.mxu0 0.0
    %3468 = vmatprep.subr.mxu0 0.0
    %3469 = vmatpush2.msra.mxu0 0.0
    %3470 = vmatprep.subr.mxu0 0.0
    %3471 = vmatpush2.msra.mxu0 0.0
    %3472 = vmatprep.subr.mxu0 0.0
    %3473 = vmatpush2.msra.mxu0 0.0
    %3474 = vmatprep.subr.mxu0 0.0
    %3475 = vmatpush2.msra.mxu0 0.0
    %3476 = vmatprep.mubr.f32.mxu0 0.0
    %3477 = vmatmul.mubr.f32.gmra.mxu0 %v3410
    %v3478 = vpop.f32.mrf.mxu0
    %v3479 = vadd.f32 %v3408, %v3478
    %v3480 = vpop.f32.mrf.mxu0
    %3481 = vdwg.mxu0
    %v3482 = vmax.f32 %v3479, 0.0
    %v3484 = vsel %vm1786, %v3482, 0
    %3486 = vmatprep.subr.mxu0 0.0
    %3487 = vmatpush1.msra.mxu0 0.0
    %3488 = vmatprep.subr.mxu0 0.0
    %3489 = vmatpush1.msra.mxu0 0.0
    %3490 = vmatprep.subr.mxu0 0.0
    %3491 = vmatpush1.msra.mxu0 0.0
    %3492 = vmatprep.subr.mxu0 0.0
    %3493 = vmatpush1.msra.mxu0 0.0
    %3494 = vmatprep.subr.mxu0 0.0
    %3495 = vmatpush1.msra.mxu0 0.0
    %3496 = vmatprep.subr.mxu0 0.0
    %3497 = vmatpush1.msra.mxu0 0.0
    %3498 = vmatprep.subr.mxu0 0.0
    %3499 = vmatpush1.msra.mxu0 0.0
    %3500 = vmatprep.subr.mxu0 0.0
    %3501 = vmatpush1.msra.mxu0 0.0
    %3502 = vmatprep.subr.mxu0 0.0
    %3503 = vmatpush1.msra.mxu0 %v1554
    %3504 = vmatprep.subr.mxu0 0.0
    %3505 = vmatpush1.msra.mxu0 %v1553
    %3506 = vmatprep.subr.mxu0 0.0
    %3507 = vmatpush1.msra.mxu0 %v1552
    %3508 = vmatprep.subr.mxu0 0.0
    %3509 = vmatpush1.msra.mxu0 %v1551
    %3510 = vmatprep.subr.mxu0 0.0
    %3511 = vmatpush1.msra.mxu0 %v1550
    %3512 = vmatprep.subr.mxu0 0.0
    %3513 = vmatpush1.msra.mxu0 %v1549
    %3514 = vmatprep.subr.mxu0 0.0
    %3515 = vmatpush1.msra.mxu0 %v1548
    %3516 = vmatprep.subr.mxu0 0.0
    %3517 = vmatpush1.msra.mxu0 %v1547
    %3518 = vmatprep.subr.mxu0 0.0
    %3519 = vmatpush2.msra.mxu0 0.0
    %3520 = vmatprep.subr.mxu0 0.0
    %3521 = vmatpush2.msra.mxu0 0.0
    %3522 = vmatprep.subr.mxu0 0.0
    %3523 = vmatpush2.msra.mxu0 0.0
    %3524 = vmatprep.subr.mxu0 0.0
    %3525 = vmatpush2.msra.mxu0 0.0
    %3526 = vmatprep.subr.mxu0 0.0
    %3527 = vmatpush2.msra.mxu0 0.0
    %3528 = vmatprep.subr.mxu0 0.0
    %3529 = vmatpush2.msra.mxu0 0.0
    %3530 = vmatprep.subr.mxu0 0.0
    %3531 = vmatpush2.msra.mxu0 0.0
    %3532 = vmatprep.subr.mxu0 0.0
    %3533 = vmatpush2.msra.mxu0 0.0
    %3534 = vmatprep.subr.mxu0 0.0
    %3535 = vmatpush2.msra.mxu0 0.0
    %3536 = vmatprep.subr.mxu0 0.0
    %3537 = vmatpush2.msra.mxu0 0.0
    %3538 = vmatprep.subr.mxu0 0.0
    %3539 = vmatpush2.msra.mxu0 0.0
    %3540 = vmatprep.subr.mxu0 0.0
    %3541 = vmatpush2.msra.mxu0 0.0
    %3542 = vmatprep.subr.mxu0 0.0
    %3543 = vmatpush2.msra.mxu0 0.0
    %3544 = vmatprep.subr.mxu0 0.0
    %3545 = vmatpush2.msra.mxu0 0.0
    %3546 = vmatprep.subr.mxu0 0.0
    %3547 = vmatpush2.msra.mxu0 0.0
    %3548 = vmatprep.subr.mxu0 0.0
    %3549 = vmatpush2.msra.mxu0 0.0
    %3550 = vmatprep.mubr.f32.mxu0 0.0
    %3551 = vmatmul.mubr.f32.gmra.mxu0 %v3484
    %v3552 = vpop.f32.mrf.mxu0
    %v3553 = vadd.f32 0.0, %v3552
    %v3554 = vpop.f32.mrf.mxu0
    %3555 = vdwg.mxu0
    %3556 = vmatprep.subr.mxu0 0.0
    %3557 = vmatpush1.msra.mxu0 0.0
    %3558 = vmatprep.subr.mxu0 0.0
    %3559 = vmatpush1.msra.mxu0 0.0
    %3560 = vmatprep.subr.mxu0 0.0
    %3561 = vmatpush1.msra.mxu0 0.0
    %3562 = vmatprep.subr.mxu0 0.0
    %3563 = vmatpush1.msra.mxu0 0.0
    %3564 = vmatprep.subr.mxu0 0.0
    %3565 = vmatpush1.msra.mxu0 0.0
    %3566 = vmatprep.subr.mxu0 0.0
    %3567 = vmatpush1.msra.mxu0 0.0
    %3568 = vmatprep.subr.mxu0 0.0
    %3569 = vmatpush1.msra.mxu0 0.0
    %3570 = vmatprep.subr.mxu0 0.0
    %3571 = vmatpush1.msra.mxu0 0.0
    %3572 = vmatprep.subr.mxu0 0.0
    %3573 = vmatpush1.msra.mxu0 %v1563
    %3574 = vmatprep.subr.mxu0 0.0
    %3575 = vmatpush1.msra.mxu0 %v1562
    %3576 = vmatprep.subr.mxu0 0.0
    %3577 = vmatpush1.msra.mxu0 %v1561
    %3578 = vmatprep.subr.mxu0 0.0
    %3579 = vmatpush1.msra.mxu0 %v1560
    %3580 = vmatprep.subr.mxu0 0.0
    %3581 = vmatpush1.msra.mxu0 %v1559
    %3582 = vmatprep.subr.mxu0 0.0
    %3583 = vmatpush1.msra.mxu0 %v1558
    %3584 = vmatprep.subr.mxu0 0.0
    %3585 = vmatpush1.msra.mxu0 %v1557
    %3586 = vmatprep.subr.mxu0 0.0
    %3587 = vmatpush1.msra.mxu0 %v1556
    %3588 = vmatprep.subr.mxu0 0.0
    %3589 = vmatpush2.msra.mxu0 0.0
    %3590 = vmatprep.subr.mxu0 0.0
    %3591 = vmatpush2.msra.mxu0 0.0
    %3592 = vmatprep.subr.mxu0 0.0
    %3593 = vmatpush2.msra.mxu0 0.0
    %3594 = vmatprep.subr.mxu0 0.0
    %3595 = vmatpush2.msra.mxu0 0.0
    %3596 = vmatprep.subr.mxu0 0.0
    %3597 = vmatpush2.msra.mxu0 0.0
    %3598 = vmatprep.subr.mxu0 0.0
    %3599 = vmatpush2.msra.mxu0 0.0
    %3600 = vmatprep.subr.mxu0 0.0
    %3601 = vmatpush2.msra.mxu0 0.0
    %3602 = vmatprep.subr.mxu0 0.0
    %3603 = vmatpush2.msra.mxu0 0.0
    %3604 = vmatprep.subr.mxu0 0.0
    %3605 = vmatpush2.msra.mxu0 0.0
    %3606 = vmatprep.subr.mxu0 0.0
    %3607 = vmatpush2.msra.mxu0 0.0
    %3608 = vmatprep.subr.mxu0 0.0
    %3609 = vmatpush2.msra.mxu0 0.0
    %3610 = vmatprep.subr.mxu0 0.0
    %3611 = vmatpush2.msra.mxu0 0.0
    %3612 = vmatprep.subr.mxu0 0.0
    %3613 = vmatpush2.msra.mxu0 0.0
    %3614 = vmatprep.subr.mxu0 0.0
    %3615 = vmatpush2.msra.mxu0 0.0
    %3616 = vmatprep.subr.mxu0 0.0
    %3617 = vmatpush2.msra.mxu0 0.0
    %3618 = vmatprep.subr.mxu0 0.0
    %3619 = vmatpush2.msra.mxu0 0.0
    %3620 = vmatprep.mubr.f32.mxu0 0.0
    %3621 = vmatmul.mubr.f32.gmra.mxu0 %v3484
    %v3622 = vpop.f32.mrf.mxu0
    %v3623 = vadd.f32 0.0, %v3622
    %v3624 = vpop.f32.mrf.mxu0
    %3625 = vdwg.mxu0
    %3626 = vset.pattern.permute.xlu0 49
    %3627 = vperm.xlu0 %3626, %v3277
    %v3628 = vpop.permute.xlu0 %3627
    %3630 = vrot.lane.b32.xlu0 %v3277, 112
    %v3631 = vpop.permute.xlu0 %3630
    %v3632 = vsel %vm183, %v3631, 0
    %3634 = vmatprep.subr.mxu0 0.0
    %3635 = vmatpush1.msra.mxu0 0.0
    %3636 = vmatprep.subr.mxu0 0.0
    %3637 = vmatpush1.msra.mxu0 0.0
    %3638 = vmatprep.subr.mxu0 0.0
    %3639 = vmatpush1.msra.mxu0 0.0
    %3640 = vmatprep.subr.mxu0 0.0
    %3641 = vmatpush1.msra.mxu0 0.0
    %3642 = vmatprep.subr.mxu0 0.0
    %3643 = vmatpush1.msra.mxu0 0.0
    %3644 = vmatprep.subr.mxu0 0.0
    %3645 = vmatpush1.msra.mxu0 0.0
    %3646 = vmatprep.subr.mxu0 0.0
    %3647 = vmatpush1.msra.mxu0 0.0
    %3648 = vmatprep.subr.mxu0 0.0
    %3649 = vmatpush1.msra.mxu0 0.0
    %3650 = vmatprep.subr.mxu0 0.0
    %3651 = vmatpush1.msra.mxu0 0.0
    %3652 = vmatprep.subr.mxu0 0.0
    %3653 = vmatpush1.msra.mxu0 0.0
    %3654 = vmatprep.subr.mxu0 0.0
    %3655 = vmatpush1.msra.mxu0 0.0
    %3656 = vmatprep.subr.mxu0 0.0
    %3657 = vmatpush1.msra.mxu0 0.0
    %3658 = vmatprep.subr.mxu0 0.0
    %3659 = vmatpush1.msra.mxu0 0.0
    %3660 = vmatprep.subr.mxu0 0.0
    %3661 = vmatpush1.msra.mxu0 0.0
    %3662 = vmatprep.subr.mxu0 0.0
    %3663 = vmatpush1.msra.mxu0 %v3623
    %3664 = vmatprep.subr.mxu0 0.0
    %3665 = vmatpush1.msra.mxu0 %v3553
    %3666 = vmatprep.subr.mxu0 0.0
    %3667 = vmatpush2.msra.mxu0 0.0
    %3668 = vmatprep.subr.mxu0 0.0
    %3669 = vmatpush2.msra.mxu0 0.0
    %3670 = vmatprep.subr.mxu0 0.0
    %3671 = vmatpush2.msra.mxu0 0.0
    %3672 = vmatprep.subr.mxu0 0.0
    %3673 = vmatpush2.msra.mxu0 0.0
    %3674 = vmatprep.subr.mxu0 0.0
    %3675 = vmatpush2.msra.mxu0 0.0
    %3676 = vmatprep.subr.mxu0 0.0
    %3677 = vmatpush2.msra.mxu0 0.0
    %3678 = vmatprep.subr.mxu0 0.0
    %3679 = vmatpush2.msra.mxu0 0.0
    %3680 = vmatprep.subr.mxu0 0.0
    %3681 = vmatpush2.msra.mxu0 0.0
    %3682 = vmatprep.subr.mxu0 0.0
    %3683 = vmatpush2.msra.mxu0 0.0
    %3684 = vmatprep.subr.mxu0 0.0
    %3685 = vmatpush2.msra.mxu0 0.0
    %3686 = vmatprep.subr.mxu0 0.0
    %3687 = vmatpush2.msra.mxu0 0.0
    %3688 = vmatprep.subr.mxu0 0.0
    %3689 = vmatpush2.msra.mxu0 0.0
    %3690 = vmatprep.subr.mxu0 0.0
    %3691 = vmatpush2.msra.mxu0 0.0
    %3692 = vmatprep.subr.mxu0 0.0
    %3693 = vmatpush2.msra.mxu0 0.0
    %3694 = vmatprep.subr.mxu0 0.0
    %3695 = vmatpush2.msra.mxu0 0.0
    %3696 = vmatprep.subr.mxu0 0.0
    %3697 = vmatpush2.msra.mxu0 0.0
    %3698 = vmatprep.mubr.f32.mxu0 0.0
    %3699 = vmatmul.mubr.f32.gmra.mxu0 %v3632
    %v3700 = vpop.f32.mrf.mxu0
    %v3701 = vadd.f32 %v3628, %v3700
    %v3702 = vpop.f32.mrf.mxu0
    %3703 = vdwg.mxu0
    %v3704 = vmax.f32 %v3701, 0.0
    %3705 = vset.pattern.permute.xlu0 50
    %3706 = vperm.xlu0 %3705, %v3277
    %v3707 = vpop.permute.xlu0 %3706
    %3709 = vrot.lane.b32.xlu0 %v3277, 96
    %v3710 = vpop.permute.xlu0 %3709
    %v3711 = vsel %vm183, %v3710, 0
    %3713 = vmatprep.subr.mxu0 0.0
    %3714 = vmatpush1.msra.mxu0 0.0
    %3715 = vmatprep.subr.mxu0 0.0
    %3716 = vmatpush1.msra.mxu0 0.0
    %3717 = vmatprep.subr.mxu0 0.0
    %3718 = vmatpush1.msra.mxu0 0.0
    %3719 = vmatprep.subr.mxu0 0.0
    %3720 = vmatpush1.msra.mxu0 0.0
    %3721 = vmatprep.subr.mxu0 0.0
    %3722 = vmatpush1.msra.mxu0 0.0
    %3723 = vmatprep.subr.mxu0 0.0
    %3724 = vmatpush1.msra.mxu0 0.0
    %3725 = vmatprep.subr.mxu0 0.0
    %3726 = vmatpush1.msra.mxu0 0.0
    %3727 = vmatprep.subr.mxu0 0.0
    %3728 = vmatpush1.msra.mxu0 0.0
    %3729 = vmatprep.subr.mxu0 0.0
    %3730 = vmatpush1.msra.mxu0 0.0
    %3731 = vmatprep.subr.mxu0 0.0
    %3732 = vmatpush1.msra.mxu0 0.0
    %3733 = vmatprep.subr.mxu0 0.0
    %3734 = vmatpush1.msra.mxu0 0.0
    %3735 = vmatprep.subr.mxu0 0.0
    %3736 = vmatpush1.msra.mxu0 0.0
    %3737 = vmatprep.subr.mxu0 0.0
    %3738 = vmatpush1.msra.mxu0 0.0
    %3739 = vmatprep.subr.mxu0 0.0
    %3740 = vmatpush1.msra.mxu0 0.0
    %3741 = vmatprep.subr.mxu0 0.0
    %3742 = vmatpush1.msra.mxu0 %v3623
    %3743 = vmatprep.subr.mxu0 0.0
    %3744 = vmatpush1.msra.mxu0 %v3553
    %3745 = vmatprep.subr.mxu0 0.0
    %3746 = vmatpush2.msra.mxu0 0.0
    %3747 = vmatprep.subr.mxu0 0.0
    %3748 = vmatpush2.msra.mxu0 0.0
    %3749 = vmatprep.subr.mxu0 0.0
    %3750 = vmatpush2.msra.mxu0 0.0
    %3751 = vmatprep.subr.mxu0 0.0
    %3752 = vmatpush2.msra.mxu0 0.0
    %3753 = vmatprep.subr.mxu0 0.0
    %3754 = vmatpush2.msra.mxu0 0.0
    %3755 = vmatprep.subr.mxu0 0.0
    %3756 = vmatpush2.msra.mxu0 0.0
    %3757 = vmatprep.subr.mxu0 0.0
    %3758 = vmatpush2.msra.mxu0 0.0
    %3759 = vmatprep.subr.mxu0 0.0
    %3760 = vmatpush2.msra.mxu0 0.0
    %3761 = vmatprep.subr.mxu0 0.0
    %3762 = vmatpush2.msra.mxu0 0.0
    %3763 = vmatprep.subr.mxu0 0.0
    %3764 = vmatpush2.msra.mxu0 0.0
    %3765 = vmatprep.subr.mxu0 0.0
    %3766 = vmatpush2.msra.mxu0 0.0
    %3767 = vmatprep.subr.mxu0 0.0
    %3768 = vmatpush2.msra.mxu0 0.0
    %3769 = vmatprep.subr.mxu0 0.0
    %3770 = vmatpush2.msra.mxu0 0.0
    %3771 = vmatprep.subr.mxu0 0.0
    %3772 = vmatpush2.msra.mxu0 0.0
    %3773 = vmatprep.subr.mxu0 0.0
    %3774 = vmatpush2.msra.mxu0 0.0
    %3775 = vmatprep.subr.mxu0 0.0
    %3776 = vmatpush2.msra.mxu0 0.0
    %3777 = vmatprep.mubr.f32.mxu0 0.0
    %3778 = vmatmul.mubr.f32.gmra.mxu0 %v3711
    %v3779 = vpop.f32.mrf.mxu0
    %v3780 = vadd.f32 %v3707, %v3779
    %v3781 = vpop.f32.mrf.mxu0
    %3782 = vdwg.mxu0
    %v3783 = vmax.f32 %v3780, 0.0
    %v3785 = vsel %vm1524, %v3783, 0
    %3787 = vmatprep.subr.mxu0 0.0
    %3788 = vmatpush1.msra.mxu0 0.0
    %3789 = vmatprep.subr.mxu0 0.0
    %3790 = vmatpush1.msra.mxu0 0.0
    %3791 = vmatprep.subr.mxu0 0.0
    %3792 = vmatpush1.msra.mxu0 0.0
    %3793 = vmatprep.subr.mxu0 0.0
    %3794 = vmatpush1.msra.mxu0 0.0
    %3795 = vmatprep.subr.mxu0 0.0
    %3796 = vmatpush1.msra.mxu0 0.0
    %3797 = vmatprep.subr.mxu0 0.0
    %3798 = vmatpush1.msra.mxu0 0.0
    %3799 = vmatprep.subr.mxu0 0.0
    %3800 = vmatpush1.msra.mxu0 0.0
    %3801 = vmatprep.subr.mxu0 0.0
    %3802 = vmatpush1.msra.mxu0 0.0
    %3803 = vmatprep.subr.mxu0 0.0
    %3804 = vmatpush1.msra.mxu0 0.0
    %3805 = vmatprep.subr.mxu0 0.0
    %3806 = vmatpush1.msra.mxu0 0.0
    %3807 = vmatprep.subr.mxu0 0.0
    %3808 = vmatpush1.msra.mxu0 0.0
    %3809 = vmatprep.subr.mxu0 0.0
    %3810 = vmatpush1.msra.mxu0 %v1574
    %3811 = vmatprep.subr.mxu0 0.0
    %3812 = vmatpush1.msra.mxu0 %v1573
    %3813 = vmatprep.subr.mxu0 0.0
    %3814 = vmatpush1.msra.mxu0 %v1572
    %3815 = vmatprep.subr.mxu0 0.0
    %3816 = vmatpush1.msra.mxu0 %v1571
    %3817 = vmatprep.subr.mxu0 0.0
    %3818 = vmatpush1.msra.mxu0 %v1570
    %3819 = vmatprep.subr.mxu0 0.0
    %3820 = vmatpush2.msra.mxu0 0.0
    %3821 = vmatprep.subr.mxu0 0.0
    %3822 = vmatpush2.msra.mxu0 0.0
    %3823 = vmatprep.subr.mxu0 0.0
    %3824 = vmatpush2.msra.mxu0 0.0
    %3825 = vmatprep.subr.mxu0 0.0
    %3826 = vmatpush2.msra.mxu0 0.0
    %3827 = vmatprep.subr.mxu0 0.0
    %3828 = vmatpush2.msra.mxu0 0.0
    %3829 = vmatprep.subr.mxu0 0.0
    %3830 = vmatpush2.msra.mxu0 0.0
    %3831 = vmatprep.subr.mxu0 0.0
    %3832 = vmatpush2.msra.mxu0 0.0
    %3833 = vmatprep.subr.mxu0 0.0
    %3834 = vmatpush2.msra.mxu0 0.0
    %3835 = vmatprep.subr.mxu0 0.0
    %3836 = vmatpush2.msra.mxu0 0.0
    %3837 = vmatprep.subr.mxu0 0.0
    %3838 = vmatpush2.msra.mxu0 0.0
    %3839 = vmatprep.subr.mxu0 0.0
    %3840 = vmatpush2.msra.mxu0 0.0
    %3841 = vmatprep.subr.mxu0 0.0
    %3842 = vmatpush2.msra.mxu0 0.0
    %3843 = vmatprep.subr.mxu0 0.0
    %3844 = vmatpush2.msra.mxu0 0.0
    %3845 = vmatprep.subr.mxu0 0.0
    %3846 = vmatpush2.msra.mxu0 0.0
    %3847 = vmatprep.subr.mxu0 0.0
    %3848 = vmatpush2.msra.mxu0 0.0
    %3849 = vmatprep.subr.mxu0 0.0
    %3850 = vmatpush2.msra.mxu0 0.0
    %3851 = vmatprep.mubr.f32.mxu0 0.0
    %3852 = vmatmul.mubr.f32.gmra.mxu0 %v3785
    %v3853 = vpop.f32.mrf.mxu0
    %v3854 = vadd.f32 0.0, %v3853
    %v3855 = vpop.f32.mrf.mxu0
    %3856 = vdwg.mxu0
    %v3858 = vsel %vm1524, %v3704, 0
    %3860 = vmatprep.subr.mxu0 0.0
    %3861 = vmatpush1.msra.mxu0 0.0
    %3862 = vmatprep.subr.mxu0 0.0
    %3863 = vmatpush1.msra.mxu0 0.0
    %3864 = vmatprep.subr.mxu0 0.0
    %3865 = vmatpush1.msra.mxu0 0.0
    %3866 = vmatprep.subr.mxu0 0.0
    %3867 = vmatpush1.msra.mxu0 0.0
    %3868 = vmatprep.subr.mxu0 0.0
    %3869 = vmatpush1.msra.mxu0 0.0
    %3870 = vmatprep.subr.mxu0 0.0
    %3871 = vmatpush1.msra.mxu0 0.0
    %3872 = vmatprep.subr.mxu0 0.0
    %3873 = vmatpush1.msra.mxu0 0.0
    %3874 = vmatprep.subr.mxu0 0.0
    %3875 = vmatpush1.msra.mxu0 0.0
    %3876 = vmatprep.subr.mxu0 0.0
    %3877 = vmatpush1.msra.mxu0 0.0
    %3878 = vmatprep.subr.mxu0 0.0
    %3879 = vmatpush1.msra.mxu0 0.0
    %3880 = vmatprep.subr.mxu0 0.0
    %3881 = vmatpush1.msra.mxu0 0.0
    %3882 = vmatprep.subr.mxu0 0.0
    %3883 = vmatpush1.msra.mxu0 %v1568
    %3884 = vmatprep.subr.mxu0 0.0
    %3885 = vmatpush1.msra.mxu0 %v1567
    %3886 = vmatprep.subr.mxu0 0.0
    %3887 = vmatpush1.msra.mxu0 %v1566
    %3888 = vmatprep.subr.mxu0 0.0
    %3889 = vmatpush1.msra.mxu0 %v1565
    %3890 = vmatprep.subr.mxu0 0.0
    %3891 = vmatpush1.msra.mxu0 %v1564
    %3892 = vmatprep.subr.mxu0 0.0
    %3893 = vmatpush2.msra.mxu0 0.0
    %3894 = vmatprep.subr.mxu0 0.0
    %3895 = vmatpush2.msra.mxu0 0.0
    %3896 = vmatprep.subr.mxu0 0.0
    %3897 = vmatpush2.msra.mxu0 0.0
    %3898 = vmatprep.subr.mxu0 0.0
    %3899 = vmatpush2.msra.mxu0 0.0
    %3900 = vmatprep.subr.mxu0 0.0
    %3901 = vmatpush2.msra.mxu0 0.0
    %3902 = vmatprep.subr.mxu0 0.0
    %3903 = vmatpush2.msra.mxu0 0.0
    %3904 = vmatprep.subr.mxu0 0.0
    %3905 = vmatpush2.msra.mxu0 0.0
    %3906 = vmatprep.subr.mxu0 0.0
    %3907 = vmatpush2.msra.mxu0 0.0
    %3908 = vmatprep.subr.mxu0 0.0
    %3909 = vmatpush2.msra.mxu0 0.0
    %3910 = vmatprep.subr.mxu0 0.0
    %3911 = vmatpush2.msra.mxu0 0.0
    %3912 = vmatprep.subr.mxu0 0.0
    %3913 = vmatpush2.msra.mxu0 0.0
    %3914 = vmatprep.subr.mxu0 0.0
    %3915 = vmatpush2.msra.mxu0 0.0
    %3916 = vmatprep.subr.mxu0 0.0
    %3917 = vmatpush2.msra.mxu0 0.0
    %3918 = vmatprep.subr.mxu0 0.0
    %3919 = vmatpush2.msra.mxu0 0.0
    %3920 = vmatprep.subr.mxu0 0.0
    %3921 = vmatpush2.msra.mxu0 0.0
    %3922 = vmatprep.subr.mxu0 0.0
    %3923 = vmatpush2.msra.mxu0 0.0
    %3924 = vmatprep.mubr.f32.mxu0 0.0
    %3925 = vmatmul.mubr.f32.gmra.mxu0 %v3858
    %v3926 = vpop.f32.mrf.mxu0
    %v3927 = vadd.f32 %v3854, %v3926
    %v3928 = vpop.f32.mrf.mxu0
    %3929 = vdwg.mxu0
    %v3930 = vadd.f32 %v3482, %v3927
    %3931 = vrot.lane.b32.xlu0 %v3273, 112
    %v3932 = vpop.permute.xlu0 %3931
    %3933 = vrot.lane.b32.xlu0 %v3275, 112
    %v3934 = vpop.permute.xlu0 %3933
    %v3935 = vsel %vm76, %v3932, 0
    %v3937 = vsel %vm76, %v3934, 0
    %3939 = vmatprep.subr.mxu0 0.0
    %3940 = vmatpush1.msra.mxu0 0.0
    %3941 = vmatprep.subr.mxu0 0.0
    %3942 = vmatpush1.msra.mxu0 0.0
    %3943 = vmatprep.subr.mxu0 0.0
    %3944 = vmatpush1.msra.mxu0 0.0
    %3945 = vmatprep.subr.mxu0 0.0
    %3946 = vmatpush1.msra.mxu0 0.0
    %3947 = vmatprep.subr.mxu0 0.0
    %3948 = vmatpush1.msra.mxu0 0.0
    %3949 = vmatprep.subr.mxu0 0.0
    %3950 = vmatpush1.msra.mxu0 0.0
    %3951 = vmatprep.subr.mxu0 0.0
    %3952 = vmatpush1.msra.mxu0 0.0
    %3953 = vmatprep.subr.mxu0 0.0
    %3954 = vmatpush1.msra.mxu0 0.0
    %3955 = vmatprep.subr.mxu0 0.0
    %3956 = vmatpush1.msra.mxu0 0.0
    %3957 = vmatprep.subr.mxu0 0.0
    %3958 = vmatpush1.msra.mxu0 0.0
    %3959 = vmatprep.subr.mxu0 0.0
    %3960 = vmatpush1.msra.mxu0 0.0
    %3961 = vmatprep.subr.mxu0 0.0
    %3962 = vmatpush1.msra.mxu0 0.0
    %3963 = vmatprep.subr.mxu0 0.0
    %3964 = vmatpush1.msra.mxu0 0.0
    %3965 = vmatprep.subr.mxu0 0.0
    %3966 = vmatpush1.msra.mxu0 0.0
    %3967 = vmatprep.subr.mxu0 0.0
    %3968 = vmatpush1.msra.mxu0 0.0
    %3969 = vmatprep.subr.mxu0 0.0
    %3970 = vmatpush1.msra.mxu0 %v3930
    %3971 = vmatprep.subr.mxu0 0.0
    %3972 = vmatpush2.msra.mxu0 0.0
    %3973 = vmatprep.subr.mxu0 0.0
    %3974 = vmatpush2.msra.mxu0 0.0
    %3975 = vmatprep.subr.mxu0 0.0
    %3976 = vmatpush2.msra.mxu0 0.0
    %3977 = vmatprep.subr.mxu0 0.0
    %3978 = vmatpush2.msra.mxu0 0.0
    %3979 = vmatprep.subr.mxu0 0.0
    %3980 = vmatpush2.msra.mxu0 0.0
    %3981 = vmatprep.subr.mxu0 0.0
    %3982 = vmatpush2.msra.mxu0 0.0
    %3983 = vmatprep.subr.mxu0 0.0
    %3984 = vmatpush2.msra.mxu0 0.0
    %3985 = vmatprep.subr.mxu0 0.0
    %3986 = vmatpush2.msra.mxu0 0.0
    %3987 = vmatprep.subr.mxu0 0.0
    %3988 = vmatpush2.msra.mxu0 0.0
    %3989 = vmatprep.subr.mxu0 0.0
    %3990 = vmatpush2.msra.mxu0 0.0
    %3991 = vmatprep.subr.mxu0 0.0
    %3992 = vmatpush2.msra.mxu0 0.0
    %3993 = vmatprep.subr.mxu0 0.0
    %3994 = vmatpush2.msra.mxu0 0.0
    %3995 = vmatprep.subr.mxu0 0.0
    %3996 = vmatpush2.msra.mxu0 0.0
    %3997 = vmatprep.subr.mxu0 0.0
    %3998 = vmatpush2.msra.mxu0 0.0
    %3999 = vmatprep.subr.mxu0 0.0
    %4000 = vmatpush2.msra.mxu0 0.0
    %4001 = vmatprep.subr.mxu0 0.0
    %4002 = vmatpush2.msra.mxu0 0.0
    %4003 = vmatprep.mubr.f32.mxu0 0.0
    %4004 = vmatmul.mubr.f32.gmra.mxu0 %v3935
    %v4005 = vpop.f32.mrf.mxu0
    %v4006 = vadd.f32 0.0, %v4005
    %v4007 = vpop.f32.mrf.mxu0
    %4008 = vmatprep.mubr.f32.mxu0 0.0
    %4009 = vmatmul.mubr.f32.gmra.mxu0 %v3937
    %v4010 = vpop.f32.mrf.mxu0
    %v4011 = vadd.f32 0.0, %v4010
    %v4012 = vpop.f32.mrf.mxu0
    %4013 = vdwg.mxu0
    %4014 = vrot.lane.b32.xlu0 %v3272, 32
    %v4015 = vpop.permute.xlu0 %4014
    %4016 = vrot.lane.b32.xlu0 %v3273, 32
    %v4017 = vpop.permute.xlu0 %4016
    %4018 = vrot.lane.b32.xlu0 %v3274, 32
    %v4019 = vpop.permute.xlu0 %4018
    %4020 = vrot.lane.b32.xlu0 %v3275, 32
    %v4021 = vpop.permute.xlu0 %4020
    %v4022 = vsel %vm1519, %v4015, %v4017
    %v4023 = vsel %vm1519, %v4019, %v4021
    %v4024 = vsel %vm1529, %v4022, 0
    %v4026 = vsel %vm1529, %v4023, 0
    %4028 = vmatprep.subr.mxu0 0.0
    %4029 = vmatpush1.msra.mxu0 0.0
    %4030 = vmatprep.subr.mxu0 0.0
    %4031 = vmatpush1.msra.mxu0 0.0
    %4032 = vmatprep.subr.mxu0 0.0
    %4033 = vmatpush1.msra.mxu0 0.0
    %4034 = vmatprep.subr.mxu0 0.0
    %4035 = vmatpush1.msra.mxu0 0.0
    %4036 = vmatprep.subr.mxu0 0.0
    %4037 = vmatpush1.msra.mxu0 0.0
    %4038 = vmatprep.subr.mxu0 0.0
    %4039 = vmatpush1.msra.mxu0 0.0
    %4040 = vmatprep.subr.mxu0 0.0
    %4041 = vmatpush1.msra.mxu0 0.0
    %4042 = vmatprep.subr.mxu0 0.0
    %4043 = vmatpush1.msra.mxu0 0.0
    %4044 = vmatprep.subr.mxu0 0.0
    %4045 = vmatpush1.msra.mxu0 0.0
    %4046 = vmatprep.subr.mxu0 0.0
    %4047 = vmatpush1.msra.mxu0 0.0
    %4048 = vmatprep.subr.mxu0 0.0
    %4049 = vmatpush1.msra.mxu0 %v3295
    %4050 = vmatprep.subr.mxu0 0.0
    %4051 = vmatpush1.msra.mxu0 %v3294
    %4052 = vmatprep.subr.mxu0 0.0
    %4053 = vmatpush1.msra.mxu0 %v3266
    %4054 = vmatprep.subr.mxu0 0.0
    %4055 = vmatpush1.msra.mxu0 %v3265
    %4056 = vmatprep.subr.mxu0 0.0
    %4057 = vmatpush1.msra.mxu0 %v3287
    %4058 = vmatprep.subr.mxu0 0.0
    %4059 = vmatpush1.msra.mxu0 %v3286
    %4060 = vmatprep.subr.mxu0 0.0
    %4061 = vmatpush2.msra.mxu0 0.0
    %4062 = vmatprep.subr.mxu0 0.0
    %4063 = vmatpush2.msra.mxu0 0.0
    %4064 = vmatprep.subr.mxu0 0.0
    %4065 = vmatpush2.msra.mxu0 0.0
    %4066 = vmatprep.subr.mxu0 0.0
    %4067 = vmatpush2.msra.mxu0 0.0
    %4068 = vmatprep.subr.mxu0 0.0
    %4069 = vmatpush2.msra.mxu0 0.0
    %4070 = vmatprep.subr.mxu0 0.0
    %4071 = vmatpush2.msra.mxu0 0.0
    %4072 = vmatprep.subr.mxu0 0.0
    %4073 = vmatpush2.msra.mxu0 0.0
    %4074 = vmatprep.subr.mxu0 0.0
    %4075 = vmatpush2.msra.mxu0 0.0
    %4076 = vmatprep.subr.mxu0 0.0
    %4077 = vmatpush2.msra.mxu0 0.0
    %4078 = vmatprep.subr.mxu0 0.0
    %4079 = vmatpush2.msra.mxu0 0.0
    %4080 = vmatprep.subr.mxu0 0.0
    %4081 = vmatpush2.msra.mxu0 0.0
    %4082 = vmatprep.subr.mxu0 0.0
    %4083 = vmatpush2.msra.mxu0 0.0
    %4084 = vmatprep.subr.mxu0 0.0
    %4085 = vmatpush2.msra.mxu0 0.0
    %4086 = vmatprep.subr.mxu0 0.0
    %4087 = vmatpush2.msra.mxu0 0.0
    %4088 = vmatprep.subr.mxu0 0.0
    %4089 = vmatpush2.msra.mxu0 0.0
    %4090 = vmatprep.subr.mxu0 0.0
    %4091 = vmatpush2.msra.mxu0 0.0
    %4092 = vmatprep.mubr.f32.mxu0 0.0
    %4093 = vmatmul.mubr.f32.gmra.mxu0 %v4024
    %v4094 = vpop.f32.mrf.mxu0
    %v4095 = vadd.f32 %v4006, %v4094
    %v4096 = vpop.f32.mrf.mxu0
    %4097 = vmatprep.mubr.f32.mxu0 0.0
    %4098 = vmatmul.mubr.f32.gmra.mxu0 %v4026
    %v4099 = vpop.f32.mrf.mxu0
    %v4100 = vadd.f32 %v4011, %v4099
    %v4101 = vpop.f32.mrf.mxu0
    %4102 = vdwg.mxu0
    %4103 = vset.pattern.permute.xlu0 25
    %4104 = vperm.xlu0 %4103, %v3273
    %v4105 = vpop.permute.xlu0 %4104
    %4107 = vset.pattern.permute.xlu0 25
    %4108 = vperm.xlu0 %4107, %v3275
    %v4109 = vpop.permute.xlu0 %4108
    %v4111 = vadd.f32 %v4095, %v4105
    %v4112 = vadd.f32 %v4100, %v4109
    %v4113 = vmax.f32 %v3397, 0.0
    %v4114 = vmax.f32 %v3402, 0.0
    %v4115 = vmax.f32 %v4111, 0.0
    %v4116 = vmax.f32 %v4112, 0.0
    %s4117 = scalar_lea.vmem %s8, 96
    %v4118 = vld [vmem:[%s4117] sm:$0xff]
    %v4119 = vld [vmem:[%s4117 + $0x8] sm:$0xff]
    %v4120 = vld [vmem:[%s4117 + $0x10] sm:$0xff]
    %v4121 = vld [vmem:[%s4117 + $0x18] sm:$0xff]
    %s4122 = scalar_lea.vmem %s9, 24
    %v4123 = vld [vmem:[%s4122] sm:$0xff]
    %4126 = vrot.lane.b32.xlu0 %v4113, 8
    %v4127 = vpop.permute.xlu0 %4126
    %4128 = vrot.lane.b32.xlu0 %v4114, 8
    %v4129 = vpop.permute.xlu0 %4128
    %v4132 = vsel %vm76, 0.0, %v4127
    %v4133 = vsel %vm76, 0.0, %v4129
    %4134 = vrot.lane.b32.xlu0 %v4113, 120
    %v4135 = vpop.permute.xlu0 %4134
    %4136 = vrot.lane.b32.xlu0 %v4114, 120
    %v4137 = vpop.permute.xlu0 %4136
    %v4140 = vsel %vm1534, %v4135, 0.0
    %v4141 = vsel %vm1534, %v4137, 0.0
    %4144 = vrot.lane.b32.xlu0 %v4115, 8
    %v4145 = vpop.permute.xlu0 %4144
    %4146 = vrot.lane.b32.xlu0 %v4116, 8
    %v4147 = vpop.permute.xlu0 %4146
    %v4150 = vsel %vm76, 0.0, %v4145
    %v4151 = vsel %vm76, 0.0, %v4147
    %4152 = vrot.lane.b32.xlu0 %v4115, 120
    %v4153 = vpop.permute.xlu0 %4152
    %4154 = vrot.lane.b32.xlu0 %v4116, 120
    %v4155 = vpop.permute.xlu0 %4154
    %v4158 = vsel %vm1534, %v4153, 0.0
    %v4159 = vsel %vm1534, %v4155, 0.0
    %4161 = vset.pattern.permute.xlu0 24
    %4162 = vperm.xlu0 %4161, %v4119
    %v4163 = vpop.permute.xlu0 %4162
    %4166 = vset.pattern.permute.xlu0 24
    %4167 = vperm.xlu0 %4166, %v4121
    %v4168 = vpop.permute.xlu0 %4167
    %v4171 = vsel %vm1626, %v4118, 0
    %v4174 = vsel %vm1626, %v4120, 0
    %4176 = vmatprep.subr.mxu0 0.0
    %4177 = vmatpush1.msra.mxu0 0.0
    %4178 = vmatprep.subr.mxu0 0.0
    %4179 = vmatpush1.msra.mxu0 0.0
    %4180 = vmatprep.subr.mxu0 0.0
    %4181 = vmatpush1.msra.mxu0 0.0
    %4182 = vmatprep.subr.mxu0 0.0
    %4183 = vmatpush1.msra.mxu0 0.0
    %4184 = vmatprep.subr.mxu0 0.0
    %4185 = vmatpush1.msra.mxu0 %v4159
    %4186 = vmatprep.subr.mxu0 0.0
    %4187 = vmatpush1.msra.mxu0 %v4158
    %4188 = vmatprep.subr.mxu0 0.0
    %4189 = vmatpush1.msra.mxu0 %v4116
    %4190 = vmatprep.subr.mxu0 0.0
    %4191 = vmatpush1.msra.mxu0 %v4115
    %4192 = vmatprep.subr.mxu0 0.0
    %4193 = vmatpush1.msra.mxu0 %v4151
    %4194 = vmatprep.subr.mxu0 0.0
    %4195 = vmatpush1.msra.mxu0 %v4150
    %4196 = vmatprep.subr.mxu0 0.0
    %4197 = vmatpush1.msra.mxu0 %v4141
    %4198 = vmatprep.subr.mxu0 0.0
    %4199 = vmatpush1.msra.mxu0 %v4140
    %4200 = vmatprep.subr.mxu0 0.0
    %4201 = vmatpush1.msra.mxu0 %v4114
    %4202 = vmatprep.subr.mxu0 0.0
    %4203 = vmatpush1.msra.mxu0 %v4113
    %4204 = vmatprep.subr.mxu0 0.0
    %4205 = vmatpush1.msra.mxu0 %v4133
    %4206 = vmatprep.subr.mxu0 0.0
    %4207 = vmatpush1.msra.mxu0 %v4132
    %4208 = vmatprep.subr.mxu0 0.0
    %4209 = vmatpush2.msra.mxu0 0.0
    %4210 = vmatprep.subr.mxu0 0.0
    %4211 = vmatpush2.msra.mxu0 0.0
    %4212 = vmatprep.subr.mxu0 0.0
    %4213 = vmatpush2.msra.mxu0 0.0
    %4214 = vmatprep.subr.mxu0 0.0
    %4215 = vmatpush2.msra.mxu0 0.0
    %4216 = vmatprep.subr.mxu0 0.0
    %4217 = vmatpush2.msra.mxu0 0.0
    %4218 = vmatprep.subr.mxu0 0.0
    %4219 = vmatpush2.msra.mxu0 0.0
    %4220 = vmatprep.subr.mxu0 0.0
    %4221 = vmatpush2.msra.mxu0 0.0
    %4222 = vmatprep.subr.mxu0 0.0
    %4223 = vmatpush2.msra.mxu0 0.0
    %4224 = vmatprep.subr.mxu0 0.0
    %4225 = vmatpush2.msra.mxu0 0.0
    %4226 = vmatprep.subr.mxu0 0.0
    %4227 = vmatpush2.msra.mxu0 0.0
    %4228 = vmatprep.subr.mxu0 0.0
    %4229 = vmatpush2.msra.mxu0 0.0
    %4230 = vmatprep.subr.mxu0 0.0
    %4231 = vmatpush2.msra.mxu0 0.0
    %4232 = vmatprep.subr.mxu0 0.0
    %4233 = vmatpush2.msra.mxu0 0.0
    %4234 = vmatprep.subr.mxu0 0.0
    %4235 = vmatpush2.msra.mxu0 0.0
    %4236 = vmatprep.subr.mxu0 0.0
    %4237 = vmatpush2.msra.mxu0 0.0
    %4238 = vmatprep.subr.mxu0 0.0
    %4239 = vmatpush2.msra.mxu0 0.0
    %4240 = vmatprep.mubr.f32.mxu0 0.0
    %4241 = vmatmul.mubr.f32.gmra.mxu0 %v4171
    %v4242 = vpop.f32.mrf.mxu0
    %v4243 = vadd.f32 %v4163, %v4242
    %v4244 = vpop.f32.mrf.mxu0
    %4245 = vmatprep.mubr.f32.mxu0 0.0
    %4246 = vmatmul.mubr.f32.gmra.mxu0 %v4174
    %v4247 = vpop.f32.mrf.mxu0
    %v4248 = vadd.f32 %v4168, %v4247
    %v4249 = vpop.f32.mrf.mxu0
    %4250 = vdwg.mxu0
    %4252 = vset.pattern.permute.xlu0 48
    %4253 = vperm.xlu0 %4252, %v4123
    %v4254 = vpop.permute.xlu0 %4253
    %v4256 = vsel %vm183, %v4123, 0
    %4258 = vmatprep.subr.mxu0 0.0
    %4259 = vmatpush1.msra.mxu0 0.0
    %4260 = vmatprep.subr.mxu0 0.0
    %4261 = vmatpush1.msra.mxu0 0.0
    %4262 = vmatprep.subr.mxu0 0.0
    %4263 = vmatpush1.msra.mxu0 0.0
    %4264 = vmatprep.subr.mxu0 0.0
    %4265 = vmatpush1.msra.mxu0 0.0
    %4266 = vmatprep.subr.mxu0 0.0
    %4267 = vmatpush1.msra.mxu0 0.0
    %4268 = vmatprep.subr.mxu0 0.0
    %4269 = vmatpush1.msra.mxu0 0.0
    %4270 = vmatprep.subr.mxu0 0.0
    %4271 = vmatpush1.msra.mxu0 0.0
    %4272 = vmatprep.subr.mxu0 0.0
    %4273 = vmatpush1.msra.mxu0 0.0
    %4274 = vmatprep.subr.mxu0 0.0
    %4275 = vmatpush1.msra.mxu0 0.0
    %4276 = vmatprep.subr.mxu0 0.0
    %4277 = vmatpush1.msra.mxu0 0.0
    %4278 = vmatprep.subr.mxu0 0.0
    %4279 = vmatpush1.msra.mxu0 0.0
    %4280 = vmatprep.subr.mxu0 0.0
    %4281 = vmatpush1.msra.mxu0 0.0
    %4282 = vmatprep.subr.mxu0 0.0
    %4283 = vmatpush1.msra.mxu0 0.0
    %4284 = vmatprep.subr.mxu0 0.0
    %4285 = vmatpush1.msra.mxu0 0.0
    %4286 = vmatprep.subr.mxu0 0.0
    %4287 = vmatpush1.msra.mxu0 %v4116
    %4288 = vmatprep.subr.mxu0 0.0
    %4289 = vmatpush1.msra.mxu0 %v4115
    %4290 = vmatprep.subr.mxu0 0.0
    %4291 = vmatpush2.msra.mxu0 0.0
    %4292 = vmatprep.subr.mxu0 0.0
    %4293 = vmatpush2.msra.mxu0 0.0
    %4294 = vmatprep.subr.mxu0 0.0
    %4295 = vmatpush2.msra.mxu0 0.0
    %4296 = vmatprep.subr.mxu0 0.0
    %4297 = vmatpush2.msra.mxu0 0.0
    %4298 = vmatprep.subr.mxu0 0.0
    %4299 = vmatpush2.msra.mxu0 0.0
    %4300 = vmatprep.subr.mxu0 0.0
    %4301 = vmatpush2.msra.mxu0 0.0
    %4302 = vmatprep.subr.mxu0 0.0
    %4303 = vmatpush2.msra.mxu0 0.0
    %4304 = vmatprep.subr.mxu0 0.0
    %4305 = vmatpush2.msra.mxu0 0.0
    %4306 = vmatprep.subr.mxu0 0.0
    %4307 = vmatpush2.msra.mxu0 0.0
    %4308 = vmatprep.subr.mxu0 0.0
    %4309 = vmatpush2.msra.mxu0 0.0
    %4310 = vmatprep.subr.mxu0 0.0
    %4311 = vmatpush2.msra.mxu0 0.0
    %4312 = vmatprep.subr.mxu0 0.0
    %4313 = vmatpush2.msra.mxu0 0.0
    %4314 = vmatprep.subr.mxu0 0.0
    %4315 = vmatpush2.msra.mxu0 0.0
    %4316 = vmatprep.subr.mxu0 0.0
    %4317 = vmatpush2.msra.mxu0 0.0
    %4318 = vmatprep.subr.mxu0 0.0
    %4319 = vmatpush2.msra.mxu0 0.0
    %4320 = vmatprep.subr.mxu0 0.0
    %4321 = vmatpush2.msra.mxu0 0.0
    %4322 = vmatprep.mubr.f32.mxu0 0.0
    %4323 = vmatmul.mubr.f32.gmra.mxu0 %v4256
    %v4324 = vpop.f32.mrf.mxu0
    %v4325 = vadd.f32 %v4254, %v4324
    %v4326 = vpop.f32.mrf.mxu0
    %4327 = vdwg.mxu0
    %v4328 = vmax.f32 %v4325, 0.0
    %v4330 = vsel %vm1786, %v4328, 0
    %4332 = vmatprep.subr.mxu0 0.0
    %4333 = vmatpush1.msra.mxu0 0.0
    %4334 = vmatprep.subr.mxu0 0.0
    %4335 = vmatpush1.msra.mxu0 0.0
    %4336 = vmatprep.subr.mxu0 0.0
    %4337 = vmatpush1.msra.mxu0 0.0
    %4338 = vmatprep.subr.mxu0 0.0
    %4339 = vmatpush1.msra.mxu0 0.0
    %4340 = vmatprep.subr.mxu0 0.0
    %4341 = vmatpush1.msra.mxu0 0.0
    %4342 = vmatprep.subr.mxu0 0.0
    %4343 = vmatpush1.msra.mxu0 0.0
    %4344 = vmatprep.subr.mxu0 0.0
    %4345 = vmatpush1.msra.mxu0 0.0
    %4346 = vmatprep.subr.mxu0 0.0
    %4347 = vmatpush1.msra.mxu0 0.0
    %4348 = vmatprep.subr.mxu0 0.0
    %4349 = vmatpush1.msra.mxu0 %v1554
    %4350 = vmatprep.subr.mxu0 0.0
    %4351 = vmatpush1.msra.mxu0 %v1553
    %4352 = vmatprep.subr.mxu0 0.0
    %4353 = vmatpush1.msra.mxu0 %v1552
    %4354 = vmatprep.subr.mxu0 0.0
    %4355 = vmatpush1.msra.mxu0 %v1551
    %4356 = vmatprep.subr.mxu0 0.0
    %4357 = vmatpush1.msra.mxu0 %v1550
    %4358 = vmatprep.subr.mxu0 0.0
    %4359 = vmatpush1.msra.mxu0 %v1549
    %4360 = vmatprep.subr.mxu0 0.0
    %4361 = vmatpush1.msra.mxu0 %v1548
    %4362 = vmatprep.subr.mxu0 0.0
    %4363 = vmatpush1.msra.mxu0 %v1547
    %4364 = vmatprep.subr.mxu0 0.0
    %4365 = vmatpush2.msra.mxu0 0.0
    %4366 = vmatprep.subr.mxu0 0.0
    %4367 = vmatpush2.msra.mxu0 0.0
    %4368 = vmatprep.subr.mxu0 0.0
    %4369 = vmatpush2.msra.mxu0 0.0
    %4370 = vmatprep.subr.mxu0 0.0
    %4371 = vmatpush2.msra.mxu0 0.0
    %4372 = vmatprep.subr.mxu0 0.0
    %4373 = vmatpush2.msra.mxu0 0.0
    %4374 = vmatprep.subr.mxu0 0.0
    %4375 = vmatpush2.msra.mxu0 0.0
    %4376 = vmatprep.subr.mxu0 0.0
    %4377 = vmatpush2.msra.mxu0 0.0
    %4378 = vmatprep.subr.mxu0 0.0
    %4379 = vmatpush2.msra.mxu0 0.0
    %4380 = vmatprep.subr.mxu0 0.0
    %4381 = vmatpush2.msra.mxu0 0.0
    %4382 = vmatprep.subr.mxu0 0.0
    %4383 = vmatpush2.msra.mxu0 0.0
    %4384 = vmatprep.subr.mxu0 0.0
    %4385 = vmatpush2.msra.mxu0 0.0
    %4386 = vmatprep.subr.mxu0 0.0
    %4387 = vmatpush2.msra.mxu0 0.0
    %4388 = vmatprep.subr.mxu0 0.0
    %4389 = vmatpush2.msra.mxu0 0.0
    %4390 = vmatprep.subr.mxu0 0.0
    %4391 = vmatpush2.msra.mxu0 0.0
    %4392 = vmatprep.subr.mxu0 0.0
    %4393 = vmatpush2.msra.mxu0 0.0
    %4394 = vmatprep.subr.mxu0 0.0
    %4395 = vmatpush2.msra.mxu0 0.0
    %4396 = vmatprep.mubr.f32.mxu0 0.0
    %4397 = vmatmul.mubr.f32.gmra.mxu0 %v4330
    %v4398 = vpop.f32.mrf.mxu0
    %v4399 = vadd.f32 0.0, %v4398
    %v4400 = vpop.f32.mrf.mxu0
    %4401 = vdwg.mxu0
    %4402 = vmatprep.subr.mxu0 0.0
    %4403 = vmatpush1.msra.mxu0 0.0
    %4404 = vmatprep.subr.mxu0 0.0
    %4405 = vmatpush1.msra.mxu0 0.0
    %4406 = vmatprep.subr.mxu0 0.0
    %4407 = vmatpush1.msra.mxu0 0.0
    %4408 = vmatprep.subr.mxu0 0.0
    %4409 = vmatpush1.msra.mxu0 0.0
    %4410 = vmatprep.subr.mxu0 0.0
    %4411 = vmatpush1.msra.mxu0 0.0
    %4412 = vmatprep.subr.mxu0 0.0
    %4413 = vmatpush1.msra.mxu0 0.0
    %4414 = vmatprep.subr.mxu0 0.0
    %4415 = vmatpush1.msra.mxu0 0.0
    %4416 = vmatprep.subr.mxu0 0.0
    %4417 = vmatpush1.msra.mxu0 0.0
    %4418 = vmatprep.subr.mxu0 0.0
    %4419 = vmatpush1.msra.mxu0 %v1563
    %4420 = vmatprep.subr.mxu0 0.0
    %4421 = vmatpush1.msra.mxu0 %v1562
    %4422 = vmatprep.subr.mxu0 0.0
    %4423 = vmatpush1.msra.mxu0 %v1561
    %4424 = vmatprep.subr.mxu0 0.0
    %4425 = vmatpush1.msra.mxu0 %v1560
    %4426 = vmatprep.subr.mxu0 0.0
    %4427 = vmatpush1.msra.mxu0 %v1559
    %4428 = vmatprep.subr.mxu0 0.0
    %4429 = vmatpush1.msra.mxu0 %v1558
    %4430 = vmatprep.subr.mxu0 0.0
    %4431 = vmatpush1.msra.mxu0 %v1557
    %4432 = vmatprep.subr.mxu0 0.0
    %4433 = vmatpush1.msra.mxu0 %v1556
    %4434 = vmatprep.subr.mxu0 0.0
    %4435 = vmatpush2.msra.mxu0 0.0
    %4436 = vmatprep.subr.mxu0 0.0
    %4437 = vmatpush2.msra.mxu0 0.0
    %4438 = vmatprep.subr.mxu0 0.0
    %4439 = vmatpush2.msra.mxu0 0.0
    %4440 = vmatprep.subr.mxu0 0.0
    %4441 = vmatpush2.msra.mxu0 0.0
    %4442 = vmatprep.subr.mxu0 0.0
    %4443 = vmatpush2.msra.mxu0 0.0
    %4444 = vmatprep.subr.mxu0 0.0
    %4445 = vmatpush2.msra.mxu0 0.0
    %4446 = vmatprep.subr.mxu0 0.0
    %4447 = vmatpush2.msra.mxu0 0.0
    %4448 = vmatprep.subr.mxu0 0.0
    %4449 = vmatpush2.msra.mxu0 0.0
    %4450 = vmatprep.subr.mxu0 0.0
    %4451 = vmatpush2.msra.mxu0 0.0
    %4452 = vmatprep.subr.mxu0 0.0
    %4453 = vmatpush2.msra.mxu0 0.0
    %4454 = vmatprep.subr.mxu0 0.0
    %4455 = vmatpush2.msra.mxu0 0.0
    %4456 = vmatprep.subr.mxu0 0.0
    %4457 = vmatpush2.msra.mxu0 0.0
    %4458 = vmatprep.subr.mxu0 0.0
    %4459 = vmatpush2.msra.mxu0 0.0
    %4460 = vmatprep.subr.mxu0 0.0
    %4461 = vmatpush2.msra.mxu0 0.0
    %4462 = vmatprep.subr.mxu0 0.0
    %4463 = vmatpush2.msra.mxu0 0.0
    %4464 = vmatprep.subr.mxu0 0.0
    %4465 = vmatpush2.msra.mxu0 0.0
    %4466 = vmatprep.mubr.f32.mxu0 0.0
    %4467 = vmatmul.mubr.f32.gmra.mxu0 %v4330
    %v4468 = vpop.f32.mrf.mxu0
    %v4469 = vadd.f32 0.0, %v4468
    %v4470 = vpop.f32.mrf.mxu0
    %4471 = vdwg.mxu0
    %4472 = vset.pattern.permute.xlu0 49
    %4473 = vperm.xlu0 %4472, %v4123
    %v4474 = vpop.permute.xlu0 %4473
    %4476 = vrot.lane.b32.xlu0 %v4123, 112
    %v4477 = vpop.permute.xlu0 %4476
    %v4478 = vsel %vm183, %v4477, 0
    %4480 = vmatprep.subr.mxu0 0.0
    %4481 = vmatpush1.msra.mxu0 0.0
    %4482 = vmatprep.subr.mxu0 0.0
    %4483 = vmatpush1.msra.mxu0 0.0
    %4484 = vmatprep.subr.mxu0 0.0
    %4485 = vmatpush1.msra.mxu0 0.0
    %4486 = vmatprep.subr.mxu0 0.0
    %4487 = vmatpush1.msra.mxu0 0.0
    %4488 = vmatprep.subr.mxu0 0.0
    %4489 = vmatpush1.msra.mxu0 0.0
    %4490 = vmatprep.subr.mxu0 0.0
    %4491 = vmatpush1.msra.mxu0 0.0
    %4492 = vmatprep.subr.mxu0 0.0
    %4493 = vmatpush1.msra.mxu0 0.0
    %4494 = vmatprep.subr.mxu0 0.0
    %4495 = vmatpush1.msra.mxu0 0.0
    %4496 = vmatprep.subr.mxu0 0.0
    %4497 = vmatpush1.msra.mxu0 0.0
    %4498 = vmatprep.subr.mxu0 0.0
    %4499 = vmatpush1.msra.mxu0 0.0
    %4500 = vmatprep.subr.mxu0 0.0
    %4501 = vmatpush1.msra.mxu0 0.0
    %4502 = vmatprep.subr.mxu0 0.0
    %4503 = vmatpush1.msra.mxu0 0.0
    %4504 = vmatprep.subr.mxu0 0.0
    %4505 = vmatpush1.msra.mxu0 0.0
    %4506 = vmatprep.subr.mxu0 0.0
    %4507 = vmatpush1.msra.mxu0 0.0
    %4508 = vmatprep.subr.mxu0 0.0
    %4509 = vmatpush1.msra.mxu0 %v4469
    %4510 = vmatprep.subr.mxu0 0.0
    %4511 = vmatpush1.msra.mxu0 %v4399
    %4512 = vmatprep.subr.mxu0 0.0
    %4513 = vmatpush2.msra.mxu0 0.0
    %4514 = vmatprep.subr.mxu0 0.0
    %4515 = vmatpush2.msra.mxu0 0.0
    %4516 = vmatprep.subr.mxu0 0.0
    %4517 = vmatpush2.msra.mxu0 0.0
    %4518 = vmatprep.subr.mxu0 0.0
    %4519 = vmatpush2.msra.mxu0 0.0
    %4520 = vmatprep.subr.mxu0 0.0
    %4521 = vmatpush2.msra.mxu0 0.0
    %4522 = vmatprep.subr.mxu0 0.0
    %4523 = vmatpush2.msra.mxu0 0.0
    %4524 = vmatprep.subr.mxu0 0.0
    %4525 = vmatpush2.msra.mxu0 0.0
    %4526 = vmatprep.subr.mxu0 0.0
    %4527 = vmatpush2.msra.mxu0 0.0
    %4528 = vmatprep.subr.mxu0 0.0
    %4529 = vmatpush2.msra.mxu0 0.0
    %4530 = vmatprep.subr.mxu0 0.0
    %4531 = vmatpush2.msra.mxu0 0.0
    %4532 = vmatprep.subr.mxu0 0.0
    %4533 = vmatpush2.msra.mxu0 0.0
    %4534 = vmatprep.subr.mxu0 0.0
    %4535 = vmatpush2.msra.mxu0 0.0
    %4536 = vmatprep.subr.mxu0 0.0
    %4537 = vmatpush2.msra.mxu0 0.0
    %4538 = vmatprep.subr.mxu0 0.0
    %4539 = vmatpush2.msra.mxu0 0.0
    %4540 = vmatprep.subr.mxu0 0.0
    %4541 = vmatpush2.msra.mxu0 0.0
    %4542 = vmatprep.subr.mxu0 0.0
    %4543 = vmatpush2.msra.mxu0 0.0
    %4544 = vmatprep.mubr.f32.mxu0 0.0
    %4545 = vmatmul.mubr.f32.gmra.mxu0 %v4478
    %v4546 = vpop.f32.mrf.mxu0
    %v4547 = vadd.f32 %v4474, %v4546
    %v4548 = vpop.f32.mrf.mxu0
    %4549 = vdwg.mxu0
    %v4550 = vmax.f32 %v4547, 0.0
    %4551 = vset.pattern.permute.xlu0 50
    %4552 = vperm.xlu0 %4551, %v4123
    %v4553 = vpop.permute.xlu0 %4552
    %4555 = vrot.lane.b32.xlu0 %v4123, 96
    %v4556 = vpop.permute.xlu0 %4555
    %v4557 = vsel %vm183, %v4556, 0
    %4559 = vmatprep.subr.mxu0 0.0
    %4560 = vmatpush1.msra.mxu0 0.0
    %4561 = vmatprep.subr.mxu0 0.0
    %4562 = vmatpush1.msra.mxu0 0.0
    %4563 = vmatprep.subr.mxu0 0.0
    %4564 = vmatpush1.msra.mxu0 0.0
    %4565 = vmatprep.subr.mxu0 0.0
    %4566 = vmatpush1.msra.mxu0 0.0
    %4567 = vmatprep.subr.mxu0 0.0
    %4568 = vmatpush1.msra.mxu0 0.0
    %4569 = vmatprep.subr.mxu0 0.0
    %4570 = vmatpush1.msra.mxu0 0.0
    %4571 = vmatprep.subr.mxu0 0.0
    %4572 = vmatpush1.msra.mxu0 0.0
    %4573 = vmatprep.subr.mxu0 0.0
    %4574 = vmatpush1.msra.mxu0 0.0
    %4575 = vmatprep.subr.mxu0 0.0
    %4576 = vmatpush1.msra.mxu0 0.0
    %4577 = vmatprep.subr.mxu0 0.0
    %4578 = vmatpush1.msra.mxu0 0.0
    %4579 = vmatprep.subr.mxu0 0.0
    %4580 = vmatpush1.msra.mxu0 0.0
    %4581 = vmatprep.subr.mxu0 0.0
    %4582 = vmatpush1.msra.mxu0 0.0
    %4583 = vmatprep.subr.mxu0 0.0
    %4584 = vmatpush1.msra.mxu0 0.0
    %4585 = vmatprep.subr.mxu0 0.0
    %4586 = vmatpush1.msra.mxu0 0.0
    %4587 = vmatprep.subr.mxu0 0.0
    %4588 = vmatpush1.msra.mxu0 %v4469
    %4589 = vmatprep.subr.mxu0 0.0
    %4590 = vmatpush1.msra.mxu0 %v4399
    %4591 = vmatprep.subr.mxu0 0.0
    %4592 = vmatpush2.msra.mxu0 0.0
    %4593 = vmatprep.subr.mxu0 0.0
    %4594 = vmatpush2.msra.mxu0 0.0
    %4595 = vmatprep.subr.mxu0 0.0
    %4596 = vmatpush2.msra.mxu0 0.0
    %4597 = vmatprep.subr.mxu0 0.0
    %4598 = vmatpush2.msra.mxu0 0.0
    %4599 = vmatprep.subr.mxu0 0.0
    %4600 = vmatpush2.msra.mxu0 0.0
    %4601 = vmatprep.subr.mxu0 0.0
    %4602 = vmatpush2.msra.mxu0 0.0
    %4603 = vmatprep.subr.mxu0 0.0
    %4604 = vmatpush2.msra.mxu0 0.0
    %4605 = vmatprep.subr.mxu0 0.0
    %4606 = vmatpush2.msra.mxu0 0.0
    %4607 = vmatprep.subr.mxu0 0.0
    %4608 = vmatpush2.msra.mxu0 0.0
    %4609 = vmatprep.subr.mxu0 0.0
    %4610 = vmatpush2.msra.mxu0 0.0
    %4611 = vmatprep.subr.mxu0 0.0
    %4612 = vmatpush2.msra.mxu0 0.0
    %4613 = vmatprep.subr.mxu0 0.0
    %4614 = vmatpush2.msra.mxu0 0.0
    %4615 = vmatprep.subr.mxu0 0.0
    %4616 = vmatpush2.msra.mxu0 0.0
    %4617 = vmatprep.subr.mxu0 0.0
    %4618 = vmatpush2.msra.mxu0 0.0
    %4619 = vmatprep.subr.mxu0 0.0
    %4620 = vmatpush2.msra.mxu0 0.0
    %4621 = vmatprep.subr.mxu0 0.0
    %4622 = vmatpush2.msra.mxu0 0.0
    %4623 = vmatprep.mubr.f32.mxu0 0.0
    %4624 = vmatmul.mubr.f32.gmra.mxu0 %v4557
    %v4625 = vpop.f32.mrf.mxu0
    %v4626 = vadd.f32 %v4553, %v4625
    %v4627 = vpop.f32.mrf.mxu0
    %4628 = vdwg.mxu0
    %v4629 = vmax.f32 %v4626, 0.0
    %v4631 = vsel %vm1524, %v4629, 0
    %4633 = vmatprep.subr.mxu0 0.0
    %4634 = vmatpush1.msra.mxu0 0.0
    %4635 = vmatprep.subr.mxu0 0.0
    %4636 = vmatpush1.msra.mxu0 0.0
    %4637 = vmatprep.subr.mxu0 0.0
    %4638 = vmatpush1.msra.mxu0 0.0
    %4639 = vmatprep.subr.mxu0 0.0
    %4640 = vmatpush1.msra.mxu0 0.0
    %4641 = vmatprep.subr.mxu0 0.0
    %4642 = vmatpush1.msra.mxu0 0.0
    %4643 = vmatprep.subr.mxu0 0.0
    %4644 = vmatpush1.msra.mxu0 0.0
    %4645 = vmatprep.subr.mxu0 0.0
    %4646 = vmatpush1.msra.mxu0 0.0
    %4647 = vmatprep.subr.mxu0 0.0
    %4648 = vmatpush1.msra.mxu0 0.0
    %4649 = vmatprep.subr.mxu0 0.0
    %4650 = vmatpush1.msra.mxu0 0.0
    %4651 = vmatprep.subr.mxu0 0.0
    %4652 = vmatpush1.msra.mxu0 0.0
    %4653 = vmatprep.subr.mxu0 0.0
    %4654 = vmatpush1.msra.mxu0 0.0
    %4655 = vmatprep.subr.mxu0 0.0
    %4656 = vmatpush1.msra.mxu0 %v1574
    %4657 = vmatprep.subr.mxu0 0.0
    %4658 = vmatpush1.msra.mxu0 %v1573
    %4659 = vmatprep.subr.mxu0 0.0
    %4660 = vmatpush1.msra.mxu0 %v1572
    %4661 = vmatprep.subr.mxu0 0.0
    %4662 = vmatpush1.msra.mxu0 %v1571
    %4663 = vmatprep.subr.mxu0 0.0
    %4664 = vmatpush1.msra.mxu0 %v1570
    %4665 = vmatprep.subr.mxu0 0.0
    %4666 = vmatpush2.msra.mxu0 0.0
    %4667 = vmatprep.subr.mxu0 0.0
    %4668 = vmatpush2.msra.mxu0 0.0
    %4669 = vmatprep.subr.mxu0 0.0
    %4670 = vmatpush2.msra.mxu0 0.0
    %4671 = vmatprep.subr.mxu0 0.0
    %4672 = vmatpush2.msra.mxu0 0.0
    %4673 = vmatprep.subr.mxu0 0.0
    %4674 = vmatpush2.msra.mxu0 0.0
    %4675 = vmatprep.subr.mxu0 0.0
    %4676 = vmatpush2.msra.mxu0 0.0
    %4677 = vmatprep.subr.mxu0 0.0
    %4678 = vmatpush2.msra.mxu0 0.0
    %4679 = vmatprep.subr.mxu0 0.0
    %4680 = vmatpush2.msra.mxu0 0.0
    %4681 = vmatprep.subr.mxu0 0.0
    %4682 = vmatpush2.msra.mxu0 0.0
    %4683 = vmatprep.subr.mxu0 0.0
    %4684 = vmatpush2.msra.mxu0 0.0
    %4685 = vmatprep.subr.mxu0 0.0
    %4686 = vmatpush2.msra.mxu0 0.0
    %4687 = vmatprep.subr.mxu0 0.0
    %4688 = vmatpush2.msra.mxu0 0.0
    %4689 = vmatprep.subr.mxu0 0.0
    %4690 = vmatpush2.msra.mxu0 0.0
    %4691 = vmatprep.subr.mxu0 0.0
    %4692 = vmatpush2.msra.mxu0 0.0
    %4693 = vmatprep.subr.mxu0 0.0
    %4694 = vmatpush2.msra.mxu0 0.0
    %4695 = vmatprep.subr.mxu0 0.0
    %4696 = vmatpush2.msra.mxu0 0.0
    %4697 = vmatprep.mubr.f32.mxu0 0.0
    %4698 = vmatmul.mubr.f32.gmra.mxu0 %v4631
    %v4699 = vpop.f32.mrf.mxu0
    %v4700 = vadd.f32 0.0, %v4699
    %v4701 = vpop.f32.mrf.mxu0
    %4702 = vdwg.mxu0
    %v4704 = vsel %vm1524, %v4550, 0
    %4706 = vmatprep.subr.mxu0 0.0
    %4707 = vmatpush1.msra.mxu0 0.0
    %4708 = vmatprep.subr.mxu0 0.0
    %4709 = vmatpush1.msra.mxu0 0.0
    %4710 = vmatprep.subr.mxu0 0.0
    %4711 = vmatpush1.msra.mxu0 0.0
    %4712 = vmatprep.subr.mxu0 0.0
    %4713 = vmatpush1.msra.mxu0 0.0
    %4714 = vmatprep.subr.mxu0 0.0
    %4715 = vmatpush1.msra.mxu0 0.0
    %4716 = vmatprep.subr.mxu0 0.0
    %4717 = vmatpush1.msra.mxu0 0.0
    %4718 = vmatprep.subr.mxu0 0.0
    %4719 = vmatpush1.msra.mxu0 0.0
    %4720 = vmatprep.subr.mxu0 0.0
    %4721 = vmatpush1.msra.mxu0 0.0
    %4722 = vmatprep.subr.mxu0 0.0
    %4723 = vmatpush1.msra.mxu0 0.0
    %4724 = vmatprep.subr.mxu0 0.0
    %4725 = vmatpush1.msra.mxu0 0.0
    %4726 = vmatprep.subr.mxu0 0.0
    %4727 = vmatpush1.msra.mxu0 0.0
    %4728 = vmatprep.subr.mxu0 0.0
    %4729 = vmatpush1.msra.mxu0 %v1568
    %4730 = vmatprep.subr.mxu0 0.0
    %4731 = vmatpush1.msra.mxu0 %v1567
    %4732 = vmatprep.subr.mxu0 0.0
    %4733 = vmatpush1.msra.mxu0 %v1566
    %4734 = vmatprep.subr.mxu0 0.0
    %4735 = vmatpush1.msra.mxu0 %v1565
    %4736 = vmatprep.subr.mxu0 0.0
    %4737 = vmatpush1.msra.mxu0 %v1564
    %4738 = vmatprep.subr.mxu0 0.0
    %4739 = vmatpush2.msra.mxu0 0.0
    %4740 = vmatprep.subr.mxu0 0.0
    %4741 = vmatpush2.msra.mxu0 0.0
    %4742 = vmatprep.subr.mxu0 0.0
    %4743 = vmatpush2.msra.mxu0 0.0
    %4744 = vmatprep.subr.mxu0 0.0
    %4745 = vmatpush2.msra.mxu0 0.0
    %4746 = vmatprep.subr.mxu0 0.0
    %4747 = vmatpush2.msra.mxu0 0.0
    %4748 = vmatprep.subr.mxu0 0.0
    %4749 = vmatpush2.msra.mxu0 0.0
    %4750 = vmatprep.subr.mxu0 0.0
    %4751 = vmatpush2.msra.mxu0 0.0
    %4752 = vmatprep.subr.mxu0 0.0
    %4753 = vmatpush2.msra.mxu0 0.0
    %4754 = vmatprep.subr.mxu0 0.0
    %4755 = vmatpush2.msra.mxu0 0.0
    %4756 = vmatprep.subr.mxu0 0.0
    %4757 = vmatpush2.msra.mxu0 0.0
    %4758 = vmatprep.subr.mxu0 0.0
    %4759 = vmatpush2.msra.mxu0 0.0
    %4760 = vmatprep.subr.mxu0 0.0
    %4761 = vmatpush2.msra.mxu0 0.0
    %4762 = vmatprep.subr.mxu0 0.0
    %4763 = vmatpush2.msra.mxu0 0.0
    %4764 = vmatprep.subr.mxu0 0.0
    %4765 = vmatpush2.msra.mxu0 0.0
    %4766 = vmatprep.subr.mxu0 0.0
    %4767 = vmatpush2.msra.mxu0 0.0
    %4768 = vmatprep.subr.mxu0 0.0
    %4769 = vmatpush2.msra.mxu0 0.0
    %4770 = vmatprep.mubr.f32.mxu0 0.0
    %4771 = vmatmul.mubr.f32.gmra.mxu0 %v4704
    %v4772 = vpop.f32.mrf.mxu0
    %v4773 = vadd.f32 %v4700, %v4772
    %v4774 = vpop.f32.mrf.mxu0
    %4775 = vdwg.mxu0
    %v4776 = vadd.f32 %v4328, %v4773
    %4777 = vrot.lane.b32.xlu0 %v4119, 112
    %v4778 = vpop.permute.xlu0 %4777
    %4779 = vrot.lane.b32.xlu0 %v4121, 112
    %v4780 = vpop.permute.xlu0 %4779
    %v4781 = vsel %vm76, %v4778, 0
    %v4783 = vsel %vm76, %v4780, 0
    %4785 = vmatprep.subr.mxu0 0.0
    %4786 = vmatpush1.msra.mxu0 0.0
    %4787 = vmatprep.subr.mxu0 0.0
    %4788 = vmatpush1.msra.mxu0 0.0
    %4789 = vmatprep.subr.mxu0 0.0
    %4790 = vmatpush1.msra.mxu0 0.0
    %4791 = vmatprep.subr.mxu0 0.0
    %4792 = vmatpush1.msra.mxu0 0.0
    %4793 = vmatprep.subr.mxu0 0.0
    %4794 = vmatpush1.msra.mxu0 0.0
    %4795 = vmatprep.subr.mxu0 0.0
    %4796 = vmatpush1.msra.mxu0 0.0
    %4797 = vmatprep.subr.mxu0 0.0
    %4798 = vmatpush1.msra.mxu0 0.0
    %4799 = vmatprep.subr.mxu0 0.0
    %4800 = vmatpush1.msra.mxu0 0.0
    %4801 = vmatprep.subr.mxu0 0.0
    %4802 = vmatpush1.msra.mxu0 0.0
    %4803 = vmatprep.subr.mxu0 0.0
    %4804 = vmatpush1.msra.mxu0 0.0
    %4805 = vmatprep.subr.mxu0 0.0
    %4806 = vmatpush1.msra.mxu0 0.0
    %4807 = vmatprep.subr.mxu0 0.0
    %4808 = vmatpush1.msra.mxu0 0.0
    %4809 = vmatprep.subr.mxu0 0.0
    %4810 = vmatpush1.msra.mxu0 0.0
    %4811 = vmatprep.subr.mxu0 0.0
    %4812 = vmatpush1.msra.mxu0 0.0
    %4813 = vmatprep.subr.mxu0 0.0
    %4814 = vmatpush1.msra.mxu0 0.0
    %4815 = vmatprep.subr.mxu0 0.0
    %4816 = vmatpush1.msra.mxu0 %v4776
    %4817 = vmatprep.subr.mxu0 0.0
    %4818 = vmatpush2.msra.mxu0 0.0
    %4819 = vmatprep.subr.mxu0 0.0
    %4820 = vmatpush2.msra.mxu0 0.0
    %4821 = vmatprep.subr.mxu0 0.0
    %4822 = vmatpush2.msra.mxu0 0.0
    %4823 = vmatprep.subr.mxu0 0.0
    %4824 = vmatpush2.msra.mxu0 0.0
    %4825 = vmatprep.subr.mxu0 0.0
    %4826 = vmatpush2.msra.mxu0 0.0
    %4827 = vmatprep.subr.mxu0 0.0
    %4828 = vmatpush2.msra.mxu0 0.0
    %4829 = vmatprep.subr.mxu0 0.0
    %4830 = vmatpush2.msra.mxu0 0.0
    %4831 = vmatprep.subr.mxu0 0.0
    %4832 = vmatpush2.msra.mxu0 0.0
    %4833 = vmatprep.subr.mxu0 0.0
    %4834 = vmatpush2.msra.mxu0 0.0
    %4835 = vmatprep.subr.mxu0 0.0
    %4836 = vmatpush2.msra.mxu0 0.0
    %4837 = vmatprep.subr.mxu0 0.0
    %4838 = vmatpush2.msra.mxu0 0.0
    %4839 = vmatprep.subr.mxu0 0.0
    %4840 = vmatpush2.msra.mxu0 0.0
    %4841 = vmatprep.subr.mxu0 0.0
    %4842 = vmatpush2.msra.mxu0 0.0
    %4843 = vmatprep.subr.mxu0 0.0
    %4844 = vmatpush2.msra.mxu0 0.0
    %4845 = vmatprep.subr.mxu0 0.0
    %4846 = vmatpush2.msra.mxu0 0.0
    %4847 = vmatprep.subr.mxu0 0.0
    %4848 = vmatpush2.msra.mxu0 0.0
    %4849 = vmatprep.mubr.f32.mxu0 0.0
    %4850 = vmatmul.mubr.f32.gmra.mxu0 %v4781
    %v4851 = vpop.f32.mrf.mxu0
    %v4852 = vadd.f32 0.0, %v4851
    %v4853 = vpop.f32.mrf.mxu0
    %4854 = vmatprep.mubr.f32.mxu0 0.0
    %4855 = vmatmul.mubr.f32.gmra.mxu0 %v4783
    %v4856 = vpop.f32.mrf.mxu0
    %v4857 = vadd.f32 0.0, %v4856
    %v4858 = vpop.f32.mrf.mxu0
    %4859 = vdwg.mxu0
    %4860 = vrot.lane.b32.xlu0 %v4118, 32
    %v4861 = vpop.permute.xlu0 %4860
    %4862 = vrot.lane.b32.xlu0 %v4119, 32
    %v4863 = vpop.permute.xlu0 %4862
    %4864 = vrot.lane.b32.xlu0 %v4120, 32
    %v4865 = vpop.permute.xlu0 %4864
    %4866 = vrot.lane.b32.xlu0 %v4121, 32
    %v4867 = vpop.permute.xlu0 %4866
    %v4868 = vsel %vm1519, %v4861, %v4863
    %v4869 = vsel %vm1519, %v4865, %v4867
    %v4870 = vsel %vm1529, %v4868, 0
    %v4872 = vsel %vm1529, %v4869, 0
    %4874 = vmatprep.subr.mxu0 0.0
    %4875 = vmatpush1.msra.mxu0 0.0
    %4876 = vmatprep.subr.mxu0 0.0
    %4877 = vmatpush1.msra.mxu0 0.0
    %4878 = vmatprep.subr.mxu0 0.0
    %4879 = vmatpush1.msra.mxu0 0.0
    %4880 = vmatprep.subr.mxu0 0.0
    %4881 = vmatpush1.msra.mxu0 0.0
    %4882 = vmatprep.subr.mxu0 0.0
    %4883 = vmatpush1.msra.mxu0 0.0
    %4884 = vmatprep.subr.mxu0 0.0
    %4885 = vmatpush1.msra.mxu0 0.0
    %4886 = vmatprep.subr.mxu0 0.0
    %4887 = vmatpush1.msra.mxu0 0.0
    %4888 = vmatprep.subr.mxu0 0.0
    %4889 = vmatpush1.msra.mxu0 0.0
    %4890 = vmatprep.subr.mxu0 0.0
    %4891 = vmatpush1.msra.mxu0 0.0
    %4892 = vmatprep.subr.mxu0 0.0
    %4893 = vmatpush1.msra.mxu0 0.0
    %4894 = vmatprep.subr.mxu0 0.0
    %4895 = vmatpush1.msra.mxu0 %v4141
    %4896 = vmatprep.subr.mxu0 0.0
    %4897 = vmatpush1.msra.mxu0 %v4140
    %4898 = vmatprep.subr.mxu0 0.0
    %4899 = vmatpush1.msra.mxu0 %v4114
    %4900 = vmatprep.subr.mxu0 0.0
    %4901 = vmatpush1.msra.mxu0 %v4113
    %4902 = vmatprep.subr.mxu0 0.0
    %4903 = vmatpush1.msra.mxu0 %v4133
    %4904 = vmatprep.subr.mxu0 0.0
    %4905 = vmatpush1.msra.mxu0 %v4132
    %4906 = vmatprep.subr.mxu0 0.0
    %4907 = vmatpush2.msra.mxu0 0.0
    %4908 = vmatprep.subr.mxu0 0.0
    %4909 = vmatpush2.msra.mxu0 0.0
    %4910 = vmatprep.subr.mxu0 0.0
    %4911 = vmatpush2.msra.mxu0 0.0
    %4912 = vmatprep.subr.mxu0 0.0
    %4913 = vmatpush2.msra.mxu0 0.0
    %4914 = vmatprep.subr.mxu0 0.0
    %4915 = vmatpush2.msra.mxu0 0.0
    %4916 = vmatprep.subr.mxu0 0.0
    %4917 = vmatpush2.msra.mxu0 0.0
    %4918 = vmatprep.subr.mxu0 0.0
    %4919 = vmatpush2.msra.mxu0 0.0
    %4920 = vmatprep.subr.mxu0 0.0
    %4921 = vmatpush2.msra.mxu0 0.0
    %4922 = vmatprep.subr.mxu0 0.0
    %4923 = vmatpush2.msra.mxu0 0.0
    %4924 = vmatprep.subr.mxu0 0.0
    %4925 = vmatpush2.msra.mxu0 0.0
    %4926 = vmatprep.subr.mxu0 0.0
    %4927 = vmatpush2.msra.mxu0 0.0
    %4928 = vmatprep.subr.mxu0 0.0
    %4929 = vmatpush2.msra.mxu0 0.0
    %4930 = vmatprep.subr.mxu0 0.0
    %4931 = vmatpush2.msra.mxu0 0.0
    %4932 = vmatprep.subr.mxu0 0.0
    %4933 = vmatpush2.msra.mxu0 0.0
    %4934 = vmatprep.subr.mxu0 0.0
    %4935 = vmatpush2.msra.mxu0 0.0
    %4936 = vmatprep.subr.mxu0 0.0
    %4937 = vmatpush2.msra.mxu0 0.0
    %4938 = vmatprep.mubr.f32.mxu0 0.0
    %4939 = vmatmul.mubr.f32.gmra.mxu0 %v4870
    %v4940 = vpop.f32.mrf.mxu0
    %v4941 = vadd.f32 %v4852, %v4940
    %v4942 = vpop.f32.mrf.mxu0
    %4943 = vmatprep.mubr.f32.mxu0 0.0
    %4944 = vmatmul.mubr.f32.gmra.mxu0 %v4872
    %v4945 = vpop.f32.mrf.mxu0
    %v4946 = vadd.f32 %v4857, %v4945
    %v4947 = vpop.f32.mrf.mxu0
    %4948 = vdwg.mxu0
    %4949 = vset.pattern.permute.xlu0 25
    %4950 = vperm.xlu0 %4949, %v4119
    %v4951 = vpop.permute.xlu0 %4950
    %4953 = vset.pattern.permute.xlu0 25
    %4954 = vperm.xlu0 %4953, %v4121
    %v4955 = vpop.permute.xlu0 %4954
    %v4957 = vadd.f32 %v4941, %v4951
    %v4958 = vadd.f32 %v4946, %v4955
    %v4959 = vadd.f32 %v4243, %v3265
    %v4960 = vadd.f32 %v4248, %v3266
    %v4961 = vmax.f32 %v4959, 0.0
    %v4962 = vmax.f32 %v4960, 0.0
    %v4963 = vadd.f32 %v4957, %v3269
    %v4964 = vadd.f32 %v4958, %v3270
    %v4965 = vmax.f32 %v4963, 0.0
    %v4966 = vmax.f32 %v4964, 0.0
    %4971 = vrot.lane.b32.xlu0 %v4961, 120
    %v4972 = vpop.permute.xlu0 %4971
    %4973 = vrot.lane.b32.xlu0 %v4962, 120
    %v4974 = vpop.permute.xlu0 %4973
    %4975 = vrot.lane.b32.xlu0 %v4965, 120
    %v4976 = vpop.permute.xlu0 %4975
    %4977 = vrot.lane.b32.xlu0 %v4966, 120
    %v4978 = vpop.permute.xlu0 %4977
    %4983 = vrot.lane.b32.xlu0 %v4961, 112
    %v4984 = vpop.permute.xlu0 %4983
    %4985 = vrot.lane.b32.xlu0 %v4962, 112
    %v4986 = vpop.permute.xlu0 %4985
    %4987 = vrot.lane.b32.xlu0 %v4965, 112
    %v4988 = vpop.permute.xlu0 %4987
    %4989 = vrot.lane.b32.xlu0 %v4966, 112
    %v4990 = vpop.permute.xlu0 %4989
    %4995 = vrot.lane.b32.xlu0 %v4961, 104
    %v4996 = vpop.permute.xlu0 %4995
    %4997 = vrot.lane.b32.xlu0 %v4962, 104
    %v4998 = vpop.permute.xlu0 %4997
    %4999 = vrot.lane.b32.xlu0 %v4965, 104
    %v5000 = vpop.permute.xlu0 %4999
    %5001 = vrot.lane.b32.xlu0 %v4966, 104
    %v5002 = vpop.permute.xlu0 %5001
    %5007 = vrot.lane.b32.xlu0 %v4961, 96
    %v5008 = vpop.permute.xlu0 %5007
    %5009 = vrot.lane.b32.xlu0 %v4962, 96
    %v5010 = vpop.permute.xlu0 %5009
    %5011 = vrot.lane.b32.xlu0 %v4965, 96
    %v5012 = vpop.permute.xlu0 %5011
    %5013 = vrot.lane.b32.xlu0 %v4966, 96
    %v5014 = vpop.permute.xlu0 %5013
    %5019 = vrot.lane.b32.xlu0 %v4961, 88
    %v5020 = vpop.permute.xlu0 %5019
    %5021 = vrot.lane.b32.xlu0 %v4962, 88
    %v5022 = vpop.permute.xlu0 %5021
    %5023 = vrot.lane.b32.xlu0 %v4965, 88
    %v5024 = vpop.permute.xlu0 %5023
    %5025 = vrot.lane.b32.xlu0 %v4966, 88
    %v5026 = vpop.permute.xlu0 %5025
    %5031 = vrot.lane.b32.xlu0 %v4961, 80
    %v5032 = vpop.permute.xlu0 %5031
    %5033 = vrot.lane.b32.xlu0 %v4962, 80
    %v5034 = vpop.permute.xlu0 %5033
    %5035 = vrot.lane.b32.xlu0 %v4965, 80
    %v5036 = vpop.permute.xlu0 %5035
    %5037 = vrot.lane.b32.xlu0 %v4966, 80
    %v5038 = vpop.permute.xlu0 %5037
    %5043 = vrot.lane.b32.xlu0 %v4961, 72
    %v5044 = vpop.permute.xlu0 %5043
    %5045 = vrot.lane.b32.xlu0 %v4962, 72
    %v5046 = vpop.permute.xlu0 %5045
    %5047 = vrot.lane.b32.xlu0 %v4965, 72
    %v5048 = vpop.permute.xlu0 %5047
    %5049 = vrot.lane.b32.xlu0 %v4966, 72
    %v5050 = vpop.permute.xlu0 %5049
    %v5055 = vld [vmem:[%s12] sm:$0xff]
    %v5056 = vld [vmem:[%s12 + $0x8] sm:$0xff]
    %v5057 = vld [vmem:[%s13] sm:$0xff]
    %5059 = vset.pattern.permute.xlu0 0
    %5060 = vperm.xlu0 %5059, %v5057
    %v5061 = vpop.permute.xlu0 %5060
    %5063 = vmatprep.subr.mxu0 0.0
    %5064 = vmatpush1.msra.mxu0 %v5002
    %5065 = vmatprep.subr.mxu0 0.0
    %5066 = vmatpush1.msra.mxu0 %v5000
    %5067 = vmatprep.subr.mxu0 0.0
    %5068 = vmatpush1.msra.mxu0 %v4998
    %5069 = vmatprep.subr.mxu0 0.0
    %5070 = vmatpush1.msra.mxu0 %v4996
    %5071 = vmatprep.subr.mxu0 0.0
    %5072 = vmatpush1.msra.mxu0 %v4990
    %5073 = vmatprep.subr.mxu0 0.0
    %5074 = vmatpush1.msra.mxu0 %v4988
    %5075 = vmatprep.subr.mxu0 0.0
    %5076 = vmatpush1.msra.mxu0 %v4986
    %5077 = vmatprep.subr.mxu0 0.0
    %5078 = vmatpush1.msra.mxu0 %v4984
    %5079 = vmatprep.subr.mxu0 0.0
    %5080 = vmatpush1.msra.mxu0 %v4978
    %5081 = vmatprep.subr.mxu0 0.0
    %5082 = vmatpush1.msra.mxu0 %v4976
    %5083 = vmatprep.subr.mxu0 0.0
    %5084 = vmatpush1.msra.mxu0 %v4974
    %5085 = vmatprep.subr.mxu0 0.0
    %5086 = vmatpush1.msra.mxu0 %v4972
    %5087 = vmatprep.subr.mxu0 0.0
    %5088 = vmatpush1.msra.mxu0 %v4966
    %5089 = vmatprep.subr.mxu0 0.0
    %5090 = vmatpush1.msra.mxu0 %v4965
    %5091 = vmatprep.subr.mxu0 0.0
    %5092 = vmatpush1.msra.mxu0 %v4962
    %5093 = vmatprep.subr.mxu0 0.0
    %5094 = vmatpush1.msra.mxu0 %v4961
    %5095 = vmatprep.subr.mxu0 0.0
    %5096 = vmatpush2.msra.mxu0 %v5050
    %5097 = vmatprep.subr.mxu0 0.0
    %5098 = vmatpush2.msra.mxu0 %v5048
    %5099 = vmatprep.subr.mxu0 0.0
    %5100 = vmatpush2.msra.mxu0 %v5046
    %5101 = vmatprep.subr.mxu0 0.0
    %5102 = vmatpush2.msra.mxu0 %v5044
    %5103 = vmatprep.subr.mxu0 0.0
    %5104 = vmatpush2.msra.mxu0 %v5038
    %5105 = vmatprep.subr.mxu0 0.0
    %5106 = vmatpush2.msra.mxu0 %v5036
    %5107 = vmatprep.subr.mxu0 0.0
    %5108 = vmatpush2.msra.mxu0 %v5034
    %5109 = vmatprep.subr.mxu0 0.0
    %5110 = vmatpush2.msra.mxu0 %v5032
    %5111 = vmatprep.subr.mxu0 0.0
    %5112 = vmatpush2.msra.mxu0 %v5026
    %5113 = vmatprep.subr.mxu0 0.0
    %5114 = vmatpush2.msra.mxu0 %v5024
    %5115 = vmatprep.subr.mxu0 0.0
    %5116 = vmatpush2.msra.mxu0 %v5022
    %5117 = vmatprep.subr.mxu0 0.0
    %5118 = vmatpush2.msra.mxu0 %v5020
    %5119 = vmatprep.subr.mxu0 0.0
    %5120 = vmatpush2.msra.mxu0 %v5014
    %5121 = vmatprep.subr.mxu0 0.0
    %5122 = vmatpush2.msra.mxu0 %v5012
    %5123 = vmatprep.subr.mxu0 0.0
    %5124 = vmatpush2.msra.mxu0 %v5010
    %5125 = vmatprep.subr.mxu0 0.0
    %5126 = vmatpush2.msra.mxu0 %v5008
    %5127 = vmatprep.mubr.f32.mxu0 %v5056
    %5128 = vmatmul.mubr.f32.gmra.mxu0 %v5055
    %v5129 = vpop.f32.mrf.mxu0
    %v5130 = vadd.f32 %v5061, %v5129
    %v5131 = vpop.f32.mrf.mxu0
    %5132 = vdwg.mxu0
    %v5133 = vadd.f32 %v5130, %v456
    %v5134 = vsub.f32 %v5133, %v128
    %v5135 = vadd.f32 %v74, 1e-10
    %v5136 = vlaneseq
    %v5137 = vshrl.u32 %v5136, 7
    %v5138 = vsub.s32 0, %v5137
    %v5139 = vrot.slane %v5135, %v5138
    %v5140 = vrcp.pop %v5139
    %v5141 = vmul.f32 %v5134, %v5140
    %v5142 = vmul.f32 %v5141, %v109
    %v5143 = vadd.f32 %v5142, %v113
    %5144 = vst.msk [vmem:[%s14] sm:$0xff] %vm76, %v5143
    // Predicated region
    $region66: #{micn_forward.1} parent=1 // pred_check
      _
    $region67: #{micn_forward.1} parent=1 // pred_check_branch
      %5146 = sbr.rel (0) target = $region69
    $region68: #{micn_forward.1} parent=1 // pred_region
      _
    $region69: #{micn_forward.1} parent=1 // pred_fallthru
      _
    // Predicated region
    $region70: #{micn_forward.1} parent=1 // pred_check
      _
    $region71: #{micn_forward.1} parent=1 // pred_check_branch
      %5148 = sbr.rel (0) target = $region73
    $region72: #{micn_forward.1} parent=1 // pred_region
      _
    $region73: #{micn_forward.1} parent=1 // pred_fallthru
      _
    %5149 = vsyncpa [#allocation3], 1
    %5150 = vsyncpa [#allocation5], 1

</llo_original>
